<compile_context>
chip_gen: v7x
topology: tpu7x:2x2x1
jax: 0.10.0
libtpu: 0.0.40
codegen_flags: <defaults>
</compile_context>

<pallas_src>
import math
import functools

import jax
import jax.numpy as jnp
from jax.experimental import pallas as pl
from jax.experimental.pallas import tpu as pltpu

# ---- model hyper-parameters (shapes of the synthetic chunk module) ----------
C_Z = 32       # query channel dim (c_z)
C_T = 32       # key/value channel dim (c_t)
N_HEADS = 4    # number of attention heads
C_HIDDEN = 16  # per-head hidden dim
HCH = N_HEADS * C_HIDDEN
SCALE = 1.0 / math.sqrt(C_HIDDEN)

_VMEM_BUDGET_BYTES = 8 * 1024 * 1024  # conservative even for v7x's 64 MiB VMEM


def _num_tensorcores():
    """2 on v7x (dual TensorCore per chip), 1 on v5e/v6e."""
    try:
        kind = jax.devices()[0].device_kind.lower()
    except Exception:
        return 1
    return 2 if ("v7" in kind or "7x" in kind) else 1


def _chunk_fits_vmem(bc, q_len, k_len, c_z, c_t, biases):
    """Rough per-grid-step VMEM footprint (f32, IO blocks double-buffered)."""
    io = bc * (q_len * c_z + k_len * c_t + q_len * c_z)              # z, t, out
    bias = sum((bc if b.shape[0] != 1 else 1) * b.shape[1] * b.shape[2] * b.shape[3]
               for b in biases)
    wts = c_z * 3 * HCH + (HCH + 1) * c_z                            # packed weights
    tmp = bc * (q_len + 2 * k_len) * HCH + 4 * bc * N_HEADS * q_len * k_len
    return 4 * (2 * (io + bias + wts) + tmp) < _VMEM_BUDGET_BYTES


def _pick_block(B, chunk_size, q_len, k_len, c_z, c_t, biases):
    """Pick a batch-block size that divides B exactly (no padded tail)."""
    cs = max(1, min(int(chunk_size), B))
    # Largest exact divisor of B honoring the caller's chunk_size intent
    # (d = 1 always qualifies, so this is well defined).
    bc = max(d for d in range(1, cs + 1) if B % d == 0)
    n_tc = _num_tensorcores()
    if n_tc > 1:
        # v7x: give each TensorCore one real (unpadded) chunk when possible.
        if B % n_tc == 0 and _chunk_fits_vmem(B // n_tc, q_len, k_len, c_z, c_t, biases):
            bc = B // n_tc
    elif _chunk_fits_vmem(B, q_len, k_len, c_z, c_t, biases):
        # v5e/v6e: a grid is a serial loop on the single TC, so one step
        # minimizes fixed per-step overhead and maximizes the matmul M.
        bc = B
    return bc


def _attn_kernel(num_biases, bc, q_len, k_len, z_ref, t_ref, *refs):
    """One chunk (bc batch elements) of template pointwise attention in VMEM.

    z_ref : [bc*Q, C_Z]   lane-contiguous slab of the chunk
    t_ref : [bc*K, C_T]
    refs  : num_biases bias refs (each [1|bc, 1|H, 1|Q, 1|K]),
            then w_qkv [C_Z, 3*HCH] (= Wq*scale | Wk | Wv),
            w_ob [HCH+1, C_Z] (= Wo ; bo), and the output ref [bc*Q, C_Z].
    """
    bias_refs = refs[:num_biases]
    w_qkv_ref, w_ob_ref, o_ref = refs[num_biases:]

    z2 = z_ref[...]                       # [bc*Q, C_Z]
    t2 = t_ref[...]                       # [bc*K, C_T]
    w_qkv = w_qkv_ref[...]                # [C_Z, 3*HCH]

    # Q projection ([bc*Q, 64]) and fused K|V projection ([bc*K, 128] — full
    # lane width, one MXU matmul produces both K and V).
    q = jnp.dot(z2, w_qkv[:, :HCH], preferred_element_type=jnp.float32)
    kv = jnp.dot(t2, w_qkv[:, HCH:], preferred_element_type=jnp.float32)

    # Sum all biases ONCE per grid step (broadcast shape [bc|1, H|1, Q|1, K]);
    # the per-head add below then only indexes a leading (untiled) dim.
    bias_sum = None
    for b in bias_refs:
        bv = b[...]
        bias_sum = bv if bias_sum is None else bias_sum + bv

    acc = None                            # f32 accumulator for the output proj
    for h in range(N_HEADS):              # static python loop, H is small
        sl = slice(h * C_HIDDEN, (h + 1) * C_HIDDEN)
        qh = q[:, sl].reshape(bc, q_len, C_HIDDEN)
        kh = kv[:, sl].reshape(bc, k_len, C_HIDDEN)
        vh = kv[:, HCH + h * C_HIDDEN:HCH + (h + 1) * C_HIDDEN].reshape(
            bc, k_len, C_HIDDEN)

        # Batched QK^T over the chunk; contraction on channels (no transpose).
        logits = jnp.einsum("bqc,bkc->bqk", qh, kh,
                            preferred_element_type=jnp.float32)   # [bc, Q, K]
        if bias_sum is not None:
            h_idx = h if bias_sum.shape[1] != 1 else 0
            logits = logits + bias_sum[:, h_idx]

        m = jnp.max(logits, axis=-1, keepdims=True)
        p = jnp.exp(logits - m)
        denom = jnp.sum(p, axis=-1, keepdims=True)
        a = p * pl.reciprocal(denom, approx=True)  # EUP recip, frees VALU

        oh = jnp.einsum("bqk,bkc->bqc", a, vh,
                        preferred_element_type=jnp.float32)       # [bc, Q, Ch]
        # Accumulate the output projection per head instead of a lane concat.
        contrib = jnp.dot(oh.reshape(bc * q_len, C_HIDDEN),
                          w_ob_ref[sl, :],
                          preferred_element_type=jnp.float32)     # [bc*Q, C_Z]
        acc = contrib if acc is None else acc + contrib

    out = acc + w_ob_ref[HCH:HCH + 1, :]  # output-bias row, broadcasts
    o_ref[...] = out.astype(o_ref.dtype)


@functools.partial(jax.jit, static_argnames=("chunk_size",))
def template_attn_forward(z, t, biases, chunk_size, params):
    """Faithful port of template_attn_script_module.forward.

    Chunk-slicing + concat on dim 0 is an identity, so the whole batch is
    processed by a single pallas_call whose 1-D grid iterates over batch
    blocks whose size divides B exactly (no padded tail).
    """
    wq, wk, wv, wo, bo = params
    B, q_len, c_z = z.shape
    _, k_len, c_t = t.shape
    assert c_z == C_Z and c_t == C_T and c_z == c_t
    for b in biases:
        assert (b.ndim == 4 and b.shape[0] in (1, B)
                and b.shape[1] in (1, N_HEADS)
                and b.shape[2] in (1, q_len)
                and b.shape[3] in (1, k_len)), f"unsupported bias shape {b.shape}"

    bc = _pick_block(B, chunk_size, q_len, k_len, c_z, c_t, biases)
    assert B % bc == 0
    n_blocks = B // bc

    # Lane-contiguous 2-D slabs (contiguous-memory reshapes: free in XLA).
    z2 = z.reshape(B * q_len, c_z)
    t2 = t.reshape(B * k_len, c_t)

    # Pack all constants into two operands (fewer DMA descriptors / VMEM
    # slabs per grid step):
    #   w_qkv = [ Wq*scale | Wk | Wv ] -> [C_Z, 3*HCH] = [32, 192]
    #   w_ob  = [ Wo ; bo ]            -> [HCH+1, C_Z] = [65, 32]
    # The 1/sqrt(c_hidden) scale is folded into Wq once here.
    w_qkv = jnp.concatenate([(wq * SCALE).astype(wq.dtype), wk, wv], axis=1)
    w_ob = jnp.concatenate([wo, bo.reshape(1, -1).astype(wo.dtype)], axis=0)

    bias_specs = []
    for b in biases:
        bb, bh, bq, bk = b.shape
        if bb != 1:
            bias_specs.append(
                pl.BlockSpec((bc, bh, bq, bk), lambda i: (i, 0, 0, 0)))
        else:
            bias_specs.append(
                pl.BlockSpec((1, bh, bq, bk), lambda i: (0, 0, 0, 0)))

    kernel = functools.partial(_attn_kernel, len(biases), bc, q_len, k_len)

    out2 = pl.pallas_call(
        kernel,
        out_shape=jax.ShapeDtypeStruct((B * q_len, c_z), z.dtype),
        grid=(n_blocks,),
        in_specs=[
            pl.BlockSpec((bc * q_len, c_z), lambda i: (i, 0)),
            pl.BlockSpec((bc * k_len, c_t), lambda i: (i, 0)),
            *bias_specs,
            pl.BlockSpec((c_z, 3 * HCH), lambda i: (0, 0)),
            pl.BlockSpec((HCH + 1, c_z), lambda i: (0, 0)),
        ],
        out_specs=pl.BlockSpec((bc * q_len, c_z), lambda i: (i, 0)),
        compiler_params=pltpu.CompilerParams(
            dimension_semantics=("parallel",) if n_blocks > 1 else ("arbitrary",)),
    )(z2, t2, *biases, w_qkv, w_ob)

    return out2.reshape(B, q_len, c_z)


def _reference_forward(z, t, biases, params):
    """Pure-JAX reference (un-chunked) for correctness checking."""
    wq, wk, wv, wo, bo = params
    B, Q, _ = z.shape
    K = t.shape[1]
    q = (z @ wq) * SCALE
    k = t @ wk
    v = t @ wv
    q = q.reshape(B, Q, N_HEADS, C_HIDDEN)
    k = k.reshape(B, K, N_HEADS, C_HIDDEN)
    v = v.reshape(B, K, N_HEADS, C_HIDDEN)
    logits = jnp.einsum("bqhc,bkhc->bhqk", q, k)
    for b in biases:
        logits = logits + b
    a = jax.nn.softmax(logits, axis=-1)
    o = jnp.einsum("bhqk,bkhc->bqhc", a, v).reshape(B, Q, HCH)
    return o @ wo + bo


def _init_params(key):
    k1, k2, k3, k4, k5 = jax.random.split(key, 5)
    wq = jax.random.normal(k1, (C_Z, HCH), jnp.float32) * (1.0 / math.sqrt(C_Z))
    wk = jax.random.normal(k2, (C_T, HCH), jnp.float32) * (1.0 / math.sqrt(C_T))
    wv = jax.random.normal(k3, (C_T, HCH), jnp.float32) * (1.0 / math.sqrt(C_T))
    wo = jax.random.normal(k4, (HCH, C_Z), jnp.float32) * (1.0 / math.sqrt(HCH))
    bo = jax.random.normal(k5, (1, C_Z), jnp.float32) * 0.01
    return wq, wk, wv, wo, bo


if __name__ == "__main__":
    key = jax.random.PRNGKey(0)
    kp, kz, kt, kb1, kb2 = jax.random.split(key, 5)

    B, Q, K = 6, 8, 8
    chunk_size = 4  # module-level chunk request; internal block divides B exactly

    params = _init_params(kp)
    z = jax.random.normal(kz, (B, Q, C_Z), jnp.float32)
    t = jax.random.normal(kt, (B, K, C_T), jnp.float32)
    # Two biases: one batched (sliced per chunk) and one broadcast (dim0 == 1).
    bias_batched = jax.random.normal(kb1, (B, 1, 1, K), jnp.float32)
    bias_shared = jax.random.normal(kb2, (1, N_HEADS, Q, K), jnp.float32)
    biases = [bias_batched, bias_shared]

    out = template_attn_forward(z, t, biases, chunk_size, params)
    out = jax.block_until_ready(out)

    ref = _reference_forward(z, t, biases, params)
    assert out.shape == (B, Q, C_Z), out.shape
    # Slightly loose tolerance: the softmax denominator uses the EUP
    # approximate reciprocal (pl.reciprocal(approx=True)); structural bugs
    # would produce O(1) errors, far above this threshold.
    assert jnp.allclose(out, ref, atol=2e-2, rtol=1e-2), "mismatch vs reference"

    print("KERNEL_OK")
</pallas_src>

<mosaic_0001>
module attributes {stable_mosaic.version = 11 : i64} {
  func.func @_attn_kernel(%arg0: i32, %arg1: memref<48x32xf32, #tpu.memory_space<vmem>>, %arg2: memref<48x32xf32, #tpu.memory_space<vmem>>, %arg3: memref<6x1x1x8xf32, #tpu.memory_space<vmem>>, %arg4: memref<1x4x8x8xf32, #tpu.memory_space<vmem>>, %arg5: memref<32x192xf32, #tpu.memory_space<vmem>>, %arg6: memref<65x32xf32, #tpu.memory_space<vmem>>, %arg7: memref<48x32xf32, #tpu.memory_space<vmem>>) attributes {dimension_semantics = [#tpu.dimension_semantics<arbitrary>], iteration_bounds = array<i64: 1>, scalar_prefetch = 0 : i64, scratch_operands = 0 : i64, tpu.core_type = #tpu.core_type<tc>, window_params = [{transform_indices = @transform_0, window_bounds = array<i64: 48, 32>}, {transform_indices = @transform_1, window_bounds = array<i64: 48, 32>}, {transform_indices = @transform_2, window_bounds = array<i64: 6, 1, 1, 8>}, {pipeline_mode = #tpu.pipeline_mode<synchronous>, transform_indices = @transform_3, window_bounds = array<i64: 1, 4, 8, 8>}, {pipeline_mode = #tpu.pipeline_mode<synchronous>, transform_indices = @transform_4, window_bounds = array<i64: 32, 192>}, {pipeline_mode = #tpu.pipeline_mode<synchronous>, transform_indices = @transform_5, window_bounds = array<i64: 65, 32>}, {transform_indices = @transform_6, window_bounds = array<i64: 48, 32>}]} {
    %c0 = arith.constant 0 : index
    %c0_0 = arith.constant 0 : index
    %0 = vector.load %arg1[%c0, %c0_0] : memref<48x32xf32, #tpu.memory_space<vmem>>, vector<48x32xf32>
    %c0_1 = arith.constant 0 : index
    %c0_2 = arith.constant 0 : index
    %1 = vector.load %arg2[%c0_1, %c0_2] : memref<48x32xf32, #tpu.memory_space<vmem>>, vector<48x32xf32>
    %c0_3 = arith.constant 0 : index
    %c0_4 = arith.constant 0 : index
    %2 = vector.load %arg5[%c0_3, %c0_4] : memref<32x192xf32, #tpu.memory_space<vmem>>, vector<32x192xf32>
    %3 = vector.extract_strided_slice %2 {offsets = [0, 0], sizes = [32, 64], strides = [1, 1]} : vector<32x192xf32> to vector<32x64xf32>
    %cst = arith.constant dense<0.000000e+00> : vector<48x64xf32>
    %4 = tpu.matmul %0, %3, %cst {dimension_numbers = #tpu.dot_dimension_numbers<[1], [0], [0], [1], [0, 0, 1, 1], [], []>} : vector<48x32xf32>, vector<32x64xf32>, vector<48x64xf32> -> vector<48x64xf32>
    %5 = vector.extract_strided_slice %2 {offsets = [0, 64], sizes = [32, 128], strides = [1, 1]} : vector<32x192xf32> to vector<32x128xf32>
    %cst_5 = arith.constant dense<0.000000e+00> : vector<48x128xf32>
    %6 = tpu.matmul %1, %5, %cst_5 {dimension_numbers = #tpu.dot_dimension_numbers<[1], [0], [0], [1], [0, 0, 1, 1], [], []>} : vector<48x32xf32>, vector<32x128xf32>, vector<48x128xf32> -> vector<48x128xf32>
    %c0_6 = arith.constant 0 : index
    %c0_7 = arith.constant 0 : index
    %c0_8 = arith.constant 0 : index
    %c0_9 = arith.constant 0 : index
    %7 = vector.load %arg3[%c0_6, %c0_7, %c0_8, %c0_9] : memref<6x1x1x8xf32, #tpu.memory_space<vmem>>, vector<6x1x1x8xf32>
    %c0_10 = arith.constant 0 : index
    %c0_11 = arith.constant 0 : index
    %c0_12 = arith.constant 0 : index
    %c0_13 = arith.constant 0 : index
    %8 = vector.load %arg4[%c0_10, %c0_11, %c0_12, %c0_13] : memref<1x4x8x8xf32, #tpu.memory_space<vmem>>, vector<1x4x8x8xf32>
    %9 = vector.broadcast %7 : vector<6x1x1x8xf32> to vector<6x4x8x8xf32>
    %10 = vector.broadcast %8 : vector<1x4x8x8xf32> to vector<6x4x8x8xf32>
    %11 = arith.addf %9, %10 : vector<6x4x8x8xf32>
    %12 = vector.extract_strided_slice %4 {offsets = [0, 0], sizes = [48, 16], strides = [1, 1]} : vector<48x64xf32> to vector<48x16xf32>
    %13 = vector.shape_cast %12 : vector<48x16xf32> to vector<6x8x16xf32>
    %14 = vector.extract_strided_slice %6 {offsets = [0, 0], sizes = [48, 16], strides = [1, 1]} : vector<48x128xf32> to vector<48x16xf32>
    %15 = vector.shape_cast %14 : vector<48x16xf32> to vector<6x8x16xf32>
    %16 = vector.extract_strided_slice %6 {offsets = [0, 64], sizes = [48, 16], strides = [1, 1]} : vector<48x128xf32> to vector<48x16xf32>
    %17 = vector.shape_cast %16 : vector<48x16xf32> to vector<6x8x16xf32>
    "tpu.trace_start"() <{level = 10 : i32, message = "bqc,bkc->bqk"}> : () -> ()
    %cst_14 = arith.constant dense<0.000000e+00> : vector<6x8x8xf32>
    %18 = tpu.matmul %13, %15, %cst_14 {dimension_numbers = #tpu.dot_dimension_numbers<[2], [2], [1], [1], [0, 0, 0, 1, 1, 1], [0], [0]>} : vector<6x8x16xf32>, vector<6x8x16xf32>, vector<6x8x8xf32> -> vector<6x8x8xf32>
    "tpu.trace_stop"() : () -> ()
    %19 = vector.extract_strided_slice %11 {offsets = [0, 0, 0, 0], sizes = [6, 1, 8, 8], strides = [1, 1, 1, 1]} : vector<6x4x8x8xf32> to vector<6x1x8x8xf32>
    %20 = vector.shape_cast %19 : vector<6x1x8x8xf32> to vector<6x8x8xf32>
    %21 = arith.addf %18, %20 : vector<6x8x8xf32>
    %cst_15 = arith.constant dense<0xFF800000> : vector<6x8xf32>
    %22 = vector.multi_reduction <maximumf>, %21, %cst_15 [2] : vector<6x8x8xf32> to vector<6x8xf32>
    %23 = vector.shape_cast %22 : vector<6x8xf32> to vector<6x8x1xf32>
    %24 = vector.broadcast %23 : vector<6x8x1xf32> to vector<6x8x8xf32>
    %25 = arith.subf %21, %24 : vector<6x8x8xf32>
    %26 = math.exp %25 : vector<6x8x8xf32>
    %cst_16 = arith.constant dense<0.000000e+00> : vector<6x8xf32>
    %27 = vector.multi_reduction <add>, %26, %cst_16 [2] : vector<6x8x8xf32> to vector<6x8xf32>
    %28 = vector.shape_cast %27 : vector<6x8xf32> to vector<6x8x1xf32>
    %29 = tpu.reciprocal %28 {approx = true} : vector<6x8x1xf32> -> vector<6x8x1xf32>
    %30 = vector.broadcast %29 : vector<6x8x1xf32> to vector<6x8x8xf32>
    %31 = arith.mulf %26, %30 : vector<6x8x8xf32>
    "tpu.trace_start"() <{level = 10 : i32, message = "bqk,bkc->bqc"}> : () -> ()
    %cst_17 = arith.constant dense<0.000000e+00> : vector<6x8x16xf32>
    %32 = tpu.matmul %31, %17, %cst_17 {dimension_numbers = #tpu.dot_dimension_numbers<[2], [1], [1], [2], [0, 0, 0, 1, 1, 2], [0], [0]>} : vector<6x8x8xf32>, vector<6x8x16xf32>, vector<6x8x16xf32> -> vector<6x8x16xf32>
    "tpu.trace_stop"() : () -> ()
    %33 = vector.shape_cast %32 : vector<6x8x16xf32> to vector<48x16xf32>
    %c0_18 = arith.constant 0 : index
    %c0_19 = arith.constant 0 : index
    %34 = vector.load %arg6[%c0_18, %c0_19] : memref<65x32xf32, #tpu.memory_space<vmem>>, vector<16x32xf32>
    %cst_20 = arith.constant dense<0.000000e+00> : vector<48x32xf32>
    %35 = tpu.matmul %33, %34, %cst_20 {dimension_numbers = #tpu.dot_dimension_numbers<[1], [0], [0], [1], [0, 0, 1, 1], [], []>} : vector<48x16xf32>, vector<16x32xf32>, vector<48x32xf32> -> vector<48x32xf32>
    %36 = vector.extract_strided_slice %4 {offsets = [0, 16], sizes = [48, 16], strides = [1, 1]} : vector<48x64xf32> to vector<48x16xf32>
    %37 = vector.shape_cast %36 : vector<48x16xf32> to vector<6x8x16xf32>
    %38 = vector.extract_strided_slice %6 {offsets = [0, 16], sizes = [48, 16], strides = [1, 1]} : vector<48x128xf32> to vector<48x16xf32>
    %39 = vector.shape_cast %38 : vector<48x16xf32> to vector<6x8x16xf32>
    %40 = vector.extract_strided_slice %6 {offsets = [0, 80], sizes = [48, 16], strides = [1, 1]} : vector<48x128xf32> to vector<48x16xf32>
    %41 = vector.shape_cast %40 : vector<48x16xf32> to vector<6x8x16xf32>
    "tpu.trace_start"() <{level = 10 : i32, message = "bqc,bkc->bqk"}> : () -> ()
    %cst_21 = arith.constant dense<0.000000e+00> : vector<6x8x8xf32>
    %42 = tpu.matmul %37, %39, %cst_21 {dimension_numbers = #tpu.dot_dimension_numbers<[2], [2], [1], [1], [0, 0, 0, 1, 1, 1], [0], [0]>} : vector<6x8x16xf32>, vector<6x8x16xf32>, vector<6x8x8xf32> -> vector<6x8x8xf32>
    "tpu.trace_stop"() : () -> ()
    %43 = vector.extract_strided_slice %11 {offsets = [0, 1, 0, 0], sizes = [6, 1, 8, 8], strides = [1, 1, 1, 1]} : vector<6x4x8x8xf32> to vector<6x1x8x8xf32>
    %44 = vector.shape_cast %43 : vector<6x1x8x8xf32> to vector<6x8x8xf32>
    %45 = arith.addf %42, %44 : vector<6x8x8xf32>
    %cst_22 = arith.constant dense<0xFF800000> : vector<6x8xf32>
    %46 = vector.multi_reduction <maximumf>, %45, %cst_22 [2] : vector<6x8x8xf32> to vector<6x8xf32>
    %47 = vector.shape_cast %46 : vector<6x8xf32> to vector<6x8x1xf32>
    %48 = vector.broadcast %47 : vector<6x8x1xf32> to vector<6x8x8xf32>
    %49 = arith.subf %45, %48 : vector<6x8x8xf32>
    %50 = math.exp %49 : vector<6x8x8xf32>
    %cst_23 = arith.constant dense<0.000000e+00> : vector<6x8xf32>
    %51 = vector.multi_reduction <add>, %50, %cst_23 [2] : vector<6x8x8xf32> to vector<6x8xf32>
    %52 = vector.shape_cast %51 : vector<6x8xf32> to vector<6x8x1xf32>
    %53 = tpu.reciprocal %52 {approx = true} : vector<6x8x1xf32> -> vector<6x8x1xf32>
    %54 = vector.broadcast %53 : vector<6x8x1xf32> to vector<6x8x8xf32>
    %55 = arith.mulf %50, %54 : vector<6x8x8xf32>
    "tpu.trace_start"() <{level = 10 : i32, message = "bqk,bkc->bqc"}> : () -> ()
    %cst_24 = arith.constant dense<0.000000e+00> : vector<6x8x16xf32>
    %56 = tpu.matmul %55, %41, %cst_24 {dimension_numbers = #tpu.dot_dimension_numbers<[2], [1], [1], [2], [0, 0, 0, 1, 1, 2], [0], [0]>} : vector<6x8x8xf32>, vector<6x8x16xf32>, vector<6x8x16xf32> -> vector<6x8x16xf32>
    "tpu.trace_stop"() : () -> ()
    %57 = vector.shape_cast %56 : vector<6x8x16xf32> to vector<48x16xf32>
    %c16 = arith.constant 16 : index
    %c0_25 = arith.constant 0 : index
    %58 = vector.load %arg6[%c16, %c0_25] : memref<65x32xf32, #tpu.memory_space<vmem>>, vector<16x32xf32>
    %cst_26 = arith.constant dense<0.000000e+00> : vector<48x32xf32>
    %59 = tpu.matmul %57, %58, %cst_26 {dimension_numbers = #tpu.dot_dimension_numbers<[1], [0], [0], [1], [0, 0, 1, 1], [], []>} : vector<48x16xf32>, vector<16x32xf32>, vector<48x32xf32> -> vector<48x32xf32>
    %60 = arith.addf %35, %59 : vector<48x32xf32>
    %61 = vector.extract_strided_slice %4 {offsets = [0, 32], sizes = [48, 16], strides = [1, 1]} : vector<48x64xf32> to vector<48x16xf32>
    %62 = vector.shape_cast %61 : vector<48x16xf32> to vector<6x8x16xf32>
    %63 = vector.extract_strided_slice %6 {offsets = [0, 32], sizes = [48, 16], strides = [1, 1]} : vector<48x128xf32> to vector<48x16xf32>
    %64 = vector.shape_cast %63 : vector<48x16xf32> to vector<6x8x16xf32>
    %65 = vector.extract_strided_slice %6 {offsets = [0, 96], sizes = [48, 16], strides = [1, 1]} : vector<48x128xf32> to vector<48x16xf32>
    %66 = vector.shape_cast %65 : vector<48x16xf32> to vector<6x8x16xf32>
    "tpu.trace_start"() <{level = 10 : i32, message = "bqc,bkc->bqk"}> : () -> ()
    %cst_27 = arith.constant dense<0.000000e+00> : vector<6x8x8xf32>
    %67 = tpu.matmul %62, %64, %cst_27 {dimension_numbers = #tpu.dot_dimension_numbers<[2], [2], [1], [1], [0, 0, 0, 1, 1, 1], [0], [0]>} : vector<6x8x16xf32>, vector<6x8x16xf32>, vector<6x8x8xf32> -> vector<6x8x8xf32>
    "tpu.trace_stop"() : () -> ()
    %68 = vector.extract_strided_slice %11 {offsets = [0, 2, 0, 0], sizes = [6, 1, 8, 8], strides = [1, 1, 1, 1]} : vector<6x4x8x8xf32> to vector<6x1x8x8xf32>
    %69 = vector.shape_cast %68 : vector<6x1x8x8xf32> to vector<6x8x8xf32>
    %70 = arith.addf %67, %69 : vector<6x8x8xf32>
    %cst_28 = arith.constant dense<0xFF800000> : vector<6x8xf32>
    %71 = vector.multi_reduction <maximumf>, %70, %cst_28 [2] : vector<6x8x8xf32> to vector<6x8xf32>
    %72 = vector.shape_cast %71 : vector<6x8xf32> to vector<6x8x1xf32>
    %73 = vector.broadcast %72 : vector<6x8x1xf32> to vector<6x8x8xf32>
    %74 = arith.subf %70, %73 : vector<6x8x8xf32>
    %75 = math.exp %74 : vector<6x8x8xf32>
    %cst_29 = arith.constant dense<0.000000e+00> : vector<6x8xf32>
    %76 = vector.multi_reduction <add>, %75, %cst_29 [2] : vector<6x8x8xf32> to vector<6x8xf32>
    %77 = vector.shape_cast %76 : vector<6x8xf32> to vector<6x8x1xf32>
    %78 = tpu.reciprocal %77 {approx = true} : vector<6x8x1xf32> -> vector<6x8x1xf32>
    %79 = vector.broadcast %78 : vector<6x8x1xf32> to vector<6x8x8xf32>
    %80 = arith.mulf %75, %79 : vector<6x8x8xf32>
    "tpu.trace_start"() <{level = 10 : i32, message = "bqk,bkc->bqc"}> : () -> ()
    %cst_30 = arith.constant dense<0.000000e+00> : vector<6x8x16xf32>
    %81 = tpu.matmul %80, %66, %cst_30 {dimension_numbers = #tpu.dot_dimension_numbers<[2], [1], [1], [2], [0, 0, 0, 1, 1, 2], [0], [0]>} : vector<6x8x8xf32>, vector<6x8x16xf32>, vector<6x8x16xf32> -> vector<6x8x16xf32>
    "tpu.trace_stop"() : () -> ()
    %82 = vector.shape_cast %81 : vector<6x8x16xf32> to vector<48x16xf32>
    %c32 = arith.constant 32 : index
    %c0_31 = arith.constant 0 : index
    %83 = vector.load %arg6[%c32, %c0_31] : memref<65x32xf32, #tpu.memory_space<vmem>>, vector<16x32xf32>
    %cst_32 = arith.constant dense<0.000000e+00> : vector<48x32xf32>
    %84 = tpu.matmul %82, %83, %cst_32 {dimension_numbers = #tpu.dot_dimension_numbers<[1], [0], [0], [1], [0, 0, 1, 1], [], []>} : vector<48x16xf32>, vector<16x32xf32>, vector<48x32xf32> -> vector<48x32xf32>
    %85 = arith.addf %60, %84 : vector<48x32xf32>
    %86 = vector.extract_strided_slice %4 {offsets = [0, 48], sizes = [48, 16], strides = [1, 1]} : vector<48x64xf32> to vector<48x16xf32>
    %87 = vector.shape_cast %86 : vector<48x16xf32> to vector<6x8x16xf32>
    %88 = vector.extract_strided_slice %6 {offsets = [0, 48], sizes = [48, 16], strides = [1, 1]} : vector<48x128xf32> to vector<48x16xf32>
    %89 = vector.shape_cast %88 : vector<48x16xf32> to vector<6x8x16xf32>
    %90 = vector.extract_strided_slice %6 {offsets = [0, 112], sizes = [48, 16], strides = [1, 1]} : vector<48x128xf32> to vector<48x16xf32>
    %91 = vector.shape_cast %90 : vector<48x16xf32> to vector<6x8x16xf32>
    "tpu.trace_start"() <{level = 10 : i32, message = "bqc,bkc->bqk"}> : () -> ()
    %cst_33 = arith.constant dense<0.000000e+00> : vector<6x8x8xf32>
    %92 = tpu.matmul %87, %89, %cst_33 {dimension_numbers = #tpu.dot_dimension_numbers<[2], [2], [1], [1], [0, 0, 0, 1, 1, 1], [0], [0]>} : vector<6x8x16xf32>, vector<6x8x16xf32>, vector<6x8x8xf32> -> vector<6x8x8xf32>
    "tpu.trace_stop"() : () -> ()
    %93 = vector.extract_strided_slice %11 {offsets = [0, 3, 0, 0], sizes = [6, 1, 8, 8], strides = [1, 1, 1, 1]} : vector<6x4x8x8xf32> to vector<6x1x8x8xf32>
    %94 = vector.shape_cast %93 : vector<6x1x8x8xf32> to vector<6x8x8xf32>
    %95 = arith.addf %92, %94 : vector<6x8x8xf32>
    %cst_34 = arith.constant dense<0xFF800000> : vector<6x8xf32>
    %96 = vector.multi_reduction <maximumf>, %95, %cst_34 [2] : vector<6x8x8xf32> to vector<6x8xf32>
    %97 = vector.shape_cast %96 : vector<6x8xf32> to vector<6x8x1xf32>
    %98 = vector.broadcast %97 : vector<6x8x1xf32> to vector<6x8x8xf32>
    %99 = arith.subf %95, %98 : vector<6x8x8xf32>
    %100 = math.exp %99 : vector<6x8x8xf32>
    %cst_35 = arith.constant dense<0.000000e+00> : vector<6x8xf32>
    %101 = vector.multi_reduction <add>, %100, %cst_35 [2] : vector<6x8x8xf32> to vector<6x8xf32>
    %102 = vector.shape_cast %101 : vector<6x8xf32> to vector<6x8x1xf32>
    %103 = tpu.reciprocal %102 {approx = true} : vector<6x8x1xf32> -> vector<6x8x1xf32>
    %104 = vector.broadcast %103 : vector<6x8x1xf32> to vector<6x8x8xf32>
    %105 = arith.mulf %100, %104 : vector<6x8x8xf32>
    "tpu.trace_start"() <{level = 10 : i32, message = "bqk,bkc->bqc"}> : () -> ()
    %cst_36 = arith.constant dense<0.000000e+00> : vector<6x8x16xf32>
    %106 = tpu.matmul %105, %91, %cst_36 {dimension_numbers = #tpu.dot_dimension_numbers<[2], [1], [1], [2], [0, 0, 0, 1, 1, 2], [0], [0]>} : vector<6x8x8xf32>, vector<6x8x16xf32>, vector<6x8x16xf32> -> vector<6x8x16xf32>
    "tpu.trace_stop"() : () -> ()
    %107 = vector.shape_cast %106 : vector<6x8x16xf32> to vector<48x16xf32>
    %c48 = arith.constant 48 : index
    %c0_37 = arith.constant 0 : index
    %108 = vector.load %arg6[%c48, %c0_37] : memref<65x32xf32, #tpu.memory_space<vmem>>, vector<16x32xf32>
    %cst_38 = arith.constant dense<0.000000e+00> : vector<48x32xf32>
    %109 = tpu.matmul %107, %108, %cst_38 {dimension_numbers = #tpu.dot_dimension_numbers<[1], [0], [0], [1], [0, 0, 1, 1], [], []>} : vector<48x16xf32>, vector<16x32xf32>, vector<48x32xf32> -> vector<48x32xf32>
    %110 = arith.addf %85, %109 : vector<48x32xf32>
    %c64 = arith.constant 64 : index
    %c0_39 = arith.constant 0 : index
    %111 = vector.load %arg6[%c64, %c0_39] : memref<65x32xf32, #tpu.memory_space<vmem>>, vector<1x32xf32>
    %112 = vector.broadcast %111 : vector<1x32xf32> to vector<48x32xf32>
    %113 = arith.addf %110, %112 : vector<48x32xf32>
    %c0_40 = arith.constant 0 : index
    %c0_41 = arith.constant 0 : index
    %114 = vector.load %arg7[%c0_40, %c0_41] : memref<48x32xf32, #tpu.memory_space<vmem>>, vector<48x32xf32>
    tpu.vector_store %arg7[%c0_40, %c0_41], %113 {strides = array<i32>} : memref<48x32xf32, #tpu.memory_space<vmem>>, vector<48x32xf32>,
    return
  }
  func.func @transform_0(%arg0: i32) -> (i32, i32) {
    %c0_i32 = arith.constant 0 : i32
    %c0_i32_0 = arith.constant 0 : i32
    return %arg0, %c0_i32 : i32, i32
  }
  func.func @transform_1(%arg0: i32) -> (i32, i32) {
    %c0_i32 = arith.constant 0 : i32
    %c0_i32_0 = arith.constant 0 : i32
    return %arg0, %c0_i32 : i32, i32
  }
  func.func @transform_2(%arg0: i32) -> (i32, i32, i32, i32) {
    %c0_i32 = arith.constant 0 : i32
    %c0_i32_0 = arith.constant 0 : i32
    %c0_i32_1 = arith.constant 0 : i32
    %c0_i32_2 = arith.constant 0 : i32
    return %arg0, %c0_i32, %c0_i32_0, %c0_i32_1 : i32, i32, i32, i32
  }
  func.func @transform_3(%arg0: i32) -> (i32, i32, i32, i32) {
    %c0_i32 = arith.constant 0 : i32
    %c0_i32_0 = arith.constant 0 : i32
    %c0_i32_1 = arith.constant 0 : i32
    %c0_i32_2 = arith.constant 0 : i32
    %c0_i32_3 = arith.constant 0 : i32
    return %c0_i32, %c0_i32_0, %c0_i32_1, %c0_i32_2 : i32, i32, i32, i32
  }
  func.func @transform_4(%arg0: i32) -> (i32, i32) {
    %c0_i32 = arith.constant 0 : i32
    %c0_i32_0 = arith.constant 0 : i32
    %c0_i32_1 = arith.constant 0 : i32
    return %c0_i32, %c0_i32_0 : i32, i32
  }
  func.func @transform_5(%arg0: i32) -> (i32, i32) {
    %c0_i32 = arith.constant 0 : i32
    %c0_i32_0 = arith.constant 0 : i32
    %c0_i32_1 = arith.constant 0 : i32
    return %c0_i32, %c0_i32_0 : i32, i32
  }
  func.func @transform_6(%arg0: i32) -> (i32, i32) {
    %c0_i32 = arith.constant 0 : i32
    %c0_i32_0 = arith.constant 0 : i32
    return %arg0, %c0_i32 : i32, i32
  }
}

</mosaic_0001>

<llo_original>
// kernel: template_attn_forward.1
$region0: #{template_attn_forward.1}
  #allocation0 [shape = 'u32[]', space=smem, size = 0x4, offset = 0x4, fixed_abs, tag = 'smem constant byte address 0x4 - core index']
  #allocation1 [shape = 'u32[144,128]{1,0:T(1,128)}', space=vmem, size = 0x12000, scoped, tag = 'internal scratch']
  %s0 = inlined_call_operand.vmem [shape: f32[48,32], index: 0, kind: input, shape index: {}]
  %s1 = inlined_call_operand.vmem [shape: f32[48,32], index: 1, kind: input, shape index: {}]
  %s2 = inlined_call_operand.vmem [shape: f32[6,1,1,8], index: 2, kind: input, shape index: {}]
  %s3 = inlined_call_operand.vmem [shape: f32[1,4,8,8], index: 3, kind: input, shape index: {}]
  %s4 = inlined_call_operand.vmem [shape: f32[32,192], index: 4, kind: input, shape index: {}]
  %s5 = inlined_call_operand.vmem [shape: f32[65,32], index: 5, kind: input, shape index: {}]
  %s6 = inlined_call_operand.hbm [shape: f32[48,32], index: 6, kind: output, shape index: {}]
  %s7 = sld [smem:[#allocation0]]
  $region34: #{template_attn_forward.1} parent=0
    _
  %s9 = ssub.s32 1, %s7
  %s10 = scalar_select 0, %s9, %s7
  $region1: #{template_attn_forward.1} parent=0
    #allocation2 [shape = 'u8[24576]{0}', space=vmem, size = 0x6000, scoped, tag = 'output window, operand 0, single buffered']
    #allocation3 [shape = 's32[1]{0}', space=sflag, size = 0x4, scoped, tag = 'scoped memory for template_attn_forward.1']
    %11 = vsyncpa [#allocation3], 0
    // Predicated region
    $region2: #{template_attn_forward.1} parent=1 // pred_check
      _
    $region3: #{template_attn_forward.1} parent=1 // pred_check_branch
      %13 = sbr.rel (0) target = $region5
    $region4: #{template_attn_forward.1} parent=1 // pred_region
      _
    $region5: #{template_attn_forward.1} parent=1 // pred_fallthru
      _
    // Predicated region
    $region6: #{template_attn_forward.1} parent=1 // pred_check
      _
    $region7: #{template_attn_forward.1} parent=1 // pred_check_branch
      %15 = sbr.rel (0) target = $region9
    $region8: #{template_attn_forward.1} parent=1 // pred_region
      _
    $region9: #{template_attn_forward.1} parent=1 // pred_fallthru
      _
    // Predicated region
    $region10: #{template_attn_forward.1} parent=1 // pred_check
      _
    $region11: #{template_attn_forward.1} parent=1 // pred_check_branch
      %17 = sbr.rel (0) target = $region13
    $region12: #{template_attn_forward.1} parent=1 // pred_region
      _
    $region13: #{template_attn_forward.1} parent=1 // pred_fallthru
      _
    // Predicated region
    $region14: #{template_attn_forward.1} parent=1 // pred_check
      _
    $region15: #{template_attn_forward.1} parent=1 // pred_check_branch
      %19 = sbr.rel (0) target = $region17
    $region16: #{template_attn_forward.1} parent=1 // pred_region
      _
    $region17: #{template_attn_forward.1} parent=1 // pred_fallthru
      _
    // Predicated region
    $region18: #{template_attn_forward.1} parent=1 // pred_check
      _
    $region19: #{template_attn_forward.1} parent=1 // pred_check_branch
      %21 = sbr.rel (0) target = $region21
    $region20: #{template_attn_forward.1} parent=1 // pred_region
      _
    $region21: #{template_attn_forward.1} parent=1 // pred_fallthru
      _
    // Predicated region
    $region22: #{template_attn_forward.1} parent=1 // pred_check
      _
    $region23: #{template_attn_forward.1} parent=1 // pred_check_branch
      %23 = sbr.rel (0) target = $region25
    $region24: #{template_attn_forward.1} parent=1 // pred_region
      _
    $region25: #{template_attn_forward.1} parent=1 // pred_fallthru
      _
    %v24 = vld [vmem:[%s0] sm:$0xff]
    %v25 = vld [vmem:[%s0 + $0x8] sm:$0xff]
    %v26 = vld [vmem:[%s0 + $0x10] sm:$0xff]
    %v27 = vld [vmem:[%s0 + $0x18] sm:$0xff]
    %v28 = vld [vmem:[%s0 + $0x20] sm:$0xff]
    %v29 = vld [vmem:[%s0 + $0x28] sm:$0xff]
    %v30 = vld [vmem:[%s1] sm:$0xff]
    %v31 = vld [vmem:[%s1 + $0x8] sm:$0xff]
    %v32 = vld [vmem:[%s1 + $0x10] sm:$0xff]
    %v33 = vld [vmem:[%s1 + $0x18] sm:$0xff]
    %v34 = vld [vmem:[%s1 + $0x20] sm:$0xff]
    %v35 = vld [vmem:[%s1 + $0x28] sm:$0xff]
    %v36 = vld [vmem:[%s4] sm:$0xff]
    %v37 = vld [vmem:[%s4 + $0x8] sm:$0xff]
    %v38 = vld [vmem:[%s4 + $0x10] sm:$0xff]
    %v39 = vld [vmem:[%s4 + $0x18] sm:$0xff]
    %v40 = vld [vmem:[%s4 + $0x20] sm:$0xff]
    %v41 = vld [vmem:[%s4 + $0x28] sm:$0xff]
    %v42 = vld [vmem:[%s4 + $0x30] sm:$0xff]
    %v43 = vld [vmem:[%s4 + $0x38] sm:$0xff]
    %vm44 = vcmask 261120
    %v46 = vsel %vm44, %v24, 0
    %v49 = vsel %vm44, %v25, 0
    %v52 = vsel %vm44, %v26, 0
    %v55 = vsel %vm44, %v27, 0
    %v58 = vsel %vm44, %v28, 0
    %v61 = vsel %vm44, %v29, 0
    %63 = vmatprep.subr.mxu0 0.0
    %64 = vmatpush1.msra.mxu0 %v36
    %65 = vmatprep.subr.mxu0 0.0
    %66 = vmatpush1.msra.mxu0 %v38
    %67 = vmatprep.subr.mxu0 0.0
    %68 = vmatpush1.msra.mxu0 %v40
    %69 = vmatprep.subr.mxu0 0.0
    %70 = vmatpush1.msra.mxu0 %v42
    %71 = vmatprep.subr.mxu0 0.0
    %72 = vmatpush1.msra.mxu0 0.0
    %73 = vmatprep.subr.mxu0 0.0
    %74 = vmatpush1.msra.mxu0 0.0
    %75 = vmatprep.subr.mxu0 0.0
    %76 = vmatpush1.msra.mxu0 0.0
    %77 = vmatprep.subr.mxu0 0.0
    %78 = vmatpush1.msra.mxu0 0.0
    %79 = vmatprep.subr.mxu0 0.0
    %80 = vmatpush1.msra.mxu0 0.0
    %81 = vmatprep.subr.mxu0 0.0
    %82 = vmatpush1.msra.mxu0 0.0
    %83 = vmatprep.subr.mxu0 0.0
    %84 = vmatpush1.msra.mxu0 0.0
    %85 = vmatprep.subr.mxu0 0.0
    %86 = vmatpush1.msra.mxu0 0.0
    %87 = vmatprep.subr.mxu0 0.0
    %88 = vmatpush1.msra.mxu0 0.0
    %89 = vmatprep.subr.mxu0 0.0
    %90 = vmatpush1.msra.mxu0 0.0
    %91 = vmatprep.subr.mxu0 0.0
    %92 = vmatpush1.msra.mxu0 0.0
    %93 = vmatprep.subr.mxu0 0.0
    %94 = vmatpush1.msra.mxu0 0.0
    %95 = vmatprep.subr.mxu0 0.0
    %96 = vmatpush1.msra.mxu0 0.0
    %97 = vmatprep.subr.mxu0 0.0
    %98 = vmatpush1.msra.mxu0 0.0
    %99 = vmatprep.subr.mxu0 0.0
    %100 = vmatpush1.msra.mxu0 0.0
    %101 = vmatprep.subr.mxu0 0.0
    %102 = vmatpush1.msra.mxu0 0.0
    %103 = vmatprep.subr.mxu0 0.0
    %104 = vmatpush1.msra.mxu0 0.0
    %105 = vmatprep.subr.mxu0 0.0
    %106 = vmatpush1.msra.mxu0 0.0
    %107 = vmatprep.subr.mxu0 0.0
    %108 = vmatpush1.msra.mxu0 0.0
    %109 = vmatprep.subr.mxu0 0.0
    %110 = vmatpush1.msra.mxu0 0.0
    %111 = vmatprep.subr.mxu0 0.0
    %112 = vmatpush1.msra.mxu0 0.0
    %113 = vmatprep.subr.mxu0 0.0
    %114 = vmatpush1.msra.mxu0 0.0
    %115 = vmatprep.subr.mxu0 0.0
    %116 = vmatpush1.msra.mxu0 0.0
    %117 = vmatprep.subr.mxu0 0.0
    %118 = vmatpush1.msra.mxu0 0.0
    %119 = vmatprep.subr.mxu0 0.0
    %120 = vmatpush1.msra.mxu0 0.0
    %121 = vmatprep.subr.mxu0 0.0
    %122 = vmatpush1.msra.mxu0 0.0
    %123 = vmatprep.subr.mxu0 0.0
    %124 = vmatpush1.msra.mxu0 0.0
    %125 = vmatprep.subr.mxu0 0.0
    %126 = vmatpush1.msra.mxu0 0.0
    %127 = vmatprep.mubr.f32.mxu0 0.0
    %128 = vmatmul.mubr.f32.gmra.mrb[0].mxu0 %v46
    %v129 = vpop.f32.mrb[0].mxu0
    %v130 = vadd.f32 0.0, %v129
    %v131 = vpop.f32.mrb[0].mxu0
    %132 = vmatprep.mubr.f32.mxu0 0.0
    %133 = vmatmul.mubr.f32.gmra.mrb[0].mxu0 %v49
    %v134 = vpop.f32.mrb[0].mxu0
    %v135 = vadd.f32 0.0, %v134
    %v136 = vpop.f32.mrb[0].mxu0
    %137 = vmatprep.mubr.f32.mxu0 0.0
    %138 = vmatmul.mubr.f32.gmra.mrb[0].mxu0 %v52
    %v139 = vpop.f32.mrb[0].mxu0
    %v140 = vadd.f32 0.0, %v139
    %v141 = vpop.f32.mrb[0].mxu0
    %142 = vmatprep.mubr.f32.mxu0 0.0
    %143 = vmatmul.mubr.f32.gmra.mrb[0].mxu0 %v55
    %v144 = vpop.f32.mrb[0].mxu0
    %v145 = vadd.f32 0.0, %v144
    %v146 = vpop.f32.mrb[0].mxu0
    %147 = vmatprep.mubr.f32.mxu0 0.0
    %148 = vmatmul.mubr.f32.gmra.mrb[0].mxu0 %v58
    %v149 = vpop.f32.mrb[0].mxu0
    %v150 = vadd.f32 0.0, %v149
    %v151 = vpop.f32.mrb[0].mxu0
    %152 = vmatprep.mubr.f32.mxu0 0.0
    %153 = vmatmul.mubr.f32.gmra.mrb[0].mxu0 %v61
    %v154 = vpop.f32.mrb[0].mxu0
    %v155 = vadd.f32 0.0, %v154
    %v156 = vpop.f32.mrb[0].mxu0
    %157 = vdwg.mxu0
    %166 = vrot.lane.b32.xlu0 %v36, 64
    %v167 = vpop.permute.xlu0 %166
    %168 = vrot.lane.b32.xlu0 %v37, 64
    %v169 = vpop.permute.xlu0 %168
    %170 = vrot.lane.b32.xlu0 %v38, 64
    %v171 = vpop.permute.xlu0 %170
    %172 = vrot.lane.b32.xlu0 %v39, 64
    %v173 = vpop.permute.xlu0 %172
    %174 = vrot.lane.b32.xlu0 %v40, 64
    %v175 = vpop.permute.xlu0 %174
    %176 = vrot.lane.b32.xlu0 %v41, 64
    %v177 = vpop.permute.xlu0 %176
    %178 = vrot.lane.b32.xlu0 %v42, 64
    %v179 = vpop.permute.xlu0 %178
    %180 = vrot.lane.b32.xlu0 %v43, 64
    %v181 = vpop.permute.xlu0 %180
    %vm182 = vcmask 523264
    %v183 = vsel %vm182, %v167, %v169
    %v184 = vsel %vm182, %v171, %v173
    %v185 = vsel %vm182, %v175, %v177
    %v186 = vsel %vm182, %v179, %v181
    %v192 = vsel %vm44, %v30, 0
    %v195 = vsel %vm44, %v31, 0
    %v198 = vsel %vm44, %v32, 0
    %v201 = vsel %vm44, %v33, 0
    %v204 = vsel %vm44, %v34, 0
    %v207 = vsel %vm44, %v35, 0
    %209 = vmatprep.subr.mxu0 0.0
    %210 = vmatpush1.msra.mxu0 %v183
    %211 = vmatprep.subr.mxu0 0.0
    %212 = vmatpush1.msra.mxu0 %v184
    %213 = vmatprep.subr.mxu0 0.0
    %214 = vmatpush1.msra.mxu0 %v185
    %215 = vmatprep.subr.mxu0 0.0
    %216 = vmatpush1.msra.mxu0 %v186
    %217 = vmatprep.subr.mxu0 0.0
    %218 = vmatpush1.msra.mxu0 0.0
    %219 = vmatprep.subr.mxu0 0.0
    %220 = vmatpush1.msra.mxu0 0.0
    %221 = vmatprep.subr.mxu0 0.0
    %222 = vmatpush1.msra.mxu0 0.0
    %223 = vmatprep.subr.mxu0 0.0
    %224 = vmatpush1.msra.mxu0 0.0
    %225 = vmatprep.subr.mxu0 0.0
    %226 = vmatpush1.msra.mxu0 0.0
    %227 = vmatprep.subr.mxu0 0.0
    %228 = vmatpush1.msra.mxu0 0.0
    %229 = vmatprep.subr.mxu0 0.0
    %230 = vmatpush1.msra.mxu0 0.0
    %231 = vmatprep.subr.mxu0 0.0
    %232 = vmatpush1.msra.mxu0 0.0
    %233 = vmatprep.subr.mxu0 0.0
    %234 = vmatpush1.msra.mxu0 0.0
    %235 = vmatprep.subr.mxu0 0.0
    %236 = vmatpush1.msra.mxu0 0.0
    %237 = vmatprep.subr.mxu0 0.0
    %238 = vmatpush1.msra.mxu0 0.0
    %239 = vmatprep.subr.mxu0 0.0
    %240 = vmatpush1.msra.mxu0 0.0
    %241 = vmatprep.subr.mxu0 0.0
    %242 = vmatpush1.msra.mxu0 0.0
    %243 = vmatprep.subr.mxu0 0.0
    %244 = vmatpush1.msra.mxu0 0.0
    %245 = vmatprep.subr.mxu0 0.0
    %246 = vmatpush1.msra.mxu0 0.0
    %247 = vmatprep.subr.mxu0 0.0
    %248 = vmatpush1.msra.mxu0 0.0
    %249 = vmatprep.subr.mxu0 0.0
    %250 = vmatpush1.msra.mxu0 0.0
    %251 = vmatprep.subr.mxu0 0.0
    %252 = vmatpush1.msra.mxu0 0.0
    %253 = vmatprep.subr.mxu0 0.0
    %254 = vmatpush1.msra.mxu0 0.0
    %255 = vmatprep.subr.mxu0 0.0
    %256 = vmatpush1.msra.mxu0 0.0
    %257 = vmatprep.subr.mxu0 0.0
    %258 = vmatpush1.msra.mxu0 0.0
    %259 = vmatprep.subr.mxu0 0.0
    %260 = vmatpush1.msra.mxu0 0.0
    %261 = vmatprep.subr.mxu0 0.0
    %262 = vmatpush1.msra.mxu0 0.0
    %263 = vmatprep.subr.mxu0 0.0
    %264 = vmatpush1.msra.mxu0 0.0
    %265 = vmatprep.subr.mxu0 0.0
    %266 = vmatpush1.msra.mxu0 0.0
    %267 = vmatprep.subr.mxu0 0.0
    %268 = vmatpush1.msra.mxu0 0.0
    %269 = vmatprep.subr.mxu0 0.0
    %270 = vmatpush1.msra.mxu0 0.0
    %271 = vmatprep.subr.mxu0 0.0
    %272 = vmatpush1.msra.mxu0 0.0
    %273 = vmatprep.mubr.f32.mxu0 0.0
    %274 = vmatmul.mubr.f32.gmra.mrb[0].mxu0 %v192
    %v275 = vpop.f32.mrb[0].mxu0
    %v276 = vadd.f32 0.0, %v275
    %v277 = vpop.f32.mrb[0].mxu0
    %278 = vmatprep.mubr.f32.mxu0 0.0
    %279 = vmatmul.mubr.f32.gmra.mrb[0].mxu0 %v195
    %v280 = vpop.f32.mrb[0].mxu0
    %v281 = vadd.f32 0.0, %v280
    %v282 = vpop.f32.mrb[0].mxu0
    %283 = vmatprep.mubr.f32.mxu0 0.0
    %284 = vmatmul.mubr.f32.gmra.mrb[0].mxu0 %v198
    %v285 = vpop.f32.mrb[0].mxu0
    %v286 = vadd.f32 0.0, %v285
    %v287 = vpop.f32.mrb[0].mxu0
    %288 = vmatprep.mubr.f32.mxu0 0.0
    %289 = vmatmul.mubr.f32.gmra.mrb[0].mxu0 %v201
    %v290 = vpop.f32.mrb[0].mxu0
    %v291 = vadd.f32 0.0, %v290
    %v292 = vpop.f32.mrb[0].mxu0
    %293 = vmatprep.mubr.f32.mxu0 0.0
    %294 = vmatmul.mubr.f32.gmra.mrb[0].mxu0 %v204
    %v295 = vpop.f32.mrb[0].mxu0
    %v296 = vadd.f32 0.0, %v295
    %v297 = vpop.f32.mrb[0].mxu0
    %298 = vmatprep.mubr.f32.mxu0 0.0
    %299 = vmatmul.mubr.f32.gmra.mrb[0].mxu0 %v207
    %v300 = vpop.f32.mrb[0].mxu0
    %v301 = vadd.f32 0.0, %v300
    %v302 = vpop.f32.mrb[0].mxu0
    %303 = vdwg.mxu0
    %v304 = vld [vmem:[%s2] sm:$0x1]
    %v305 = vld [vmem:[%s2 + $0x1] sm:$0x1]
    %v306 = vld [vmem:[%s2 + $0x2] sm:$0x1]
    %v307 = vld [vmem:[%s2 + $0x3] sm:$0x1]
    %v308 = vld [vmem:[%s2 + $0x4] sm:$0x1]
    %v309 = vld [vmem:[%s2 + $0x5] sm:$0x1]
    %v310 = vld [vmem:[%s3] sm:$0xff]
    %v311 = vld [vmem:[%s3 + $0x8] sm:$0xff]
    %v312 = vld [vmem:[%s3 + $0x10] sm:$0xff]
    %v313 = vld [vmem:[%s3 + $0x18] sm:$0xff]
    %v320 = vlaneseq
    %v321 = vshrl.u32 %v320, 7
    %v322 = vsub.s32 0, %v321
    %v323 = vrot.slane %v304, %v322
    %v324 = vlaneseq
    %v325 = vshrl.u32 %v324, 7
    %v326 = vsub.s32 0, %v325
    %v327 = vrot.slane %v305, %v326
    %v328 = vlaneseq
    %v329 = vshrl.u32 %v328, 7
    %v330 = vsub.s32 0, %v329
    %v331 = vrot.slane %v306, %v330
    %v332 = vlaneseq
    %v333 = vshrl.u32 %v332, 7
    %v334 = vsub.s32 0, %v333
    %v335 = vrot.slane %v307, %v334
    %v336 = vlaneseq
    %v337 = vshrl.u32 %v336, 7
    %v338 = vsub.s32 0, %v337
    %v339 = vrot.slane %v308, %v338
    %v340 = vlaneseq
    %v341 = vshrl.u32 %v340, 7
    %v342 = vsub.s32 0, %v341
    %v343 = vrot.slane %v309, %v342
    %v350 = vadd.f32 %v323, %v310
    %v351 = vadd.f32 %v323, %v311
    %v352 = vadd.f32 %v323, %v312
    %v353 = vadd.f32 %v323, %v313
    %v354 = vadd.f32 %v327, %v310
    %v355 = vadd.f32 %v327, %v311
    %v356 = vadd.f32 %v327, %v312
    %v357 = vadd.f32 %v327, %v313
    %v358 = vadd.f32 %v331, %v310
    %v359 = vadd.f32 %v331, %v311
    %v360 = vadd.f32 %v331, %v312
    %v361 = vadd.f32 %v331, %v313
    %v362 = vadd.f32 %v335, %v310
    %v363 = vadd.f32 %v335, %v311
    %v364 = vadd.f32 %v335, %v312
    %v365 = vadd.f32 %v335, %v313
    %v366 = vadd.f32 %v339, %v310
    %v367 = vadd.f32 %v339, %v311
    %v368 = vadd.f32 %v339, %v312
    %v369 = vadd.f32 %v339, %v313
    %v370 = vadd.f32 %v343, %v310
    %v371 = vadd.f32 %v343, %v311
    %v372 = vadd.f32 %v343, %v312
    %v373 = vadd.f32 %v343, %v313
    %vm374 = vcmask 130048
    %v376 = vsel %vm374, %v130, 0
    %v379 = vsel %vm374, %v276, 0
    %381 = vmatprep.subr.mxu0 0.0
    %382 = vmatpush1.xpose.msra.mxu0 %v379
    %383 = vmatprep.subr.mxu0 0.0
    %384 = vmatpush1.xpose.msra.mxu0 0.0
    %385 = vmatprep.subr.mxu0 0.0
    %386 = vmatpush1.xpose.msra.mxu0 0.0
    %387 = vmatprep.subr.mxu0 0.0
    %388 = vmatpush1.xpose.msra.mxu0 0.0
    %389 = vmatprep.subr.mxu0 0.0
    %390 = vmatpush1.xpose.msra.mxu0 0.0
    %391 = vmatprep.subr.mxu0 0.0
    %392 = vmatpush1.xpose.msra.mxu0 0.0
    %393 = vmatprep.subr.mxu0 0.0
    %394 = vmatpush1.xpose.msra.mxu0 0.0
    %395 = vmatprep.subr.mxu0 0.0
    %396 = vmatpush1.xpose.msra.mxu0 0.0
    %397 = vmatprep.subr.mxu0 0.0
    %398 = vmatpush1.xpose.msra.mxu0 0.0
    %399 = vmatprep.subr.mxu0 0.0
    %400 = vmatpush1.xpose.msra.mxu0 0.0
    %401 = vmatprep.subr.mxu0 0.0
    %402 = vmatpush1.xpose.msra.mxu0 0.0
    %403 = vmatprep.subr.mxu0 0.0
    %404 = vmatpush1.xpose.msra.mxu0 0.0
    %405 = vmatprep.subr.mxu0 0.0
    %406 = vmatpush1.xpose.msra.mxu0 0.0
    %407 = vmatprep.subr.mxu0 0.0
    %408 = vmatpush1.xpose.msra.mxu0 0.0
    %409 = vmatprep.subr.mxu0 0.0
    %410 = vmatpush1.xpose.msra.mxu0 0.0
    %411 = vmatprep.subr.mxu0 0.0
    %412 = vmatpush1.xpose.msra.mxu0 0.0
    %413 = vmatprep.subr.mxu0 0.0
    %414 = vmatpush1.xpose.msra.mxu0 0.0
    %415 = vmatprep.subr.mxu0 0.0
    %416 = vmatpush1.xpose.msra.mxu0 0.0
    %417 = vmatprep.subr.mxu0 0.0
    %418 = vmatpush1.xpose.msra.mxu0 0.0
    %419 = vmatprep.subr.mxu0 0.0
    %420 = vmatpush1.xpose.msra.mxu0 0.0
    %421 = vmatprep.subr.mxu0 0.0
    %422 = vmatpush1.xpose.msra.mxu0 0.0
    %423 = vmatprep.subr.mxu0 0.0
    %424 = vmatpush1.xpose.msra.mxu0 0.0
    %425 = vmatprep.subr.mxu0 0.0
    %426 = vmatpush1.xpose.msra.mxu0 0.0
    %427 = vmatprep.subr.mxu0 0.0
    %428 = vmatpush1.xpose.msra.mxu0 0.0
    %429 = vmatprep.subr.mxu0 0.0
    %430 = vmatpush1.xpose.msra.mxu0 0.0
    %431 = vmatprep.subr.mxu0 0.0
    %432 = vmatpush1.xpose.msra.mxu0 0.0
    %433 = vmatprep.subr.mxu0 0.0
    %434 = vmatpush1.xpose.msra.mxu0 0.0
    %435 = vmatprep.subr.mxu0 0.0
    %436 = vmatpush1.xpose.msra.mxu0 0.0
    %437 = vmatprep.subr.mxu0 0.0
    %438 = vmatpush1.xpose.msra.mxu0 0.0
    %439 = vmatprep.subr.mxu0 0.0
    %440 = vmatpush1.xpose.msra.mxu0 0.0
    %441 = vmatprep.subr.mxu0 0.0
    %442 = vmatpush1.xpose.msra.mxu0 0.0
    %443 = vmatprep.subr.mxu0 0.0
    %444 = vmatpush1.xpose.msra.mxu0 0.0
    %445 = vmatprep.mubr.f32.mxu0 0.0
    %446 = vmatmul.mubr.f32.gmra.mrb[0].mxu0 %v376
    %v447 = vpop.f32.mrb[0].mxu0
    %v448 = vadd.f32 %v350, %v447
    %v449 = vpop.f32.mrb[0].mxu0
    %450 = vdwg.mxu0
    %v452 = vsel %vm374, %v135, 0
    %v455 = vsel %vm374, %v281, 0
    %457 = vmatprep.subr.mxu0 0.0
    %458 = vmatpush1.xpose.msra.mxu0 %v455
    %459 = vmatprep.subr.mxu0 0.0
    %460 = vmatpush1.xpose.msra.mxu0 0.0
    %461 = vmatprep.subr.mxu0 0.0
    %462 = vmatpush1.xpose.msra.mxu0 0.0
    %463 = vmatprep.subr.mxu0 0.0
    %464 = vmatpush1.xpose.msra.mxu0 0.0
    %465 = vmatprep.subr.mxu0 0.0
    %466 = vmatpush1.xpose.msra.mxu0 0.0
    %467 = vmatprep.subr.mxu0 0.0
    %468 = vmatpush1.xpose.msra.mxu0 0.0
    %469 = vmatprep.subr.mxu0 0.0
    %470 = vmatpush1.xpose.msra.mxu0 0.0
    %471 = vmatprep.subr.mxu0 0.0
    %472 = vmatpush1.xpose.msra.mxu0 0.0
    %473 = vmatprep.subr.mxu0 0.0
    %474 = vmatpush1.xpose.msra.mxu0 0.0
    %475 = vmatprep.subr.mxu0 0.0
    %476 = vmatpush1.xpose.msra.mxu0 0.0
    %477 = vmatprep.subr.mxu0 0.0
    %478 = vmatpush1.xpose.msra.mxu0 0.0
    %479 = vmatprep.subr.mxu0 0.0
    %480 = vmatpush1.xpose.msra.mxu0 0.0
    %481 = vmatprep.subr.mxu0 0.0
    %482 = vmatpush1.xpose.msra.mxu0 0.0
    %483 = vmatprep.subr.mxu0 0.0
    %484 = vmatpush1.xpose.msra.mxu0 0.0
    %485 = vmatprep.subr.mxu0 0.0
    %486 = vmatpush1.xpose.msra.mxu0 0.0
    %487 = vmatprep.subr.mxu0 0.0
    %488 = vmatpush1.xpose.msra.mxu0 0.0
    %489 = vmatprep.subr.mxu0 0.0
    %490 = vmatpush1.xpose.msra.mxu0 0.0
    %491 = vmatprep.subr.mxu0 0.0
    %492 = vmatpush1.xpose.msra.mxu0 0.0
    %493 = vmatprep.subr.mxu0 0.0
    %494 = vmatpush1.xpose.msra.mxu0 0.0
    %495 = vmatprep.subr.mxu0 0.0
    %496 = vmatpush1.xpose.msra.mxu0 0.0
    %497 = vmatprep.subr.mxu0 0.0
    %498 = vmatpush1.xpose.msra.mxu0 0.0
    %499 = vmatprep.subr.mxu0 0.0
    %500 = vmatpush1.xpose.msra.mxu0 0.0
    %501 = vmatprep.subr.mxu0 0.0
    %502 = vmatpush1.xpose.msra.mxu0 0.0
    %503 = vmatprep.subr.mxu0 0.0
    %504 = vmatpush1.xpose.msra.mxu0 0.0
    %505 = vmatprep.subr.mxu0 0.0
    %506 = vmatpush1.xpose.msra.mxu0 0.0
    %507 = vmatprep.subr.mxu0 0.0
    %508 = vmatpush1.xpose.msra.mxu0 0.0
    %509 = vmatprep.subr.mxu0 0.0
    %510 = vmatpush1.xpose.msra.mxu0 0.0
    %511 = vmatprep.subr.mxu0 0.0
    %512 = vmatpush1.xpose.msra.mxu0 0.0
    %513 = vmatprep.subr.mxu0 0.0
    %514 = vmatpush1.xpose.msra.mxu0 0.0
    %515 = vmatprep.subr.mxu0 0.0
    %516 = vmatpush1.xpose.msra.mxu0 0.0
    %517 = vmatprep.subr.mxu0 0.0
    %518 = vmatpush1.xpose.msra.mxu0 0.0
    %519 = vmatprep.subr.mxu0 0.0
    %520 = vmatpush1.xpose.msra.mxu0 0.0
    %521 = vmatprep.mubr.f32.mxu0 0.0
    %522 = vmatmul.mubr.f32.gmra.mrb[0].mxu0 %v452
    %v523 = vpop.f32.mrb[0].mxu0
    %v524 = vadd.f32 %v354, %v523
    %v525 = vpop.f32.mrb[0].mxu0
    %526 = vdwg.mxu0
    %v528 = vsel %vm374, %v140, 0
    %v531 = vsel %vm374, %v286, 0
    %533 = vmatprep.subr.mxu0 0.0
    %534 = vmatpush1.xpose.msra.mxu0 %v531
    %535 = vmatprep.subr.mxu0 0.0
    %536 = vmatpush1.xpose.msra.mxu0 0.0
    %537 = vmatprep.subr.mxu0 0.0
    %538 = vmatpush1.xpose.msra.mxu0 0.0
    %539 = vmatprep.subr.mxu0 0.0
    %540 = vmatpush1.xpose.msra.mxu0 0.0
    %541 = vmatprep.subr.mxu0 0.0
    %542 = vmatpush1.xpose.msra.mxu0 0.0
    %543 = vmatprep.subr.mxu0 0.0
    %544 = vmatpush1.xpose.msra.mxu0 0.0
    %545 = vmatprep.subr.mxu0 0.0
    %546 = vmatpush1.xpose.msra.mxu0 0.0
    %547 = vmatprep.subr.mxu0 0.0
    %548 = vmatpush1.xpose.msra.mxu0 0.0
    %549 = vmatprep.subr.mxu0 0.0
    %550 = vmatpush1.xpose.msra.mxu0 0.0
    %551 = vmatprep.subr.mxu0 0.0
    %552 = vmatpush1.xpose.msra.mxu0 0.0
    %553 = vmatprep.subr.mxu0 0.0
    %554 = vmatpush1.xpose.msra.mxu0 0.0
    %555 = vmatprep.subr.mxu0 0.0
    %556 = vmatpush1.xpose.msra.mxu0 0.0
    %557 = vmatprep.subr.mxu0 0.0
    %558 = vmatpush1.xpose.msra.mxu0 0.0
    %559 = vmatprep.subr.mxu0 0.0
    %560 = vmatpush1.xpose.msra.mxu0 0.0
    %561 = vmatprep.subr.mxu0 0.0
    %562 = vmatpush1.xpose.msra.mxu0 0.0
    %563 = vmatprep.subr.mxu0 0.0
    %564 = vmatpush1.xpose.msra.mxu0 0.0
    %565 = vmatprep.subr.mxu0 0.0
    %566 = vmatpush1.xpose.msra.mxu0 0.0
    %567 = vmatprep.subr.mxu0 0.0
    %568 = vmatpush1.xpose.msra.mxu0 0.0
    %569 = vmatprep.subr.mxu0 0.0
    %570 = vmatpush1.xpose.msra.mxu0 0.0
    %571 = vmatprep.subr.mxu0 0.0
    %572 = vmatpush1.xpose.msra.mxu0 0.0
    %573 = vmatprep.subr.mxu0 0.0
    %574 = vmatpush1.xpose.msra.mxu0 0.0
    %575 = vmatprep.subr.mxu0 0.0
    %576 = vmatpush1.xpose.msra.mxu0 0.0
    %577 = vmatprep.subr.mxu0 0.0
    %578 = vmatpush1.xpose.msra.mxu0 0.0
    %579 = vmatprep.subr.mxu0 0.0
    %580 = vmatpush1.xpose.msra.mxu0 0.0
    %581 = vmatprep.subr.mxu0 0.0
    %582 = vmatpush1.xpose.msra.mxu0 0.0
    %583 = vmatprep.subr.mxu0 0.0
    %584 = vmatpush1.xpose.msra.mxu0 0.0
    %585 = vmatprep.subr.mxu0 0.0
    %586 = vmatpush1.xpose.msra.mxu0 0.0
    %587 = vmatprep.subr.mxu0 0.0
    %588 = vmatpush1.xpose.msra.mxu0 0.0
    %589 = vmatprep.subr.mxu0 0.0
    %590 = vmatpush1.xpose.msra.mxu0 0.0
    %591 = vmatprep.subr.mxu0 0.0
    %592 = vmatpush1.xpose.msra.mxu0 0.0
    %593 = vmatprep.subr.mxu0 0.0
    %594 = vmatpush1.xpose.msra.mxu0 0.0
    %595 = vmatprep.subr.mxu0 0.0
    %596 = vmatpush1.xpose.msra.mxu0 0.0
    %597 = vmatprep.mubr.f32.mxu0 0.0
    %598 = vmatmul.mubr.f32.gmra.mrb[0].mxu0 %v528
    %v599 = vpop.f32.mrb[0].mxu0
    %v600 = vadd.f32 %v358, %v599
    %v601 = vpop.f32.mrb[0].mxu0
    %602 = vdwg.mxu0
    %v604 = vsel %vm374, %v145, 0
    %v607 = vsel %vm374, %v291, 0
    %609 = vmatprep.subr.mxu0 0.0
    %610 = vmatpush1.xpose.msra.mxu0 %v607
    %611 = vmatprep.subr.mxu0 0.0
    %612 = vmatpush1.xpose.msra.mxu0 0.0
    %613 = vmatprep.subr.mxu0 0.0
    %614 = vmatpush1.xpose.msra.mxu0 0.0
    %615 = vmatprep.subr.mxu0 0.0
    %616 = vmatpush1.xpose.msra.mxu0 0.0
    %617 = vmatprep.subr.mxu0 0.0
    %618 = vmatpush1.xpose.msra.mxu0 0.0
    %619 = vmatprep.subr.mxu0 0.0
    %620 = vmatpush1.xpose.msra.mxu0 0.0
    %621 = vmatprep.subr.mxu0 0.0
    %622 = vmatpush1.xpose.msra.mxu0 0.0
    %623 = vmatprep.subr.mxu0 0.0
    %624 = vmatpush1.xpose.msra.mxu0 0.0
    %625 = vmatprep.subr.mxu0 0.0
    %626 = vmatpush1.xpose.msra.mxu0 0.0
    %627 = vmatprep.subr.mxu0 0.0
    %628 = vmatpush1.xpose.msra.mxu0 0.0
    %629 = vmatprep.subr.mxu0 0.0
    %630 = vmatpush1.xpose.msra.mxu0 0.0
    %631 = vmatprep.subr.mxu0 0.0
    %632 = vmatpush1.xpose.msra.mxu0 0.0
    %633 = vmatprep.subr.mxu0 0.0
    %634 = vmatpush1.xpose.msra.mxu0 0.0
    %635 = vmatprep.subr.mxu0 0.0
    %636 = vmatpush1.xpose.msra.mxu0 0.0
    %637 = vmatprep.subr.mxu0 0.0
    %638 = vmatpush1.xpose.msra.mxu0 0.0
    %639 = vmatprep.subr.mxu0 0.0
    %640 = vmatpush1.xpose.msra.mxu0 0.0
    %641 = vmatprep.subr.mxu0 0.0
    %642 = vmatpush1.xpose.msra.mxu0 0.0
    %643 = vmatprep.subr.mxu0 0.0
    %644 = vmatpush1.xpose.msra.mxu0 0.0
    %645 = vmatprep.subr.mxu0 0.0
    %646 = vmatpush1.xpose.msra.mxu0 0.0
    %647 = vmatprep.subr.mxu0 0.0
    %648 = vmatpush1.xpose.msra.mxu0 0.0
    %649 = vmatprep.subr.mxu0 0.0
    %650 = vmatpush1.xpose.msra.mxu0 0.0
    %651 = vmatprep.subr.mxu0 0.0
    %652 = vmatpush1.xpose.msra.mxu0 0.0
    %653 = vmatprep.subr.mxu0 0.0
    %654 = vmatpush1.xpose.msra.mxu0 0.0
    %655 = vmatprep.subr.mxu0 0.0
    %656 = vmatpush1.xpose.msra.mxu0 0.0
    %657 = vmatprep.subr.mxu0 0.0
    %658 = vmatpush1.xpose.msra.mxu0 0.0
    %659 = vmatprep.subr.mxu0 0.0
    %660 = vmatpush1.xpose.msra.mxu0 0.0
    %661 = vmatprep.subr.mxu0 0.0
    %662 = vmatpush1.xpose.msra.mxu0 0.0
    %663 = vmatprep.subr.mxu0 0.0
    %664 = vmatpush1.xpose.msra.mxu0 0.0
    %665 = vmatprep.subr.mxu0 0.0
    %666 = vmatpush1.xpose.msra.mxu0 0.0
    %667 = vmatprep.subr.mxu0 0.0
    %668 = vmatpush1.xpose.msra.mxu0 0.0
    %669 = vmatprep.subr.mxu0 0.0
    %670 = vmatpush1.xpose.msra.mxu0 0.0
    %671 = vmatprep.subr.mxu0 0.0
    %672 = vmatpush1.xpose.msra.mxu0 0.0
    %673 = vmatprep.mubr.f32.mxu0 0.0
    %674 = vmatmul.mubr.f32.gmra.mrb[0].mxu0 %v604
    %v675 = vpop.f32.mrb[0].mxu0
    %v676 = vadd.f32 %v362, %v675
    %v677 = vpop.f32.mrb[0].mxu0
    %678 = vdwg.mxu0
    %v680 = vsel %vm374, %v150, 0
    %v683 = vsel %vm374, %v296, 0
    %685 = vmatprep.subr.mxu0 0.0
    %686 = vmatpush1.xpose.msra.mxu0 %v683
    %687 = vmatprep.subr.mxu0 0.0
    %688 = vmatpush1.xpose.msra.mxu0 0.0
    %689 = vmatprep.subr.mxu0 0.0
    %690 = vmatpush1.xpose.msra.mxu0 0.0
    %691 = vmatprep.subr.mxu0 0.0
    %692 = vmatpush1.xpose.msra.mxu0 0.0
    %693 = vmatprep.subr.mxu0 0.0
    %694 = vmatpush1.xpose.msra.mxu0 0.0
    %695 = vmatprep.subr.mxu0 0.0
    %696 = vmatpush1.xpose.msra.mxu0 0.0
    %697 = vmatprep.subr.mxu0 0.0
    %698 = vmatpush1.xpose.msra.mxu0 0.0
    %699 = vmatprep.subr.mxu0 0.0
    %700 = vmatpush1.xpose.msra.mxu0 0.0
    %701 = vmatprep.subr.mxu0 0.0
    %702 = vmatpush1.xpose.msra.mxu0 0.0
    %703 = vmatprep.subr.mxu0 0.0
    %704 = vmatpush1.xpose.msra.mxu0 0.0
    %705 = vmatprep.subr.mxu0 0.0
    %706 = vmatpush1.xpose.msra.mxu0 0.0
    %707 = vmatprep.subr.mxu0 0.0
    %708 = vmatpush1.xpose.msra.mxu0 0.0
    %709 = vmatprep.subr.mxu0 0.0
    %710 = vmatpush1.xpose.msra.mxu0 0.0
    %711 = vmatprep.subr.mxu0 0.0
    %712 = vmatpush1.xpose.msra.mxu0 0.0
    %713 = vmatprep.subr.mxu0 0.0
    %714 = vmatpush1.xpose.msra.mxu0 0.0
    %715 = vmatprep.subr.mxu0 0.0
    %716 = vmatpush1.xpose.msra.mxu0 0.0
    %717 = vmatprep.subr.mxu0 0.0
    %718 = vmatpush1.xpose.msra.mxu0 0.0
    %719 = vmatprep.subr.mxu0 0.0
    %720 = vmatpush1.xpose.msra.mxu0 0.0
    %721 = vmatprep.subr.mxu0 0.0
    %722 = vmatpush1.xpose.msra.mxu0 0.0
    %723 = vmatprep.subr.mxu0 0.0
    %724 = vmatpush1.xpose.msra.mxu0 0.0
    %725 = vmatprep.subr.mxu0 0.0
    %726 = vmatpush1.xpose.msra.mxu0 0.0
    %727 = vmatprep.subr.mxu0 0.0
    %728 = vmatpush1.xpose.msra.mxu0 0.0
    %729 = vmatprep.subr.mxu0 0.0
    %730 = vmatpush1.xpose.msra.mxu0 0.0
    %731 = vmatprep.subr.mxu0 0.0
    %732 = vmatpush1.xpose.msra.mxu0 0.0
    %733 = vmatprep.subr.mxu0 0.0
    %734 = vmatpush1.xpose.msra.mxu0 0.0
    %735 = vmatprep.subr.mxu0 0.0
    %736 = vmatpush1.xpose.msra.mxu0 0.0
    %737 = vmatprep.subr.mxu0 0.0
    %738 = vmatpush1.xpose.msra.mxu0 0.0
    %739 = vmatprep.subr.mxu0 0.0
    %740 = vmatpush1.xpose.msra.mxu0 0.0
    %741 = vmatprep.subr.mxu0 0.0
    %742 = vmatpush1.xpose.msra.mxu0 0.0
    %743 = vmatprep.subr.mxu0 0.0
    %744 = vmatpush1.xpose.msra.mxu0 0.0
    %745 = vmatprep.subr.mxu0 0.0
    %746 = vmatpush1.xpose.msra.mxu0 0.0
    %747 = vmatprep.subr.mxu0 0.0
    %748 = vmatpush1.xpose.msra.mxu0 0.0
    %749 = vmatprep.mubr.f32.mxu0 0.0
    %750 = vmatmul.mubr.f32.gmra.mrb[0].mxu0 %v680
    %v751 = vpop.f32.mrb[0].mxu0
    %v752 = vadd.f32 %v366, %v751
    %v753 = vpop.f32.mrb[0].mxu0
    %754 = vdwg.mxu0
    %v756 = vsel %vm374, %v155, 0
    %v759 = vsel %vm374, %v301, 0
    %761 = vmatprep.subr.mxu0 0.0
    %762 = vmatpush1.xpose.msra.mxu0 %v759
    %763 = vmatprep.subr.mxu0 0.0
    %764 = vmatpush1.xpose.msra.mxu0 0.0
    %765 = vmatprep.subr.mxu0 0.0
    %766 = vmatpush1.xpose.msra.mxu0 0.0
    %767 = vmatprep.subr.mxu0 0.0
    %768 = vmatpush1.xpose.msra.mxu0 0.0
    %769 = vmatprep.subr.mxu0 0.0
    %770 = vmatpush1.xpose.msra.mxu0 0.0
    %771 = vmatprep.subr.mxu0 0.0
    %772 = vmatpush1.xpose.msra.mxu0 0.0
    %773 = vmatprep.subr.mxu0 0.0
    %774 = vmatpush1.xpose.msra.mxu0 0.0
    %775 = vmatprep.subr.mxu0 0.0
    %776 = vmatpush1.xpose.msra.mxu0 0.0
    %777 = vmatprep.subr.mxu0 0.0
    %778 = vmatpush1.xpose.msra.mxu0 0.0
    %779 = vmatprep.subr.mxu0 0.0
    %780 = vmatpush1.xpose.msra.mxu0 0.0
    %781 = vmatprep.subr.mxu0 0.0
    %782 = vmatpush1.xpose.msra.mxu0 0.0
    %783 = vmatprep.subr.mxu0 0.0
    %784 = vmatpush1.xpose.msra.mxu0 0.0
    %785 = vmatprep.subr.mxu0 0.0
    %786 = vmatpush1.xpose.msra.mxu0 0.0
    %787 = vmatprep.subr.mxu0 0.0
    %788 = vmatpush1.xpose.msra.mxu0 0.0
    %789 = vmatprep.subr.mxu0 0.0
    %790 = vmatpush1.xpose.msra.mxu0 0.0
    %791 = vmatprep.subr.mxu0 0.0
    %792 = vmatpush1.xpose.msra.mxu0 0.0
    %793 = vmatprep.subr.mxu0 0.0
    %794 = vmatpush1.xpose.msra.mxu0 0.0
    %795 = vmatprep.subr.mxu0 0.0
    %796 = vmatpush1.xpose.msra.mxu0 0.0
    %797 = vmatprep.subr.mxu0 0.0
    %798 = vmatpush1.xpose.msra.mxu0 0.0
    %799 = vmatprep.subr.mxu0 0.0
    %800 = vmatpush1.xpose.msra.mxu0 0.0
    %801 = vmatprep.subr.mxu0 0.0
    %802 = vmatpush1.xpose.msra.mxu0 0.0
    %803 = vmatprep.subr.mxu0 0.0
    %804 = vmatpush1.xpose.msra.mxu0 0.0
    %805 = vmatprep.subr.mxu0 0.0
    %806 = vmatpush1.xpose.msra.mxu0 0.0
    %807 = vmatprep.subr.mxu0 0.0
    %808 = vmatpush1.xpose.msra.mxu0 0.0
    %809 = vmatprep.subr.mxu0 0.0
    %810 = vmatpush1.xpose.msra.mxu0 0.0
    %811 = vmatprep.subr.mxu0 0.0
    %812 = vmatpush1.xpose.msra.mxu0 0.0
    %813 = vmatprep.subr.mxu0 0.0
    %814 = vmatpush1.xpose.msra.mxu0 0.0
    %815 = vmatprep.subr.mxu0 0.0
    %816 = vmatpush1.xpose.msra.mxu0 0.0
    %817 = vmatprep.subr.mxu0 0.0
    %818 = vmatpush1.xpose.msra.mxu0 0.0
    %819 = vmatprep.subr.mxu0 0.0
    %820 = vmatpush1.xpose.msra.mxu0 0.0
    %821 = vmatprep.subr.mxu0 0.0
    %822 = vmatpush1.xpose.msra.mxu0 0.0
    %823 = vmatprep.subr.mxu0 0.0
    %824 = vmatpush1.xpose.msra.mxu0 0.0
    %825 = vmatprep.mubr.f32.mxu0 0.0
    %826 = vmatmul.mubr.f32.gmra.mrb[0].mxu0 %v756
    %v827 = vpop.f32.mrb[0].mxu0
    %v828 = vadd.f32 %v370, %v827
    %v829 = vpop.f32.mrb[0].mxu0
    %830 = vdwg.mxu0
    %vm831 = vcmask 64512
    %v832 = vsel %vm831, %v448, -inf
    %833 = vmax.xlane.f32.xlu0 %v832
    %v834 = vpop.xlane.xlu0 %833
    %v835 = vsel %vm831, %v524, -inf
    %836 = vmax.xlane.f32.xlu0 %v835
    %v837 = vpop.xlane.xlu0 %836
    %v838 = vsel %vm831, %v600, -inf
    %839 = vmax.xlane.f32.xlu0 %v838
    %v840 = vpop.xlane.xlu0 %839
    %v841 = vsel %vm831, %v676, -inf
    %842 = vmax.xlane.f32.xlu0 %v841
    %v843 = vpop.xlane.xlu0 %842
    %v844 = vsel %vm831, %v752, -inf
    %845 = vmax.xlane.f32.xlu0 %v844
    %v846 = vpop.xlane.xlu0 %845
    %v847 = vsel %vm831, %v828, -inf
    %848 = vmax.xlane.f32.xlu0 %v847
    %v849 = vpop.xlane.xlu0 %848
    %v850 = vsub.f32 %v448, %v834
    %v851 = vsub.f32 %v524, %v837
    %v852 = vsub.f32 %v600, %v840
    %v853 = vsub.f32 %v676, %v843
    %v854 = vsub.f32 %v752, %v846
    %v855 = vsub.f32 %v828, %v849
    %v856 = vmul.f32 %v850, 1.442695
    %v857 = vpow.pop %v856
    %v858 = vmul.f32 %v851, 1.442695
    %v859 = vpow.pop %v858
    %v860 = vmul.f32 %v852, 1.442695
    %v861 = vpow.pop %v860
    %v862 = vmul.f32 %v853, 1.442695
    %v863 = vpow.pop %v862
    %v864 = vmul.f32 %v854, 1.442695
    %v865 = vpow.pop %v864
    %v866 = vmul.f32 %v855, 1.442695
    %v867 = vpow.pop %v866
    %v868 = vsel %vm831, %v857, 0.0
    %869 = vadd.xlane.f32.xlu0 %v868
    %v870 = vpop.xlane.xlu0 %869
    %v871 = vsel %vm831, %v859, 0.0
    %872 = vadd.xlane.f32.xlu0 %v871
    %v873 = vpop.xlane.xlu0 %872
    %v874 = vsel %vm831, %v861, 0.0
    %875 = vadd.xlane.f32.xlu0 %v874
    %v876 = vpop.xlane.xlu0 %875
    %v877 = vsel %vm831, %v863, 0.0
    %878 = vadd.xlane.f32.xlu0 %v877
    %v879 = vpop.xlane.xlu0 %878
    %v880 = vsel %vm831, %v865, 0.0
    %881 = vadd.xlane.f32.xlu0 %v880
    %v882 = vpop.xlane.xlu0 %881
    %v883 = vsel %vm831, %v867, 0.0
    %884 = vadd.xlane.f32.xlu0 %v883
    %v885 = vpop.xlane.xlu0 %884
    %v886 = vrcp.pop %v870
    %v887 = vrcp.pop %v873
    %v888 = vrcp.pop %v876
    %v889 = vrcp.pop %v879
    %v890 = vrcp.pop %v882
    %v891 = vrcp.pop %v885
    %v892 = vmul.f32 %v857, %v886
    %v893 = vmul.f32 %v859, %v887
    %v894 = vmul.f32 %v861, %v888
    %v895 = vmul.f32 %v863, %v889
    %v896 = vmul.f32 %v865, %v890
    %v897 = vmul.f32 %v867, %v891
    %898 = vrot.lane.b32.xlu0 %v276, 64
    %v899 = vpop.permute.xlu0 %898
    %v902 = vsel %vm831, %v892, 0
    %904 = vmatprep.subr.mxu0 0.0
    %905 = vmatpush1.msra.mxu0 %v899
    %906 = vmatprep.subr.mxu0 0.0
    %907 = vmatpush1.msra.mxu0 0.0
    %908 = vmatprep.subr.mxu0 0.0
    %909 = vmatpush1.msra.mxu0 0.0
    %910 = vmatprep.subr.mxu0 0.0
    %911 = vmatpush1.msra.mxu0 0.0
    %912 = vmatprep.subr.mxu0 0.0
    %913 = vmatpush1.msra.mxu0 0.0
    %914 = vmatprep.subr.mxu0 0.0
    %915 = vmatpush1.msra.mxu0 0.0
    %916 = vmatprep.subr.mxu0 0.0
    %917 = vmatpush1.msra.mxu0 0.0
    %918 = vmatprep.subr.mxu0 0.0
    %919 = vmatpush1.msra.mxu0 0.0
    %920 = vmatprep.subr.mxu0 0.0
    %921 = vmatpush1.msra.mxu0 0.0
    %922 = vmatprep.subr.mxu0 0.0
    %923 = vmatpush1.msra.mxu0 0.0
    %924 = vmatprep.subr.mxu0 0.0
    %925 = vmatpush1.msra.mxu0 0.0
    %926 = vmatprep.subr.mxu0 0.0
    %927 = vmatpush1.msra.mxu0 0.0
    %928 = vmatprep.subr.mxu0 0.0
    %929 = vmatpush1.msra.mxu0 0.0
    %930 = vmatprep.subr.mxu0 0.0
    %931 = vmatpush1.msra.mxu0 0.0
    %932 = vmatprep.subr.mxu0 0.0
    %933 = vmatpush1.msra.mxu0 0.0
    %934 = vmatprep.subr.mxu0 0.0
    %935 = vmatpush1.msra.mxu0 0.0
    %936 = vmatprep.subr.mxu0 0.0
    %937 = vmatpush1.msra.mxu0 0.0
    %938 = vmatprep.subr.mxu0 0.0
    %939 = vmatpush1.msra.mxu0 0.0
    %940 = vmatprep.subr.mxu0 0.0
    %941 = vmatpush1.msra.mxu0 0.0
    %942 = vmatprep.subr.mxu0 0.0
    %943 = vmatpush1.msra.mxu0 0.0
    %944 = vmatprep.subr.mxu0 0.0
    %945 = vmatpush1.msra.mxu0 0.0
    %946 = vmatprep.subr.mxu0 0.0
    %947 = vmatpush1.msra.mxu0 0.0
    %948 = vmatprep.subr.mxu0 0.0
    %949 = vmatpush1.msra.mxu0 0.0
    %950 = vmatprep.subr.mxu0 0.0
    %951 = vmatpush1.msra.mxu0 0.0
    %952 = vmatprep.subr.mxu0 0.0
    %953 = vmatpush1.msra.mxu0 0.0
    %954 = vmatprep.subr.mxu0 0.0
    %955 = vmatpush1.msra.mxu0 0.0
    %956 = vmatprep.subr.mxu0 0.0
    %957 = vmatpush1.msra.mxu0 0.0
    %958 = vmatprep.subr.mxu0 0.0
    %959 = vmatpush1.msra.mxu0 0.0
    %960 = vmatprep.subr.mxu0 0.0
    %961 = vmatpush1.msra.mxu0 0.0
    %962 = vmatprep.subr.mxu0 0.0
    %963 = vmatpush1.msra.mxu0 0.0
    %964 = vmatprep.subr.mxu0 0.0
    %965 = vmatpush1.msra.mxu0 0.0
    %966 = vmatprep.subr.mxu0 0.0
    %967 = vmatpush1.msra.mxu0 0.0
    %968 = vmatprep.mubr.f32.mxu0 0.0
    %969 = vmatmul.mubr.f32.gmra.mrb[0].mxu0 %v902
    %v970 = vpop.f32.mrb[0].mxu0
    %v971 = vadd.f32 0.0, %v970
    %v972 = vpop.f32.mrb[0].mxu0
    %973 = vdwg.mxu0
    %974 = vrot.lane.b32.xlu0 %v281, 64
    %v975 = vpop.permute.xlu0 %974
    %v978 = vsel %vm831, %v893, 0
    %980 = vmatprep.subr.mxu0 0.0
    %981 = vmatpush1.msra.mxu0 %v975
    %982 = vmatprep.subr.mxu0 0.0
    %983 = vmatpush1.msra.mxu0 0.0
    %984 = vmatprep.subr.mxu0 0.0
    %985 = vmatpush1.msra.mxu0 0.0
    %986 = vmatprep.subr.mxu0 0.0
    %987 = vmatpush1.msra.mxu0 0.0
    %988 = vmatprep.subr.mxu0 0.0
    %989 = vmatpush1.msra.mxu0 0.0
    %990 = vmatprep.subr.mxu0 0.0
    %991 = vmatpush1.msra.mxu0 0.0
    %992 = vmatprep.subr.mxu0 0.0
    %993 = vmatpush1.msra.mxu0 0.0
    %994 = vmatprep.subr.mxu0 0.0
    %995 = vmatpush1.msra.mxu0 0.0
    %996 = vmatprep.subr.mxu0 0.0
    %997 = vmatpush1.msra.mxu0 0.0
    %998 = vmatprep.subr.mxu0 0.0
    %999 = vmatpush1.msra.mxu0 0.0
    %1000 = vmatprep.subr.mxu0 0.0
    %1001 = vmatpush1.msra.mxu0 0.0
    %1002 = vmatprep.subr.mxu0 0.0
    %1003 = vmatpush1.msra.mxu0 0.0
    %1004 = vmatprep.subr.mxu0 0.0
    %1005 = vmatpush1.msra.mxu0 0.0
    %1006 = vmatprep.subr.mxu0 0.0
    %1007 = vmatpush1.msra.mxu0 0.0
    %1008 = vmatprep.subr.mxu0 0.0
    %1009 = vmatpush1.msra.mxu0 0.0
    %1010 = vmatprep.subr.mxu0 0.0
    %1011 = vmatpush1.msra.mxu0 0.0
    %1012 = vmatprep.subr.mxu0 0.0
    %1013 = vmatpush1.msra.mxu0 0.0
    %1014 = vmatprep.subr.mxu0 0.0
    %1015 = vmatpush1.msra.mxu0 0.0
    %1016 = vmatprep.subr.mxu0 0.0
    %1017 = vmatpush1.msra.mxu0 0.0
    %1018 = vmatprep.subr.mxu0 0.0
    %1019 = vmatpush1.msra.mxu0 0.0
    %1020 = vmatprep.subr.mxu0 0.0
    %1021 = vmatpush1.msra.mxu0 0.0
    %1022 = vmatprep.subr.mxu0 0.0
    %1023 = vmatpush1.msra.mxu0 0.0
    %1024 = vmatprep.subr.mxu0 0.0
    %1025 = vmatpush1.msra.mxu0 0.0
    %1026 = vmatprep.subr.mxu0 0.0
    %1027 = vmatpush1.msra.mxu0 0.0
    %1028 = vmatprep.subr.mxu0 0.0
    %1029 = vmatpush1.msra.mxu0 0.0
    %1030 = vmatprep.subr.mxu0 0.0
    %1031 = vmatpush1.msra.mxu0 0.0
    %1032 = vmatprep.subr.mxu0 0.0
    %1033 = vmatpush1.msra.mxu0 0.0
    %1034 = vmatprep.subr.mxu0 0.0
    %1035 = vmatpush1.msra.mxu0 0.0
    %1036 = vmatprep.subr.mxu0 0.0
    %1037 = vmatpush1.msra.mxu0 0.0
    %1038 = vmatprep.subr.mxu0 0.0
    %1039 = vmatpush1.msra.mxu0 0.0
    %1040 = vmatprep.subr.mxu0 0.0
    %1041 = vmatpush1.msra.mxu0 0.0
    %1042 = vmatprep.subr.mxu0 0.0
    %1043 = vmatpush1.msra.mxu0 0.0
    %1044 = vmatprep.mubr.f32.mxu0 0.0
    %1045 = vmatmul.mubr.f32.gmra.mrb[0].mxu0 %v978
    %v1046 = vpop.f32.mrb[0].mxu0
    %v1047 = vadd.f32 0.0, %v1046
    %v1048 = vpop.f32.mrb[0].mxu0
    %1049 = vdwg.mxu0
    %1050 = vrot.lane.b32.xlu0 %v286, 64
    %v1051 = vpop.permute.xlu0 %1050
    %v1054 = vsel %vm831, %v894, 0
    %1056 = vmatprep.subr.mxu0 0.0
    %1057 = vmatpush1.msra.mxu0 %v1051
    %1058 = vmatprep.subr.mxu0 0.0
    %1059 = vmatpush1.msra.mxu0 0.0
    %1060 = vmatprep.subr.mxu0 0.0
    %1061 = vmatpush1.msra.mxu0 0.0
    %1062 = vmatprep.subr.mxu0 0.0
    %1063 = vmatpush1.msra.mxu0 0.0
    %1064 = vmatprep.subr.mxu0 0.0
    %1065 = vmatpush1.msra.mxu0 0.0
    %1066 = vmatprep.subr.mxu0 0.0
    %1067 = vmatpush1.msra.mxu0 0.0
    %1068 = vmatprep.subr.mxu0 0.0
    %1069 = vmatpush1.msra.mxu0 0.0
    %1070 = vmatprep.subr.mxu0 0.0
    %1071 = vmatpush1.msra.mxu0 0.0
    %1072 = vmatprep.subr.mxu0 0.0
    %1073 = vmatpush1.msra.mxu0 0.0
    %1074 = vmatprep.subr.mxu0 0.0
    %1075 = vmatpush1.msra.mxu0 0.0
    %1076 = vmatprep.subr.mxu0 0.0
    %1077 = vmatpush1.msra.mxu0 0.0
    %1078 = vmatprep.subr.mxu0 0.0
    %1079 = vmatpush1.msra.mxu0 0.0
    %1080 = vmatprep.subr.mxu0 0.0
    %1081 = vmatpush1.msra.mxu0 0.0
    %1082 = vmatprep.subr.mxu0 0.0
    %1083 = vmatpush1.msra.mxu0 0.0
    %1084 = vmatprep.subr.mxu0 0.0
    %1085 = vmatpush1.msra.mxu0 0.0
    %1086 = vmatprep.subr.mxu0 0.0
    %1087 = vmatpush1.msra.mxu0 0.0
    %1088 = vmatprep.subr.mxu0 0.0
    %1089 = vmatpush1.msra.mxu0 0.0
    %1090 = vmatprep.subr.mxu0 0.0
    %1091 = vmatpush1.msra.mxu0 0.0
    %1092 = vmatprep.subr.mxu0 0.0
    %1093 = vmatpush1.msra.mxu0 0.0
    %1094 = vmatprep.subr.mxu0 0.0
    %1095 = vmatpush1.msra.mxu0 0.0
    %1096 = vmatprep.subr.mxu0 0.0
    %1097 = vmatpush1.msra.mxu0 0.0
    %1098 = vmatprep.subr.mxu0 0.0
    %1099 = vmatpush1.msra.mxu0 0.0
    %1100 = vmatprep.subr.mxu0 0.0
    %1101 = vmatpush1.msra.mxu0 0.0
    %1102 = vmatprep.subr.mxu0 0.0
    %1103 = vmatpush1.msra.mxu0 0.0
    %1104 = vmatprep.subr.mxu0 0.0
    %1105 = vmatpush1.msra.mxu0 0.0
    %1106 = vmatprep.subr.mxu0 0.0
    %1107 = vmatpush1.msra.mxu0 0.0
    %1108 = vmatprep.subr.mxu0 0.0
    %1109 = vmatpush1.msra.mxu0 0.0
    %1110 = vmatprep.subr.mxu0 0.0
    %1111 = vmatpush1.msra.mxu0 0.0
    %1112 = vmatprep.subr.mxu0 0.0
    %1113 = vmatpush1.msra.mxu0 0.0
    %1114 = vmatprep.subr.mxu0 0.0
    %1115 = vmatpush1.msra.mxu0 0.0
    %1116 = vmatprep.subr.mxu0 0.0
    %1117 = vmatpush1.msra.mxu0 0.0
    %1118 = vmatprep.subr.mxu0 0.0
    %1119 = vmatpush1.msra.mxu0 0.0
    %1120 = vmatprep.mubr.f32.mxu0 0.0
    %1121 = vmatmul.mubr.f32.gmra.mrb[0].mxu0 %v1054
    %v1122 = vpop.f32.mrb[0].mxu0
    %v1123 = vadd.f32 0.0, %v1122
    %v1124 = vpop.f32.mrb[0].mxu0
    %1125 = vdwg.mxu0
    %1126 = vrot.lane.b32.xlu0 %v291, 64
    %v1127 = vpop.permute.xlu0 %1126
    %v1130 = vsel %vm831, %v895, 0
    %1132 = vmatprep.subr.mxu0 0.0
    %1133 = vmatpush1.msra.mxu0 %v1127
    %1134 = vmatprep.subr.mxu0 0.0
    %1135 = vmatpush1.msra.mxu0 0.0
    %1136 = vmatprep.subr.mxu0 0.0
    %1137 = vmatpush1.msra.mxu0 0.0
    %1138 = vmatprep.subr.mxu0 0.0
    %1139 = vmatpush1.msra.mxu0 0.0
    %1140 = vmatprep.subr.mxu0 0.0
    %1141 = vmatpush1.msra.mxu0 0.0
    %1142 = vmatprep.subr.mxu0 0.0
    %1143 = vmatpush1.msra.mxu0 0.0
    %1144 = vmatprep.subr.mxu0 0.0
    %1145 = vmatpush1.msra.mxu0 0.0
    %1146 = vmatprep.subr.mxu0 0.0
    %1147 = vmatpush1.msra.mxu0 0.0
    %1148 = vmatprep.subr.mxu0 0.0
    %1149 = vmatpush1.msra.mxu0 0.0
    %1150 = vmatprep.subr.mxu0 0.0
    %1151 = vmatpush1.msra.mxu0 0.0
    %1152 = vmatprep.subr.mxu0 0.0
    %1153 = vmatpush1.msra.mxu0 0.0
    %1154 = vmatprep.subr.mxu0 0.0
    %1155 = vmatpush1.msra.mxu0 0.0
    %1156 = vmatprep.subr.mxu0 0.0
    %1157 = vmatpush1.msra.mxu0 0.0
    %1158 = vmatprep.subr.mxu0 0.0
    %1159 = vmatpush1.msra.mxu0 0.0
    %1160 = vmatprep.subr.mxu0 0.0
    %1161 = vmatpush1.msra.mxu0 0.0
    %1162 = vmatprep.subr.mxu0 0.0
    %1163 = vmatpush1.msra.mxu0 0.0
    %1164 = vmatprep.subr.mxu0 0.0
    %1165 = vmatpush1.msra.mxu0 0.0
    %1166 = vmatprep.subr.mxu0 0.0
    %1167 = vmatpush1.msra.mxu0 0.0
    %1168 = vmatprep.subr.mxu0 0.0
    %1169 = vmatpush1.msra.mxu0 0.0
    %1170 = vmatprep.subr.mxu0 0.0
    %1171 = vmatpush1.msra.mxu0 0.0
    %1172 = vmatprep.subr.mxu0 0.0
    %1173 = vmatpush1.msra.mxu0 0.0
    %1174 = vmatprep.subr.mxu0 0.0
    %1175 = vmatpush1.msra.mxu0 0.0
    %1176 = vmatprep.subr.mxu0 0.0
    %1177 = vmatpush1.msra.mxu0 0.0
    %1178 = vmatprep.subr.mxu0 0.0
    %1179 = vmatpush1.msra.mxu0 0.0
    %1180 = vmatprep.subr.mxu0 0.0
    %1181 = vmatpush1.msra.mxu0 0.0
    %1182 = vmatprep.subr.mxu0 0.0
    %1183 = vmatpush1.msra.mxu0 0.0
    %1184 = vmatprep.subr.mxu0 0.0
    %1185 = vmatpush1.msra.mxu0 0.0
    %1186 = vmatprep.subr.mxu0 0.0
    %1187 = vmatpush1.msra.mxu0 0.0
    %1188 = vmatprep.subr.mxu0 0.0
    %1189 = vmatpush1.msra.mxu0 0.0
    %1190 = vmatprep.subr.mxu0 0.0
    %1191 = vmatpush1.msra.mxu0 0.0
    %1192 = vmatprep.subr.mxu0 0.0
    %1193 = vmatpush1.msra.mxu0 0.0
    %1194 = vmatprep.subr.mxu0 0.0
    %1195 = vmatpush1.msra.mxu0 0.0
    %1196 = vmatprep.mubr.f32.mxu0 0.0
    %1197 = vmatmul.mubr.f32.gmra.mrb[0].mxu0 %v1130
    %v1198 = vpop.f32.mrb[0].mxu0
    %v1199 = vadd.f32 0.0, %v1198
    %v1200 = vpop.f32.mrb[0].mxu0
    %1201 = vdwg.mxu0
    %1202 = vrot.lane.b32.xlu0 %v296, 64
    %v1203 = vpop.permute.xlu0 %1202
    %v1206 = vsel %vm831, %v896, 0
    %1208 = vmatprep.subr.mxu0 0.0
    %1209 = vmatpush1.msra.mxu0 %v1203
    %1210 = vmatprep.subr.mxu0 0.0
    %1211 = vmatpush1.msra.mxu0 0.0
    %1212 = vmatprep.subr.mxu0 0.0
    %1213 = vmatpush1.msra.mxu0 0.0
    %1214 = vmatprep.subr.mxu0 0.0
    %1215 = vmatpush1.msra.mxu0 0.0
    %1216 = vmatprep.subr.mxu0 0.0
    %1217 = vmatpush1.msra.mxu0 0.0
    %1218 = vmatprep.subr.mxu0 0.0
    %1219 = vmatpush1.msra.mxu0 0.0
    %1220 = vmatprep.subr.mxu0 0.0
    %1221 = vmatpush1.msra.mxu0 0.0
    %1222 = vmatprep.subr.mxu0 0.0
    %1223 = vmatpush1.msra.mxu0 0.0
    %1224 = vmatprep.subr.mxu0 0.0
    %1225 = vmatpush1.msra.mxu0 0.0
    %1226 = vmatprep.subr.mxu0 0.0
    %1227 = vmatpush1.msra.mxu0 0.0
    %1228 = vmatprep.subr.mxu0 0.0
    %1229 = vmatpush1.msra.mxu0 0.0
    %1230 = vmatprep.subr.mxu0 0.0
    %1231 = vmatpush1.msra.mxu0 0.0
    %1232 = vmatprep.subr.mxu0 0.0
    %1233 = vmatpush1.msra.mxu0 0.0
    %1234 = vmatprep.subr.mxu0 0.0
    %1235 = vmatpush1.msra.mxu0 0.0
    %1236 = vmatprep.subr.mxu0 0.0
    %1237 = vmatpush1.msra.mxu0 0.0
    %1238 = vmatprep.subr.mxu0 0.0
    %1239 = vmatpush1.msra.mxu0 0.0
    %1240 = vmatprep.subr.mxu0 0.0
    %1241 = vmatpush1.msra.mxu0 0.0
    %1242 = vmatprep.subr.mxu0 0.0
    %1243 = vmatpush1.msra.mxu0 0.0
    %1244 = vmatprep.subr.mxu0 0.0
    %1245 = vmatpush1.msra.mxu0 0.0
    %1246 = vmatprep.subr.mxu0 0.0
    %1247 = vmatpush1.msra.mxu0 0.0
    %1248 = vmatprep.subr.mxu0 0.0
    %1249 = vmatpush1.msra.mxu0 0.0
    %1250 = vmatprep.subr.mxu0 0.0
    %1251 = vmatpush1.msra.mxu0 0.0
    %1252 = vmatprep.subr.mxu0 0.0
    %1253 = vmatpush1.msra.mxu0 0.0
    %1254 = vmatprep.subr.mxu0 0.0
    %1255 = vmatpush1.msra.mxu0 0.0
    %1256 = vmatprep.subr.mxu0 0.0
    %1257 = vmatpush1.msra.mxu0 0.0
    %1258 = vmatprep.subr.mxu0 0.0
    %1259 = vmatpush1.msra.mxu0 0.0
    %1260 = vmatprep.subr.mxu0 0.0
    %1261 = vmatpush1.msra.mxu0 0.0
    %1262 = vmatprep.subr.mxu0 0.0
    %1263 = vmatpush1.msra.mxu0 0.0
    %1264 = vmatprep.subr.mxu0 0.0
    %1265 = vmatpush1.msra.mxu0 0.0
    %1266 = vmatprep.subr.mxu0 0.0
    %1267 = vmatpush1.msra.mxu0 0.0
    %1268 = vmatprep.subr.mxu0 0.0
    %1269 = vmatpush1.msra.mxu0 0.0
    %1270 = vmatprep.subr.mxu0 0.0
    %1271 = vmatpush1.msra.mxu0 0.0
    %1272 = vmatprep.mubr.f32.mxu0 0.0
    %1273 = vmatmul.mubr.f32.gmra.mrb[0].mxu0 %v1206
    %v1274 = vpop.f32.mrb[0].mxu0
    %v1275 = vadd.f32 0.0, %v1274
    %v1276 = vpop.f32.mrb[0].mxu0
    %1277 = vdwg.mxu0
    %1278 = vrot.lane.b32.xlu0 %v301, 64
    %v1279 = vpop.permute.xlu0 %1278
    %v1282 = vsel %vm831, %v897, 0
    %1284 = vmatprep.subr.mxu0 0.0
    %1285 = vmatpush1.msra.mxu0 %v1279
    %1286 = vmatprep.subr.mxu0 0.0
    %1287 = vmatpush1.msra.mxu0 0.0
    %1288 = vmatprep.subr.mxu0 0.0
    %1289 = vmatpush1.msra.mxu0 0.0
    %1290 = vmatprep.subr.mxu0 0.0
    %1291 = vmatpush1.msra.mxu0 0.0
    %1292 = vmatprep.subr.mxu0 0.0
    %1293 = vmatpush1.msra.mxu0 0.0
    %1294 = vmatprep.subr.mxu0 0.0
    %1295 = vmatpush1.msra.mxu0 0.0
    %1296 = vmatprep.subr.mxu0 0.0
    %1297 = vmatpush1.msra.mxu0 0.0
    %1298 = vmatprep.subr.mxu0 0.0
    %1299 = vmatpush1.msra.mxu0 0.0
    %1300 = vmatprep.subr.mxu0 0.0
    %1301 = vmatpush1.msra.mxu0 0.0
    %1302 = vmatprep.subr.mxu0 0.0
    %1303 = vmatpush1.msra.mxu0 0.0
    %1304 = vmatprep.subr.mxu0 0.0
    %1305 = vmatpush1.msra.mxu0 0.0
    %1306 = vmatprep.subr.mxu0 0.0
    %1307 = vmatpush1.msra.mxu0 0.0
    %1308 = vmatprep.subr.mxu0 0.0
    %1309 = vmatpush1.msra.mxu0 0.0
    %1310 = vmatprep.subr.mxu0 0.0
    %1311 = vmatpush1.msra.mxu0 0.0
    %1312 = vmatprep.subr.mxu0 0.0
    %1313 = vmatpush1.msra.mxu0 0.0
    %1314 = vmatprep.subr.mxu0 0.0
    %1315 = vmatpush1.msra.mxu0 0.0
    %1316 = vmatprep.subr.mxu0 0.0
    %1317 = vmatpush1.msra.mxu0 0.0
    %1318 = vmatprep.subr.mxu0 0.0
    %1319 = vmatpush1.msra.mxu0 0.0
    %1320 = vmatprep.subr.mxu0 0.0
    %1321 = vmatpush1.msra.mxu0 0.0
    %1322 = vmatprep.subr.mxu0 0.0
    %1323 = vmatpush1.msra.mxu0 0.0
    %1324 = vmatprep.subr.mxu0 0.0
    %1325 = vmatpush1.msra.mxu0 0.0
    %1326 = vmatprep.subr.mxu0 0.0
    %1327 = vmatpush1.msra.mxu0 0.0
    %1328 = vmatprep.subr.mxu0 0.0
    %1329 = vmatpush1.msra.mxu0 0.0
    %1330 = vmatprep.subr.mxu0 0.0
    %1331 = vmatpush1.msra.mxu0 0.0
    %1332 = vmatprep.subr.mxu0 0.0
    %1333 = vmatpush1.msra.mxu0 0.0
    %1334 = vmatprep.subr.mxu0 0.0
    %1335 = vmatpush1.msra.mxu0 0.0
    %1336 = vmatprep.subr.mxu0 0.0
    %1337 = vmatpush1.msra.mxu0 0.0
    %1338 = vmatprep.subr.mxu0 0.0
    %1339 = vmatpush1.msra.mxu0 0.0
    %1340 = vmatprep.subr.mxu0 0.0
    %1341 = vmatpush1.msra.mxu0 0.0
    %1342 = vmatprep.subr.mxu0 0.0
    %1343 = vmatpush1.msra.mxu0 0.0
    %1344 = vmatprep.subr.mxu0 0.0
    %1345 = vmatpush1.msra.mxu0 0.0
    %1346 = vmatprep.subr.mxu0 0.0
    %1347 = vmatpush1.msra.mxu0 0.0
    %1348 = vmatprep.mubr.f32.mxu0 0.0
    %1349 = vmatmul.mubr.f32.gmra.mrb[0].mxu0 %v1282
    %v1350 = vpop.f32.mrb[0].mxu0
    %v1351 = vadd.f32 0.0, %v1350
    %v1352 = vpop.f32.mrb[0].mxu0
    %1353 = vdwg.mxu0
    %v1354 = vld [vmem:[%s5] sm:$0xff]
    %v1355 = vld [vmem:[%s5 + $0x8] sm:$0xff]
    %1356 = vrot.lane.b32.xlu0 %v130, 112
    %v1357 = vpop.permute.xlu0 %1356
    %1358 = vrot.lane.b32.xlu0 %v276, 112
    %v1359 = vpop.permute.xlu0 %1358
    %v1360 = vsel %vm374, %v1357, 0
    %v1362 = vsel %vm374, %v1359, 0
    %1364 = vmatprep.subr.mxu0 0.0
    %1365 = vmatpush1.xpose.msra.mxu0 %v1362
    %1366 = vmatprep.subr.mxu0 0.0
    %1367 = vmatpush1.xpose.msra.mxu0 0.0
    %1368 = vmatprep.subr.mxu0 0.0
    %1369 = vmatpush1.xpose.msra.mxu0 0.0
    %1370 = vmatprep.subr.mxu0 0.0
    %1371 = vmatpush1.xpose.msra.mxu0 0.0
    %1372 = vmatprep.subr.mxu0 0.0
    %1373 = vmatpush1.xpose.msra.mxu0 0.0
    %1374 = vmatprep.subr.mxu0 0.0
    %1375 = vmatpush1.xpose.msra.mxu0 0.0
    %1376 = vmatprep.subr.mxu0 0.0
    %1377 = vmatpush1.xpose.msra.mxu0 0.0
    %1378 = vmatprep.subr.mxu0 0.0
    %1379 = vmatpush1.xpose.msra.mxu0 0.0
    %1380 = vmatprep.subr.mxu0 0.0
    %1381 = vmatpush1.xpose.msra.mxu0 0.0
    %1382 = vmatprep.subr.mxu0 0.0
    %1383 = vmatpush1.xpose.msra.mxu0 0.0
    %1384 = vmatprep.subr.mxu0 0.0
    %1385 = vmatpush1.xpose.msra.mxu0 0.0
    %1386 = vmatprep.subr.mxu0 0.0
    %1387 = vmatpush1.xpose.msra.mxu0 0.0
    %1388 = vmatprep.subr.mxu0 0.0
    %1389 = vmatpush1.xpose.msra.mxu0 0.0
    %1390 = vmatprep.subr.mxu0 0.0
    %1391 = vmatpush1.xpose.msra.mxu0 0.0
    %1392 = vmatprep.subr.mxu0 0.0
    %1393 = vmatpush1.xpose.msra.mxu0 0.0
    %1394 = vmatprep.subr.mxu0 0.0
    %1395 = vmatpush1.xpose.msra.mxu0 0.0
    %1396 = vmatprep.subr.mxu0 0.0
    %1397 = vmatpush1.xpose.msra.mxu0 0.0
    %1398 = vmatprep.subr.mxu0 0.0
    %1399 = vmatpush1.xpose.msra.mxu0 0.0
    %1400 = vmatprep.subr.mxu0 0.0
    %1401 = vmatpush1.xpose.msra.mxu0 0.0
    %1402 = vmatprep.subr.mxu0 0.0
    %1403 = vmatpush1.xpose.msra.mxu0 0.0
    %1404 = vmatprep.subr.mxu0 0.0
    %1405 = vmatpush1.xpose.msra.mxu0 0.0
    %1406 = vmatprep.subr.mxu0 0.0
    %1407 = vmatpush1.xpose.msra.mxu0 0.0
    %1408 = vmatprep.subr.mxu0 0.0
    %1409 = vmatpush1.xpose.msra.mxu0 0.0
    %1410 = vmatprep.subr.mxu0 0.0
    %1411 = vmatpush1.xpose.msra.mxu0 0.0
    %1412 = vmatprep.subr.mxu0 0.0
    %1413 = vmatpush1.xpose.msra.mxu0 0.0
    %1414 = vmatprep.subr.mxu0 0.0
    %1415 = vmatpush1.xpose.msra.mxu0 0.0
    %1416 = vmatprep.subr.mxu0 0.0
    %1417 = vmatpush1.xpose.msra.mxu0 0.0
    %1418 = vmatprep.subr.mxu0 0.0
    %1419 = vmatpush1.xpose.msra.mxu0 0.0
    %1420 = vmatprep.subr.mxu0 0.0
    %1421 = vmatpush1.xpose.msra.mxu0 0.0
    %1422 = vmatprep.subr.mxu0 0.0
    %1423 = vmatpush1.xpose.msra.mxu0 0.0
    %1424 = vmatprep.subr.mxu0 0.0
    %1425 = vmatpush1.xpose.msra.mxu0 0.0
    %1426 = vmatprep.subr.mxu0 0.0
    %1427 = vmatpush1.xpose.msra.mxu0 0.0
    %1428 = vmatprep.mubr.f32.mxu0 0.0
    %1429 = vmatmul.mubr.f32.gmra.mrb[0].mxu0 %v1360
    %v1430 = vpop.f32.mrb[0].mxu0
    %v1431 = vadd.f32 %v351, %v1430
    %v1432 = vpop.f32.mrb[0].mxu0
    %1433 = vdwg.mxu0
    %1434 = vrot.lane.b32.xlu0 %v135, 112
    %v1435 = vpop.permute.xlu0 %1434
    %1436 = vrot.lane.b32.xlu0 %v281, 112
    %v1437 = vpop.permute.xlu0 %1436
    %v1438 = vsel %vm374, %v1435, 0
    %v1440 = vsel %vm374, %v1437, 0
    %1442 = vmatprep.subr.mxu0 0.0
    %1443 = vmatpush1.xpose.msra.mxu0 %v1440
    %1444 = vmatprep.subr.mxu0 0.0
    %1445 = vmatpush1.xpose.msra.mxu0 0.0
    %1446 = vmatprep.subr.mxu0 0.0
    %1447 = vmatpush1.xpose.msra.mxu0 0.0
    %1448 = vmatprep.subr.mxu0 0.0
    %1449 = vmatpush1.xpose.msra.mxu0 0.0
    %1450 = vmatprep.subr.mxu0 0.0
    %1451 = vmatpush1.xpose.msra.mxu0 0.0
    %1452 = vmatprep.subr.mxu0 0.0
    %1453 = vmatpush1.xpose.msra.mxu0 0.0
    %1454 = vmatprep.subr.mxu0 0.0
    %1455 = vmatpush1.xpose.msra.mxu0 0.0
    %1456 = vmatprep.subr.mxu0 0.0
    %1457 = vmatpush1.xpose.msra.mxu0 0.0
    %1458 = vmatprep.subr.mxu0 0.0
    %1459 = vmatpush1.xpose.msra.mxu0 0.0
    %1460 = vmatprep.subr.mxu0 0.0
    %1461 = vmatpush1.xpose.msra.mxu0 0.0
    %1462 = vmatprep.subr.mxu0 0.0
    %1463 = vmatpush1.xpose.msra.mxu0 0.0
    %1464 = vmatprep.subr.mxu0 0.0
    %1465 = vmatpush1.xpose.msra.mxu0 0.0
    %1466 = vmatprep.subr.mxu0 0.0
    %1467 = vmatpush1.xpose.msra.mxu0 0.0
    %1468 = vmatprep.subr.mxu0 0.0
    %1469 = vmatpush1.xpose.msra.mxu0 0.0
    %1470 = vmatprep.subr.mxu0 0.0
    %1471 = vmatpush1.xpose.msra.mxu0 0.0
    %1472 = vmatprep.subr.mxu0 0.0
    %1473 = vmatpush1.xpose.msra.mxu0 0.0
    %1474 = vmatprep.subr.mxu0 0.0
    %1475 = vmatpush1.xpose.msra.mxu0 0.0
    %1476 = vmatprep.subr.mxu0 0.0
    %1477 = vmatpush1.xpose.msra.mxu0 0.0
    %1478 = vmatprep.subr.mxu0 0.0
    %1479 = vmatpush1.xpose.msra.mxu0 0.0
    %1480 = vmatprep.subr.mxu0 0.0
    %1481 = vmatpush1.xpose.msra.mxu0 0.0
    %1482 = vmatprep.subr.mxu0 0.0
    %1483 = vmatpush1.xpose.msra.mxu0 0.0
    %1484 = vmatprep.subr.mxu0 0.0
    %1485 = vmatpush1.xpose.msra.mxu0 0.0
    %1486 = vmatprep.subr.mxu0 0.0
    %1487 = vmatpush1.xpose.msra.mxu0 0.0
    %1488 = vmatprep.subr.mxu0 0.0
    %1489 = vmatpush1.xpose.msra.mxu0 0.0
    %1490 = vmatprep.subr.mxu0 0.0
    %1491 = vmatpush1.xpose.msra.mxu0 0.0
    %1492 = vmatprep.subr.mxu0 0.0
    %1493 = vmatpush1.xpose.msra.mxu0 0.0
    %1494 = vmatprep.subr.mxu0 0.0
    %1495 = vmatpush1.xpose.msra.mxu0 0.0
    %1496 = vmatprep.subr.mxu0 0.0
    %1497 = vmatpush1.xpose.msra.mxu0 0.0
    %1498 = vmatprep.subr.mxu0 0.0
    %1499 = vmatpush1.xpose.msra.mxu0 0.0
    %1500 = vmatprep.subr.mxu0 0.0
    %1501 = vmatpush1.xpose.msra.mxu0 0.0
    %1502 = vmatprep.subr.mxu0 0.0
    %1503 = vmatpush1.xpose.msra.mxu0 0.0
    %1504 = vmatprep.subr.mxu0 0.0
    %1505 = vmatpush1.xpose.msra.mxu0 0.0
    %1506 = vmatprep.mubr.f32.mxu0 0.0
    %1507 = vmatmul.mubr.f32.gmra.mrb[0].mxu0 %v1438
    %v1508 = vpop.f32.mrb[0].mxu0
    %v1509 = vadd.f32 %v355, %v1508
    %v1510 = vpop.f32.mrb[0].mxu0
    %1511 = vdwg.mxu0
    %1512 = vrot.lane.b32.xlu0 %v140, 112
    %v1513 = vpop.permute.xlu0 %1512
    %1514 = vrot.lane.b32.xlu0 %v286, 112
    %v1515 = vpop.permute.xlu0 %1514
    %v1516 = vsel %vm374, %v1513, 0
    %v1518 = vsel %vm374, %v1515, 0
    %1520 = vmatprep.subr.mxu0 0.0
    %1521 = vmatpush1.xpose.msra.mxu0 %v1518
    %1522 = vmatprep.subr.mxu0 0.0
    %1523 = vmatpush1.xpose.msra.mxu0 0.0
    %1524 = vmatprep.subr.mxu0 0.0
    %1525 = vmatpush1.xpose.msra.mxu0 0.0
    %1526 = vmatprep.subr.mxu0 0.0
    %1527 = vmatpush1.xpose.msra.mxu0 0.0
    %1528 = vmatprep.subr.mxu0 0.0
    %1529 = vmatpush1.xpose.msra.mxu0 0.0
    %1530 = vmatprep.subr.mxu0 0.0
    %1531 = vmatpush1.xpose.msra.mxu0 0.0
    %1532 = vmatprep.subr.mxu0 0.0
    %1533 = vmatpush1.xpose.msra.mxu0 0.0
    %1534 = vmatprep.subr.mxu0 0.0
    %1535 = vmatpush1.xpose.msra.mxu0 0.0
    %1536 = vmatprep.subr.mxu0 0.0
    %1537 = vmatpush1.xpose.msra.mxu0 0.0
    %1538 = vmatprep.subr.mxu0 0.0
    %1539 = vmatpush1.xpose.msra.mxu0 0.0
    %1540 = vmatprep.subr.mxu0 0.0
    %1541 = vmatpush1.xpose.msra.mxu0 0.0
    %1542 = vmatprep.subr.mxu0 0.0
    %1543 = vmatpush1.xpose.msra.mxu0 0.0
    %1544 = vmatprep.subr.mxu0 0.0
    %1545 = vmatpush1.xpose.msra.mxu0 0.0
    %1546 = vmatprep.subr.mxu0 0.0
    %1547 = vmatpush1.xpose.msra.mxu0 0.0
    %1548 = vmatprep.subr.mxu0 0.0
    %1549 = vmatpush1.xpose.msra.mxu0 0.0
    %1550 = vmatprep.subr.mxu0 0.0
    %1551 = vmatpush1.xpose.msra.mxu0 0.0
    %1552 = vmatprep.subr.mxu0 0.0
    %1553 = vmatpush1.xpose.msra.mxu0 0.0
    %1554 = vmatprep.subr.mxu0 0.0
    %1555 = vmatpush1.xpose.msra.mxu0 0.0
    %1556 = vmatprep.subr.mxu0 0.0
    %1557 = vmatpush1.xpose.msra.mxu0 0.0
    %1558 = vmatprep.subr.mxu0 0.0
    %1559 = vmatpush1.xpose.msra.mxu0 0.0
    %1560 = vmatprep.subr.mxu0 0.0
    %1561 = vmatpush1.xpose.msra.mxu0 0.0
    %1562 = vmatprep.subr.mxu0 0.0
    %1563 = vmatpush1.xpose.msra.mxu0 0.0
    %1564 = vmatprep.subr.mxu0 0.0
    %1565 = vmatpush1.xpose.msra.mxu0 0.0
    %1566 = vmatprep.subr.mxu0 0.0
    %1567 = vmatpush1.xpose.msra.mxu0 0.0
    %1568 = vmatprep.subr.mxu0 0.0
    %1569 = vmatpush1.xpose.msra.mxu0 0.0
    %1570 = vmatprep.subr.mxu0 0.0
    %1571 = vmatpush1.xpose.msra.mxu0 0.0
    %1572 = vmatprep.subr.mxu0 0.0
    %1573 = vmatpush1.xpose.msra.mxu0 0.0
    %1574 = vmatprep.subr.mxu0 0.0
    %1575 = vmatpush1.xpose.msra.mxu0 0.0
    %1576 = vmatprep.subr.mxu0 0.0
    %1577 = vmatpush1.xpose.msra.mxu0 0.0
    %1578 = vmatprep.subr.mxu0 0.0
    %1579 = vmatpush1.xpose.msra.mxu0 0.0
    %1580 = vmatprep.subr.mxu0 0.0
    %1581 = vmatpush1.xpose.msra.mxu0 0.0
    %1582 = vmatprep.subr.mxu0 0.0
    %1583 = vmatpush1.xpose.msra.mxu0 0.0
    %1584 = vmatprep.mubr.f32.mxu0 0.0
    %1585 = vmatmul.mubr.f32.gmra.mrb[0].mxu0 %v1516
    %v1586 = vpop.f32.mrb[0].mxu0
    %v1587 = vadd.f32 %v359, %v1586
    %v1588 = vpop.f32.mrb[0].mxu0
    %1589 = vdwg.mxu0
    %1590 = vrot.lane.b32.xlu0 %v145, 112
    %v1591 = vpop.permute.xlu0 %1590
    %1592 = vrot.lane.b32.xlu0 %v291, 112
    %v1593 = vpop.permute.xlu0 %1592
    %v1594 = vsel %vm374, %v1591, 0
    %v1596 = vsel %vm374, %v1593, 0
    %1598 = vmatprep.subr.mxu0 0.0
    %1599 = vmatpush1.xpose.msra.mxu0 %v1596
    %1600 = vmatprep.subr.mxu0 0.0
    %1601 = vmatpush1.xpose.msra.mxu0 0.0
    %1602 = vmatprep.subr.mxu0 0.0
    %1603 = vmatpush1.xpose.msra.mxu0 0.0
    %1604 = vmatprep.subr.mxu0 0.0
    %1605 = vmatpush1.xpose.msra.mxu0 0.0
    %1606 = vmatprep.subr.mxu0 0.0
    %1607 = vmatpush1.xpose.msra.mxu0 0.0
    %1608 = vmatprep.subr.mxu0 0.0
    %1609 = vmatpush1.xpose.msra.mxu0 0.0
    %1610 = vmatprep.subr.mxu0 0.0
    %1611 = vmatpush1.xpose.msra.mxu0 0.0
    %1612 = vmatprep.subr.mxu0 0.0
    %1613 = vmatpush1.xpose.msra.mxu0 0.0
    %1614 = vmatprep.subr.mxu0 0.0
    %1615 = vmatpush1.xpose.msra.mxu0 0.0
    %1616 = vmatprep.subr.mxu0 0.0
    %1617 = vmatpush1.xpose.msra.mxu0 0.0
    %1618 = vmatprep.subr.mxu0 0.0
    %1619 = vmatpush1.xpose.msra.mxu0 0.0
    %1620 = vmatprep.subr.mxu0 0.0
    %1621 = vmatpush1.xpose.msra.mxu0 0.0
    %1622 = vmatprep.subr.mxu0 0.0
    %1623 = vmatpush1.xpose.msra.mxu0 0.0
    %1624 = vmatprep.subr.mxu0 0.0
    %1625 = vmatpush1.xpose.msra.mxu0 0.0
    %1626 = vmatprep.subr.mxu0 0.0
    %1627 = vmatpush1.xpose.msra.mxu0 0.0
    %1628 = vmatprep.subr.mxu0 0.0
    %1629 = vmatpush1.xpose.msra.mxu0 0.0
    %1630 = vmatprep.subr.mxu0 0.0
    %1631 = vmatpush1.xpose.msra.mxu0 0.0
    %1632 = vmatprep.subr.mxu0 0.0
    %1633 = vmatpush1.xpose.msra.mxu0 0.0
    %1634 = vmatprep.subr.mxu0 0.0
    %1635 = vmatpush1.xpose.msra.mxu0 0.0
    %1636 = vmatprep.subr.mxu0 0.0
    %1637 = vmatpush1.xpose.msra.mxu0 0.0
    %1638 = vmatprep.subr.mxu0 0.0
    %1639 = vmatpush1.xpose.msra.mxu0 0.0
    %1640 = vmatprep.subr.mxu0 0.0
    %1641 = vmatpush1.xpose.msra.mxu0 0.0
    %1642 = vmatprep.subr.mxu0 0.0
    %1643 = vmatpush1.xpose.msra.mxu0 0.0
    %1644 = vmatprep.subr.mxu0 0.0
    %1645 = vmatpush1.xpose.msra.mxu0 0.0
    %1646 = vmatprep.subr.mxu0 0.0
    %1647 = vmatpush1.xpose.msra.mxu0 0.0
    %1648 = vmatprep.subr.mxu0 0.0
    %1649 = vmatpush1.xpose.msra.mxu0 0.0
    %1650 = vmatprep.subr.mxu0 0.0
    %1651 = vmatpush1.xpose.msra.mxu0 0.0
    %1652 = vmatprep.subr.mxu0 0.0
    %1653 = vmatpush1.xpose.msra.mxu0 0.0
    %1654 = vmatprep.subr.mxu0 0.0
    %1655 = vmatpush1.xpose.msra.mxu0 0.0
    %1656 = vmatprep.subr.mxu0 0.0
    %1657 = vmatpush1.xpose.msra.mxu0 0.0
    %1658 = vmatprep.subr.mxu0 0.0
    %1659 = vmatpush1.xpose.msra.mxu0 0.0
    %1660 = vmatprep.subr.mxu0 0.0
    %1661 = vmatpush1.xpose.msra.mxu0 0.0
    %1662 = vmatprep.mubr.f32.mxu0 0.0
    %1663 = vmatmul.mubr.f32.gmra.mrb[0].mxu0 %v1594
    %v1664 = vpop.f32.mrb[0].mxu0
    %v1665 = vadd.f32 %v363, %v1664
    %v1666 = vpop.f32.mrb[0].mxu0
    %1667 = vdwg.mxu0
    %1668 = vrot.lane.b32.xlu0 %v150, 112
    %v1669 = vpop.permute.xlu0 %1668
    %1670 = vrot.lane.b32.xlu0 %v296, 112
    %v1671 = vpop.permute.xlu0 %1670
    %v1672 = vsel %vm374, %v1669, 0
    %v1674 = vsel %vm374, %v1671, 0
    %1676 = vmatprep.subr.mxu0 0.0
    %1677 = vmatpush1.xpose.msra.mxu0 %v1674
    %1678 = vmatprep.subr.mxu0 0.0
    %1679 = vmatpush1.xpose.msra.mxu0 0.0
    %1680 = vmatprep.subr.mxu0 0.0
    %1681 = vmatpush1.xpose.msra.mxu0 0.0
    %1682 = vmatprep.subr.mxu0 0.0
    %1683 = vmatpush1.xpose.msra.mxu0 0.0
    %1684 = vmatprep.subr.mxu0 0.0
    %1685 = vmatpush1.xpose.msra.mxu0 0.0
    %1686 = vmatprep.subr.mxu0 0.0
    %1687 = vmatpush1.xpose.msra.mxu0 0.0
    %1688 = vmatprep.subr.mxu0 0.0
    %1689 = vmatpush1.xpose.msra.mxu0 0.0
    %1690 = vmatprep.subr.mxu0 0.0
    %1691 = vmatpush1.xpose.msra.mxu0 0.0
    %1692 = vmatprep.subr.mxu0 0.0
    %1693 = vmatpush1.xpose.msra.mxu0 0.0
    %1694 = vmatprep.subr.mxu0 0.0
    %1695 = vmatpush1.xpose.msra.mxu0 0.0
    %1696 = vmatprep.subr.mxu0 0.0
    %1697 = vmatpush1.xpose.msra.mxu0 0.0
    %1698 = vmatprep.subr.mxu0 0.0
    %1699 = vmatpush1.xpose.msra.mxu0 0.0
    %1700 = vmatprep.subr.mxu0 0.0
    %1701 = vmatpush1.xpose.msra.mxu0 0.0
    %1702 = vmatprep.subr.mxu0 0.0
    %1703 = vmatpush1.xpose.msra.mxu0 0.0
    %1704 = vmatprep.subr.mxu0 0.0
    %1705 = vmatpush1.xpose.msra.mxu0 0.0
    %1706 = vmatprep.subr.mxu0 0.0
    %1707 = vmatpush1.xpose.msra.mxu0 0.0
    %1708 = vmatprep.subr.mxu0 0.0
    %1709 = vmatpush1.xpose.msra.mxu0 0.0
    %1710 = vmatprep.subr.mxu0 0.0
    %1711 = vmatpush1.xpose.msra.mxu0 0.0
    %1712 = vmatprep.subr.mxu0 0.0
    %1713 = vmatpush1.xpose.msra.mxu0 0.0
    %1714 = vmatprep.subr.mxu0 0.0
    %1715 = vmatpush1.xpose.msra.mxu0 0.0
    %1716 = vmatprep.subr.mxu0 0.0
    %1717 = vmatpush1.xpose.msra.mxu0 0.0
    %1718 = vmatprep.subr.mxu0 0.0
    %1719 = vmatpush1.xpose.msra.mxu0 0.0
    %1720 = vmatprep.subr.mxu0 0.0
    %1721 = vmatpush1.xpose.msra.mxu0 0.0
    %1722 = vmatprep.subr.mxu0 0.0
    %1723 = vmatpush1.xpose.msra.mxu0 0.0
    %1724 = vmatprep.subr.mxu0 0.0
    %1725 = vmatpush1.xpose.msra.mxu0 0.0
    %1726 = vmatprep.subr.mxu0 0.0
    %1727 = vmatpush1.xpose.msra.mxu0 0.0
    %1728 = vmatprep.subr.mxu0 0.0
    %1729 = vmatpush1.xpose.msra.mxu0 0.0
    %1730 = vmatprep.subr.mxu0 0.0
    %1731 = vmatpush1.xpose.msra.mxu0 0.0
    %1732 = vmatprep.subr.mxu0 0.0
    %1733 = vmatpush1.xpose.msra.mxu0 0.0
    %1734 = vmatprep.subr.mxu0 0.0
    %1735 = vmatpush1.xpose.msra.mxu0 0.0
    %1736 = vmatprep.subr.mxu0 0.0
    %1737 = vmatpush1.xpose.msra.mxu0 0.0
    %1738 = vmatprep.subr.mxu0 0.0
    %1739 = vmatpush1.xpose.msra.mxu0 0.0
    %1740 = vmatprep.mubr.f32.mxu0 0.0
    %1741 = vmatmul.mubr.f32.gmra.mrb[0].mxu0 %v1672
    %v1742 = vpop.f32.mrb[0].mxu0
    %v1743 = vadd.f32 %v367, %v1742
    %v1744 = vpop.f32.mrb[0].mxu0
    %1745 = vdwg.mxu0
    %1746 = vrot.lane.b32.xlu0 %v155, 112
    %v1747 = vpop.permute.xlu0 %1746
    %1748 = vrot.lane.b32.xlu0 %v301, 112
    %v1749 = vpop.permute.xlu0 %1748
    %v1750 = vsel %vm374, %v1747, 0
    %v1752 = vsel %vm374, %v1749, 0
    %1754 = vmatprep.subr.mxu0 0.0
    %1755 = vmatpush1.xpose.msra.mxu0 %v1752
    %1756 = vmatprep.subr.mxu0 0.0
    %1757 = vmatpush1.xpose.msra.mxu0 0.0
    %1758 = vmatprep.subr.mxu0 0.0
    %1759 = vmatpush1.xpose.msra.mxu0 0.0
    %1760 = vmatprep.subr.mxu0 0.0
    %1761 = vmatpush1.xpose.msra.mxu0 0.0
    %1762 = vmatprep.subr.mxu0 0.0
    %1763 = vmatpush1.xpose.msra.mxu0 0.0
    %1764 = vmatprep.subr.mxu0 0.0
    %1765 = vmatpush1.xpose.msra.mxu0 0.0
    %1766 = vmatprep.subr.mxu0 0.0
    %1767 = vmatpush1.xpose.msra.mxu0 0.0
    %1768 = vmatprep.subr.mxu0 0.0
    %1769 = vmatpush1.xpose.msra.mxu0 0.0
    %1770 = vmatprep.subr.mxu0 0.0
    %1771 = vmatpush1.xpose.msra.mxu0 0.0
    %1772 = vmatprep.subr.mxu0 0.0
    %1773 = vmatpush1.xpose.msra.mxu0 0.0
    %1774 = vmatprep.subr.mxu0 0.0
    %1775 = vmatpush1.xpose.msra.mxu0 0.0
    %1776 = vmatprep.subr.mxu0 0.0
    %1777 = vmatpush1.xpose.msra.mxu0 0.0
    %1778 = vmatprep.subr.mxu0 0.0
    %1779 = vmatpush1.xpose.msra.mxu0 0.0
    %1780 = vmatprep.subr.mxu0 0.0
    %1781 = vmatpush1.xpose.msra.mxu0 0.0
    %1782 = vmatprep.subr.mxu0 0.0
    %1783 = vmatpush1.xpose.msra.mxu0 0.0
    %1784 = vmatprep.subr.mxu0 0.0
    %1785 = vmatpush1.xpose.msra.mxu0 0.0
    %1786 = vmatprep.subr.mxu0 0.0
    %1787 = vmatpush1.xpose.msra.mxu0 0.0
    %1788 = vmatprep.subr.mxu0 0.0
    %1789 = vmatpush1.xpose.msra.mxu0 0.0
    %1790 = vmatprep.subr.mxu0 0.0
    %1791 = vmatpush1.xpose.msra.mxu0 0.0
    %1792 = vmatprep.subr.mxu0 0.0
    %1793 = vmatpush1.xpose.msra.mxu0 0.0
    %1794 = vmatprep.subr.mxu0 0.0
    %1795 = vmatpush1.xpose.msra.mxu0 0.0
    %1796 = vmatprep.subr.mxu0 0.0
    %1797 = vmatpush1.xpose.msra.mxu0 0.0
    %1798 = vmatprep.subr.mxu0 0.0
    %1799 = vmatpush1.xpose.msra.mxu0 0.0
    %1800 = vmatprep.subr.mxu0 0.0
    %1801 = vmatpush1.xpose.msra.mxu0 0.0
    %1802 = vmatprep.subr.mxu0 0.0
    %1803 = vmatpush1.xpose.msra.mxu0 0.0
    %1804 = vmatprep.subr.mxu0 0.0
    %1805 = vmatpush1.xpose.msra.mxu0 0.0
    %1806 = vmatprep.subr.mxu0 0.0
    %1807 = vmatpush1.xpose.msra.mxu0 0.0
    %1808 = vmatprep.subr.mxu0 0.0
    %1809 = vmatpush1.xpose.msra.mxu0 0.0
    %1810 = vmatprep.subr.mxu0 0.0
    %1811 = vmatpush1.xpose.msra.mxu0 0.0
    %1812 = vmatprep.subr.mxu0 0.0
    %1813 = vmatpush1.xpose.msra.mxu0 0.0
    %1814 = vmatprep.subr.mxu0 0.0
    %1815 = vmatpush1.xpose.msra.mxu0 0.0
    %1816 = vmatprep.subr.mxu0 0.0
    %1817 = vmatpush1.xpose.msra.mxu0 0.0
    %1818 = vmatprep.mubr.f32.mxu0 0.0
    %1819 = vmatmul.mubr.f32.gmra.mrb[0].mxu0 %v1750
    %v1820 = vpop.f32.mrb[0].mxu0
    %v1821 = vadd.f32 %v371, %v1820
    %v1822 = vpop.f32.mrb[0].mxu0
    %1823 = vdwg.mxu0
    %v1824 = vsel %vm831, %v1431, -inf
    %1825 = vmax.xlane.f32.xlu0 %v1824
    %v1826 = vpop.xlane.xlu0 %1825
    %v1827 = vsel %vm831, %v1509, -inf
    %1828 = vmax.xlane.f32.xlu0 %v1827
    %v1829 = vpop.xlane.xlu0 %1828
    %v1830 = vsel %vm831, %v1587, -inf
    %1831 = vmax.xlane.f32.xlu0 %v1830
    %v1832 = vpop.xlane.xlu0 %1831
    %v1833 = vsel %vm831, %v1665, -inf
    %1834 = vmax.xlane.f32.xlu0 %v1833
    %v1835 = vpop.xlane.xlu0 %1834
    %v1836 = vsel %vm831, %v1743, -inf
    %1837 = vmax.xlane.f32.xlu0 %v1836
    %v1838 = vpop.xlane.xlu0 %1837
    %v1839 = vsel %vm831, %v1821, -inf
    %1840 = vmax.xlane.f32.xlu0 %v1839
    %v1841 = vpop.xlane.xlu0 %1840
    %v1842 = vsub.f32 %v1431, %v1826
    %v1843 = vsub.f32 %v1509, %v1829
    %v1844 = vsub.f32 %v1587, %v1832
    %v1845 = vsub.f32 %v1665, %v1835
    %v1846 = vsub.f32 %v1743, %v1838
    %v1847 = vsub.f32 %v1821, %v1841
    %v1848 = vmul.f32 %v1842, 1.442695
    %v1849 = vpow.pop %v1848
    %v1850 = vmul.f32 %v1843, 1.442695
    %v1851 = vpow.pop %v1850
    %v1852 = vmul.f32 %v1844, 1.442695
    %v1853 = vpow.pop %v1852
    %v1854 = vmul.f32 %v1845, 1.442695
    %v1855 = vpow.pop %v1854
    %v1856 = vmul.f32 %v1846, 1.442695
    %v1857 = vpow.pop %v1856
    %v1858 = vmul.f32 %v1847, 1.442695
    %v1859 = vpow.pop %v1858
    %v1860 = vsel %vm831, %v1849, 0.0
    %1861 = vadd.xlane.f32.xlu0 %v1860
    %v1862 = vpop.xlane.xlu0 %1861
    %v1863 = vsel %vm831, %v1851, 0.0
    %1864 = vadd.xlane.f32.xlu0 %v1863
    %v1865 = vpop.xlane.xlu0 %1864
    %v1866 = vsel %vm831, %v1853, 0.0
    %1867 = vadd.xlane.f32.xlu0 %v1866
    %v1868 = vpop.xlane.xlu0 %1867
    %v1869 = vsel %vm831, %v1855, 0.0
    %1870 = vadd.xlane.f32.xlu0 %v1869
    %v1871 = vpop.xlane.xlu0 %1870
    %v1872 = vsel %vm831, %v1857, 0.0
    %1873 = vadd.xlane.f32.xlu0 %v1872
    %v1874 = vpop.xlane.xlu0 %1873
    %v1875 = vsel %vm831, %v1859, 0.0
    %1876 = vadd.xlane.f32.xlu0 %v1875
    %v1877 = vpop.xlane.xlu0 %1876
    %v1878 = vrcp.pop %v1862
    %v1879 = vrcp.pop %v1865
    %v1880 = vrcp.pop %v1868
    %v1881 = vrcp.pop %v1871
    %v1882 = vrcp.pop %v1874
    %v1883 = vrcp.pop %v1877
    %v1884 = vmul.f32 %v1849, %v1878
    %v1885 = vmul.f32 %v1851, %v1879
    %v1886 = vmul.f32 %v1853, %v1880
    %v1887 = vmul.f32 %v1855, %v1881
    %v1888 = vmul.f32 %v1857, %v1882
    %v1889 = vmul.f32 %v1859, %v1883
    %1890 = vrot.lane.b32.xlu0 %v276, 48
    %v1891 = vpop.permute.xlu0 %1890
    %v1894 = vsel %vm831, %v1884, 0
    %1896 = vmatprep.subr.mxu0 0.0
    %1897 = vmatpush1.msra.mxu0 %v1891
    %1898 = vmatprep.subr.mxu0 0.0
    %1899 = vmatpush1.msra.mxu0 0.0
    %1900 = vmatprep.subr.mxu0 0.0
    %1901 = vmatpush1.msra.mxu0 0.0
    %1902 = vmatprep.subr.mxu0 0.0
    %1903 = vmatpush1.msra.mxu0 0.0
    %1904 = vmatprep.subr.mxu0 0.0
    %1905 = vmatpush1.msra.mxu0 0.0
    %1906 = vmatprep.subr.mxu0 0.0
    %1907 = vmatpush1.msra.mxu0 0.0
    %1908 = vmatprep.subr.mxu0 0.0
    %1909 = vmatpush1.msra.mxu0 0.0
    %1910 = vmatprep.subr.mxu0 0.0
    %1911 = vmatpush1.msra.mxu0 0.0
    %1912 = vmatprep.subr.mxu0 0.0
    %1913 = vmatpush1.msra.mxu0 0.0
    %1914 = vmatprep.subr.mxu0 0.0
    %1915 = vmatpush1.msra.mxu0 0.0
    %1916 = vmatprep.subr.mxu0 0.0
    %1917 = vmatpush1.msra.mxu0 0.0
    %1918 = vmatprep.subr.mxu0 0.0
    %1919 = vmatpush1.msra.mxu0 0.0
    %1920 = vmatprep.subr.mxu0 0.0
    %1921 = vmatpush1.msra.mxu0 0.0
    %1922 = vmatprep.subr.mxu0 0.0
    %1923 = vmatpush1.msra.mxu0 0.0
    %1924 = vmatprep.subr.mxu0 0.0
    %1925 = vmatpush1.msra.mxu0 0.0
    %1926 = vmatprep.subr.mxu0 0.0
    %1927 = vmatpush1.msra.mxu0 0.0
    %1928 = vmatprep.subr.mxu0 0.0
    %1929 = vmatpush1.msra.mxu0 0.0
    %1930 = vmatprep.subr.mxu0 0.0
    %1931 = vmatpush1.msra.mxu0 0.0
    %1932 = vmatprep.subr.mxu0 0.0
    %1933 = vmatpush1.msra.mxu0 0.0
    %1934 = vmatprep.subr.mxu0 0.0
    %1935 = vmatpush1.msra.mxu0 0.0
    %1936 = vmatprep.subr.mxu0 0.0
    %1937 = vmatpush1.msra.mxu0 0.0
    %1938 = vmatprep.subr.mxu0 0.0
    %1939 = vmatpush1.msra.mxu0 0.0
    %1940 = vmatprep.subr.mxu0 0.0
    %1941 = vmatpush1.msra.mxu0 0.0
    %1942 = vmatprep.subr.mxu0 0.0
    %1943 = vmatpush1.msra.mxu0 0.0
    %1944 = vmatprep.subr.mxu0 0.0
    %1945 = vmatpush1.msra.mxu0 0.0
    %1946 = vmatprep.subr.mxu0 0.0
    %1947 = vmatpush1.msra.mxu0 0.0
    %1948 = vmatprep.subr.mxu0 0.0
    %1949 = vmatpush1.msra.mxu0 0.0
    %1950 = vmatprep.subr.mxu0 0.0
    %1951 = vmatpush1.msra.mxu0 0.0
    %1952 = vmatprep.subr.mxu0 0.0
    %1953 = vmatpush1.msra.mxu0 0.0
    %1954 = vmatprep.subr.mxu0 0.0
    %1955 = vmatpush1.msra.mxu0 0.0
    %1956 = vmatprep.subr.mxu0 0.0
    %1957 = vmatpush1.msra.mxu0 0.0
    %1958 = vmatprep.subr.mxu0 0.0
    %1959 = vmatpush1.msra.mxu0 0.0
    %1960 = vmatprep.mubr.f32.mxu0 0.0
    %1961 = vmatmul.mubr.f32.gmra.mrb[0].mxu0 %v1894
    %v1962 = vpop.f32.mrb[0].mxu0
    %v1963 = vadd.f32 0.0, %v1962
    %v1964 = vpop.f32.mrb[0].mxu0
    %1965 = vdwg.mxu0
    %1966 = vrot.lane.b32.xlu0 %v281, 48
    %v1967 = vpop.permute.xlu0 %1966
    %v1970 = vsel %vm831, %v1885, 0
    %1972 = vmatprep.subr.mxu0 0.0
    %1973 = vmatpush1.msra.mxu0 %v1967
    %1974 = vmatprep.subr.mxu0 0.0
    %1975 = vmatpush1.msra.mxu0 0.0
    %1976 = vmatprep.subr.mxu0 0.0
    %1977 = vmatpush1.msra.mxu0 0.0
    %1978 = vmatprep.subr.mxu0 0.0
    %1979 = vmatpush1.msra.mxu0 0.0
    %1980 = vmatprep.subr.mxu0 0.0
    %1981 = vmatpush1.msra.mxu0 0.0
    %1982 = vmatprep.subr.mxu0 0.0
    %1983 = vmatpush1.msra.mxu0 0.0
    %1984 = vmatprep.subr.mxu0 0.0
    %1985 = vmatpush1.msra.mxu0 0.0
    %1986 = vmatprep.subr.mxu0 0.0
    %1987 = vmatpush1.msra.mxu0 0.0
    %1988 = vmatprep.subr.mxu0 0.0
    %1989 = vmatpush1.msra.mxu0 0.0
    %1990 = vmatprep.subr.mxu0 0.0
    %1991 = vmatpush1.msra.mxu0 0.0
    %1992 = vmatprep.subr.mxu0 0.0
    %1993 = vmatpush1.msra.mxu0 0.0
    %1994 = vmatprep.subr.mxu0 0.0
    %1995 = vmatpush1.msra.mxu0 0.0
    %1996 = vmatprep.subr.mxu0 0.0
    %1997 = vmatpush1.msra.mxu0 0.0
    %1998 = vmatprep.subr.mxu0 0.0
    %1999 = vmatpush1.msra.mxu0 0.0
    %2000 = vmatprep.subr.mxu0 0.0
    %2001 = vmatpush1.msra.mxu0 0.0
    %2002 = vmatprep.subr.mxu0 0.0
    %2003 = vmatpush1.msra.mxu0 0.0
    %2004 = vmatprep.subr.mxu0 0.0
    %2005 = vmatpush1.msra.mxu0 0.0
    %2006 = vmatprep.subr.mxu0 0.0
    %2007 = vmatpush1.msra.mxu0 0.0
    %2008 = vmatprep.subr.mxu0 0.0
    %2009 = vmatpush1.msra.mxu0 0.0
    %2010 = vmatprep.subr.mxu0 0.0
    %2011 = vmatpush1.msra.mxu0 0.0
    %2012 = vmatprep.subr.mxu0 0.0
    %2013 = vmatpush1.msra.mxu0 0.0
    %2014 = vmatprep.subr.mxu0 0.0
    %2015 = vmatpush1.msra.mxu0 0.0
    %2016 = vmatprep.subr.mxu0 0.0
    %2017 = vmatpush1.msra.mxu0 0.0
    %2018 = vmatprep.subr.mxu0 0.0
    %2019 = vmatpush1.msra.mxu0 0.0
    %2020 = vmatprep.subr.mxu0 0.0
    %2021 = vmatpush1.msra.mxu0 0.0
    %2022 = vmatprep.subr.mxu0 0.0
    %2023 = vmatpush1.msra.mxu0 0.0
    %2024 = vmatprep.subr.mxu0 0.0
    %2025 = vmatpush1.msra.mxu0 0.0
    %2026 = vmatprep.subr.mxu0 0.0
    %2027 = vmatpush1.msra.mxu0 0.0
    %2028 = vmatprep.subr.mxu0 0.0
    %2029 = vmatpush1.msra.mxu0 0.0
    %2030 = vmatprep.subr.mxu0 0.0
    %2031 = vmatpush1.msra.mxu0 0.0
    %2032 = vmatprep.subr.mxu0 0.0
    %2033 = vmatpush1.msra.mxu0 0.0
    %2034 = vmatprep.subr.mxu0 0.0
    %2035 = vmatpush1.msra.mxu0 0.0
    %2036 = vmatprep.mubr.f32.mxu0 0.0
    %2037 = vmatmul.mubr.f32.gmra.mrb[0].mxu0 %v1970
    %v2038 = vpop.f32.mrb[0].mxu0
    %v2039 = vadd.f32 0.0, %v2038
    %v2040 = vpop.f32.mrb[0].mxu0
    %2041 = vdwg.mxu0
    %2042 = vrot.lane.b32.xlu0 %v286, 48
    %v2043 = vpop.permute.xlu0 %2042
    %v2046 = vsel %vm831, %v1886, 0
    %2048 = vmatprep.subr.mxu0 0.0
    %2049 = vmatpush1.msra.mxu0 %v2043
    %2050 = vmatprep.subr.mxu0 0.0
    %2051 = vmatpush1.msra.mxu0 0.0
    %2052 = vmatprep.subr.mxu0 0.0
    %2053 = vmatpush1.msra.mxu0 0.0
    %2054 = vmatprep.subr.mxu0 0.0
    %2055 = vmatpush1.msra.mxu0 0.0
    %2056 = vmatprep.subr.mxu0 0.0
    %2057 = vmatpush1.msra.mxu0 0.0
    %2058 = vmatprep.subr.mxu0 0.0
    %2059 = vmatpush1.msra.mxu0 0.0
    %2060 = vmatprep.subr.mxu0 0.0
    %2061 = vmatpush1.msra.mxu0 0.0
    %2062 = vmatprep.subr.mxu0 0.0
    %2063 = vmatpush1.msra.mxu0 0.0
    %2064 = vmatprep.subr.mxu0 0.0
    %2065 = vmatpush1.msra.mxu0 0.0
    %2066 = vmatprep.subr.mxu0 0.0
    %2067 = vmatpush1.msra.mxu0 0.0
    %2068 = vmatprep.subr.mxu0 0.0
    %2069 = vmatpush1.msra.mxu0 0.0
    %2070 = vmatprep.subr.mxu0 0.0
    %2071 = vmatpush1.msra.mxu0 0.0
    %2072 = vmatprep.subr.mxu0 0.0
    %2073 = vmatpush1.msra.mxu0 0.0
    %2074 = vmatprep.subr.mxu0 0.0
    %2075 = vmatpush1.msra.mxu0 0.0
    %2076 = vmatprep.subr.mxu0 0.0
    %2077 = vmatpush1.msra.mxu0 0.0
    %2078 = vmatprep.subr.mxu0 0.0
    %2079 = vmatpush1.msra.mxu0 0.0
    %2080 = vmatprep.subr.mxu0 0.0
    %2081 = vmatpush1.msra.mxu0 0.0
    %2082 = vmatprep.subr.mxu0 0.0
    %2083 = vmatpush1.msra.mxu0 0.0
    %2084 = vmatprep.subr.mxu0 0.0
    %2085 = vmatpush1.msra.mxu0 0.0
    %2086 = vmatprep.subr.mxu0 0.0
    %2087 = vmatpush1.msra.mxu0 0.0
    %2088 = vmatprep.subr.mxu0 0.0
    %2089 = vmatpush1.msra.mxu0 0.0
    %2090 = vmatprep.subr.mxu0 0.0
    %2091 = vmatpush1.msra.mxu0 0.0
    %2092 = vmatprep.subr.mxu0 0.0
    %2093 = vmatpush1.msra.mxu0 0.0
    %2094 = vmatprep.subr.mxu0 0.0
    %2095 = vmatpush1.msra.mxu0 0.0
    %2096 = vmatprep.subr.mxu0 0.0
    %2097 = vmatpush1.msra.mxu0 0.0
    %2098 = vmatprep.subr.mxu0 0.0
    %2099 = vmatpush1.msra.mxu0 0.0
    %2100 = vmatprep.subr.mxu0 0.0
    %2101 = vmatpush1.msra.mxu0 0.0
    %2102 = vmatprep.subr.mxu0 0.0
    %2103 = vmatpush1.msra.mxu0 0.0
    %2104 = vmatprep.subr.mxu0 0.0
    %2105 = vmatpush1.msra.mxu0 0.0
    %2106 = vmatprep.subr.mxu0 0.0
    %2107 = vmatpush1.msra.mxu0 0.0
    %2108 = vmatprep.subr.mxu0 0.0
    %2109 = vmatpush1.msra.mxu0 0.0
    %2110 = vmatprep.subr.mxu0 0.0
    %2111 = vmatpush1.msra.mxu0 0.0
    %2112 = vmatprep.mubr.f32.mxu0 0.0
    %2113 = vmatmul.mubr.f32.gmra.mrb[0].mxu0 %v2046
    %v2114 = vpop.f32.mrb[0].mxu0
    %v2115 = vadd.f32 0.0, %v2114
    %v2116 = vpop.f32.mrb[0].mxu0
    %2117 = vdwg.mxu0
    %2118 = vrot.lane.b32.xlu0 %v291, 48
    %v2119 = vpop.permute.xlu0 %2118
    %v2122 = vsel %vm831, %v1887, 0
    %2124 = vmatprep.subr.mxu0 0.0
    %2125 = vmatpush1.msra.mxu0 %v2119
    %2126 = vmatprep.subr.mxu0 0.0
    %2127 = vmatpush1.msra.mxu0 0.0
    %2128 = vmatprep.subr.mxu0 0.0
    %2129 = vmatpush1.msra.mxu0 0.0
    %2130 = vmatprep.subr.mxu0 0.0
    %2131 = vmatpush1.msra.mxu0 0.0
    %2132 = vmatprep.subr.mxu0 0.0
    %2133 = vmatpush1.msra.mxu0 0.0
    %2134 = vmatprep.subr.mxu0 0.0
    %2135 = vmatpush1.msra.mxu0 0.0
    %2136 = vmatprep.subr.mxu0 0.0
    %2137 = vmatpush1.msra.mxu0 0.0
    %2138 = vmatprep.subr.mxu0 0.0
    %2139 = vmatpush1.msra.mxu0 0.0
    %2140 = vmatprep.subr.mxu0 0.0
    %2141 = vmatpush1.msra.mxu0 0.0
    %2142 = vmatprep.subr.mxu0 0.0
    %2143 = vmatpush1.msra.mxu0 0.0
    %2144 = vmatprep.subr.mxu0 0.0
    %2145 = vmatpush1.msra.mxu0 0.0
    %2146 = vmatprep.subr.mxu0 0.0
    %2147 = vmatpush1.msra.mxu0 0.0
    %2148 = vmatprep.subr.mxu0 0.0
    %2149 = vmatpush1.msra.mxu0 0.0
    %2150 = vmatprep.subr.mxu0 0.0
    %2151 = vmatpush1.msra.mxu0 0.0
    %2152 = vmatprep.subr.mxu0 0.0
    %2153 = vmatpush1.msra.mxu0 0.0
    %2154 = vmatprep.subr.mxu0 0.0
    %2155 = vmatpush1.msra.mxu0 0.0
    %2156 = vmatprep.subr.mxu0 0.0
    %2157 = vmatpush1.msra.mxu0 0.0
    %2158 = vmatprep.subr.mxu0 0.0
    %2159 = vmatpush1.msra.mxu0 0.0
    %2160 = vmatprep.subr.mxu0 0.0
    %2161 = vmatpush1.msra.mxu0 0.0
    %2162 = vmatprep.subr.mxu0 0.0
    %2163 = vmatpush1.msra.mxu0 0.0
    %2164 = vmatprep.subr.mxu0 0.0
    %2165 = vmatpush1.msra.mxu0 0.0
    %2166 = vmatprep.subr.mxu0 0.0
    %2167 = vmatpush1.msra.mxu0 0.0
    %2168 = vmatprep.subr.mxu0 0.0
    %2169 = vmatpush1.msra.mxu0 0.0
    %2170 = vmatprep.subr.mxu0 0.0
    %2171 = vmatpush1.msra.mxu0 0.0
    %2172 = vmatprep.subr.mxu0 0.0
    %2173 = vmatpush1.msra.mxu0 0.0
    %2174 = vmatprep.subr.mxu0 0.0
    %2175 = vmatpush1.msra.mxu0 0.0
    %2176 = vmatprep.subr.mxu0 0.0
    %2177 = vmatpush1.msra.mxu0 0.0
    %2178 = vmatprep.subr.mxu0 0.0
    %2179 = vmatpush1.msra.mxu0 0.0
    %2180 = vmatprep.subr.mxu0 0.0
    %2181 = vmatpush1.msra.mxu0 0.0
    %2182 = vmatprep.subr.mxu0 0.0
    %2183 = vmatpush1.msra.mxu0 0.0
    %2184 = vmatprep.subr.mxu0 0.0
    %2185 = vmatpush1.msra.mxu0 0.0
    %2186 = vmatprep.subr.mxu0 0.0
    %2187 = vmatpush1.msra.mxu0 0.0
    %2188 = vmatprep.mubr.f32.mxu0 0.0
    %2189 = vmatmul.mubr.f32.gmra.mrb[0].mxu0 %v2122
    %v2190 = vpop.f32.mrb[0].mxu0
    %v2191 = vadd.f32 0.0, %v2190
    %v2192 = vpop.f32.mrb[0].mxu0
    %2193 = vdwg.mxu0
    %2194 = vrot.lane.b32.xlu0 %v296, 48
    %v2195 = vpop.permute.xlu0 %2194
    %v2198 = vsel %vm831, %v1888, 0
    %2200 = vmatprep.subr.mxu0 0.0
    %2201 = vmatpush1.msra.mxu0 %v2195
    %2202 = vmatprep.subr.mxu0 0.0
    %2203 = vmatpush1.msra.mxu0 0.0
    %2204 = vmatprep.subr.mxu0 0.0
    %2205 = vmatpush1.msra.mxu0 0.0
    %2206 = vmatprep.subr.mxu0 0.0
    %2207 = vmatpush1.msra.mxu0 0.0
    %2208 = vmatprep.subr.mxu0 0.0
    %2209 = vmatpush1.msra.mxu0 0.0
    %2210 = vmatprep.subr.mxu0 0.0
    %2211 = vmatpush1.msra.mxu0 0.0
    %2212 = vmatprep.subr.mxu0 0.0
    %2213 = vmatpush1.msra.mxu0 0.0
    %2214 = vmatprep.subr.mxu0 0.0
    %2215 = vmatpush1.msra.mxu0 0.0
    %2216 = vmatprep.subr.mxu0 0.0
    %2217 = vmatpush1.msra.mxu0 0.0
    %2218 = vmatprep.subr.mxu0 0.0
    %2219 = vmatpush1.msra.mxu0 0.0
    %2220 = vmatprep.subr.mxu0 0.0
    %2221 = vmatpush1.msra.mxu0 0.0
    %2222 = vmatprep.subr.mxu0 0.0
    %2223 = vmatpush1.msra.mxu0 0.0
    %2224 = vmatprep.subr.mxu0 0.0
    %2225 = vmatpush1.msra.mxu0 0.0
    %2226 = vmatprep.subr.mxu0 0.0
    %2227 = vmatpush1.msra.mxu0 0.0
    %2228 = vmatprep.subr.mxu0 0.0
    %2229 = vmatpush1.msra.mxu0 0.0
    %2230 = vmatprep.subr.mxu0 0.0
    %2231 = vmatpush1.msra.mxu0 0.0
    %2232 = vmatprep.subr.mxu0 0.0
    %2233 = vmatpush1.msra.mxu0 0.0
    %2234 = vmatprep.subr.mxu0 0.0
    %2235 = vmatpush1.msra.mxu0 0.0
    %2236 = vmatprep.subr.mxu0 0.0
    %2237 = vmatpush1.msra.mxu0 0.0
    %2238 = vmatprep.subr.mxu0 0.0
    %2239 = vmatpush1.msra.mxu0 0.0
    %2240 = vmatprep.subr.mxu0 0.0
    %2241 = vmatpush1.msra.mxu0 0.0
    %2242 = vmatprep.subr.mxu0 0.0
    %2243 = vmatpush1.msra.mxu0 0.0
    %2244 = vmatprep.subr.mxu0 0.0
    %2245 = vmatpush1.msra.mxu0 0.0
    %2246 = vmatprep.subr.mxu0 0.0
    %2247 = vmatpush1.msra.mxu0 0.0
    %2248 = vmatprep.subr.mxu0 0.0
    %2249 = vmatpush1.msra.mxu0 0.0
    %2250 = vmatprep.subr.mxu0 0.0
    %2251 = vmatpush1.msra.mxu0 0.0
    %2252 = vmatprep.subr.mxu0 0.0
    %2253 = vmatpush1.msra.mxu0 0.0
    %2254 = vmatprep.subr.mxu0 0.0
    %2255 = vmatpush1.msra.mxu0 0.0
    %2256 = vmatprep.subr.mxu0 0.0
    %2257 = vmatpush1.msra.mxu0 0.0
    %2258 = vmatprep.subr.mxu0 0.0
    %2259 = vmatpush1.msra.mxu0 0.0
    %2260 = vmatprep.subr.mxu0 0.0
    %2261 = vmatpush1.msra.mxu0 0.0
    %2262 = vmatprep.subr.mxu0 0.0
    %2263 = vmatpush1.msra.mxu0 0.0
    %2264 = vmatprep.mubr.f32.mxu0 0.0
    %2265 = vmatmul.mubr.f32.gmra.mrb[0].mxu0 %v2198
    %v2266 = vpop.f32.mrb[0].mxu0
    %v2267 = vadd.f32 0.0, %v2266
    %v2268 = vpop.f32.mrb[0].mxu0
    %2269 = vdwg.mxu0
    %2270 = vrot.lane.b32.xlu0 %v301, 48
    %v2271 = vpop.permute.xlu0 %2270
    %v2274 = vsel %vm831, %v1889, 0
    %2276 = vmatprep.subr.mxu0 0.0
    %2277 = vmatpush1.msra.mxu0 %v2271
    %2278 = vmatprep.subr.mxu0 0.0
    %2279 = vmatpush1.msra.mxu0 0.0
    %2280 = vmatprep.subr.mxu0 0.0
    %2281 = vmatpush1.msra.mxu0 0.0
    %2282 = vmatprep.subr.mxu0 0.0
    %2283 = vmatpush1.msra.mxu0 0.0
    %2284 = vmatprep.subr.mxu0 0.0
    %2285 = vmatpush1.msra.mxu0 0.0
    %2286 = vmatprep.subr.mxu0 0.0
    %2287 = vmatpush1.msra.mxu0 0.0
    %2288 = vmatprep.subr.mxu0 0.0
    %2289 = vmatpush1.msra.mxu0 0.0
    %2290 = vmatprep.subr.mxu0 0.0
    %2291 = vmatpush1.msra.mxu0 0.0
    %2292 = vmatprep.subr.mxu0 0.0
    %2293 = vmatpush1.msra.mxu0 0.0
    %2294 = vmatprep.subr.mxu0 0.0
    %2295 = vmatpush1.msra.mxu0 0.0
    %2296 = vmatprep.subr.mxu0 0.0
    %2297 = vmatpush1.msra.mxu0 0.0
    %2298 = vmatprep.subr.mxu0 0.0
    %2299 = vmatpush1.msra.mxu0 0.0
    %2300 = vmatprep.subr.mxu0 0.0
    %2301 = vmatpush1.msra.mxu0 0.0
    %2302 = vmatprep.subr.mxu0 0.0
    %2303 = vmatpush1.msra.mxu0 0.0
    %2304 = vmatprep.subr.mxu0 0.0
    %2305 = vmatpush1.msra.mxu0 0.0
    %2306 = vmatprep.subr.mxu0 0.0
    %2307 = vmatpush1.msra.mxu0 0.0
    %2308 = vmatprep.subr.mxu0 0.0
    %2309 = vmatpush1.msra.mxu0 0.0
    %2310 = vmatprep.subr.mxu0 0.0
    %2311 = vmatpush1.msra.mxu0 0.0
    %2312 = vmatprep.subr.mxu0 0.0
    %2313 = vmatpush1.msra.mxu0 0.0
    %2314 = vmatprep.subr.mxu0 0.0
    %2315 = vmatpush1.msra.mxu0 0.0
    %2316 = vmatprep.subr.mxu0 0.0
    %2317 = vmatpush1.msra.mxu0 0.0
    %2318 = vmatprep.subr.mxu0 0.0
    %2319 = vmatpush1.msra.mxu0 0.0
    %2320 = vmatprep.subr.mxu0 0.0
    %2321 = vmatpush1.msra.mxu0 0.0
    %2322 = vmatprep.subr.mxu0 0.0
    %2323 = vmatpush1.msra.mxu0 0.0
    %2324 = vmatprep.subr.mxu0 0.0
    %2325 = vmatpush1.msra.mxu0 0.0
    %2326 = vmatprep.subr.mxu0 0.0
    %2327 = vmatpush1.msra.mxu0 0.0
    %2328 = vmatprep.subr.mxu0 0.0
    %2329 = vmatpush1.msra.mxu0 0.0
    %2330 = vmatprep.subr.mxu0 0.0
    %2331 = vmatpush1.msra.mxu0 0.0
    %2332 = vmatprep.subr.mxu0 0.0
    %2333 = vmatpush1.msra.mxu0 0.0
    %2334 = vmatprep.subr.mxu0 0.0
    %2335 = vmatpush1.msra.mxu0 0.0
    %2336 = vmatprep.subr.mxu0 0.0
    %2337 = vmatpush1.msra.mxu0 0.0
    %2338 = vmatprep.subr.mxu0 0.0
    %2339 = vmatpush1.msra.mxu0 0.0
    %2340 = vmatprep.mubr.f32.mxu0 0.0
    %2341 = vmatmul.mubr.f32.gmra.mrb[0].mxu0 %v2274
    %v2342 = vpop.f32.mrb[0].mxu0
    %v2343 = vadd.f32 0.0, %v2342
    %v2344 = vpop.f32.mrb[0].mxu0
    %2345 = vdwg.mxu0
    %v2346 = vld [vmem:[%s5 + $0x10] sm:$0xff]
    %v2347 = vld [vmem:[%s5 + $0x18] sm:$0xff]
    %v2349 = vsel %vm374, %v1963, 0
    %v2352 = vsel %vm374, %v2039, 0
    %v2355 = vsel %vm374, %v2115, 0
    %v2358 = vsel %vm374, %v2191, 0
    %v2361 = vsel %vm374, %v2267, 0
    %v2364 = vsel %vm374, %v2343, 0
    %2366 = vmatprep.subr.mxu0 0.0
    %2367 = vmatpush1.msra.mxu0 %v2346
    %2368 = vmatprep.subr.mxu0 0.0
    %2369 = vmatpush1.msra.mxu0 %v2347
    %2370 = vmatprep.subr.mxu0 0.0
    %2371 = vmatpush1.msra.mxu0 0.0
    %2372 = vmatprep.subr.mxu0 0.0
    %2373 = vmatpush1.msra.mxu0 0.0
    %2374 = vmatprep.subr.mxu0 0.0
    %2375 = vmatpush1.msra.mxu0 0.0
    %2376 = vmatprep.subr.mxu0 0.0
    %2377 = vmatpush1.msra.mxu0 0.0
    %2378 = vmatprep.subr.mxu0 0.0
    %2379 = vmatpush1.msra.mxu0 0.0
    %2380 = vmatprep.subr.mxu0 0.0
    %2381 = vmatpush1.msra.mxu0 0.0
    %2382 = vmatprep.subr.mxu0 0.0
    %2383 = vmatpush1.msra.mxu0 0.0
    %2384 = vmatprep.subr.mxu0 0.0
    %2385 = vmatpush1.msra.mxu0 0.0
    %2386 = vmatprep.subr.mxu0 0.0
    %2387 = vmatpush1.msra.mxu0 0.0
    %2388 = vmatprep.subr.mxu0 0.0
    %2389 = vmatpush1.msra.mxu0 0.0
    %2390 = vmatprep.subr.mxu0 0.0
    %2391 = vmatpush1.msra.mxu0 0.0
    %2392 = vmatprep.subr.mxu0 0.0
    %2393 = vmatpush1.msra.mxu0 0.0
    %2394 = vmatprep.subr.mxu0 0.0
    %2395 = vmatpush1.msra.mxu0 0.0
    %2396 = vmatprep.subr.mxu0 0.0
    %2397 = vmatpush1.msra.mxu0 0.0
    %2398 = vmatprep.subr.mxu0 0.0
    %2399 = vmatpush1.msra.mxu0 0.0
    %2400 = vmatprep.subr.mxu0 0.0
    %2401 = vmatpush1.msra.mxu0 0.0
    %2402 = vmatprep.subr.mxu0 0.0
    %2403 = vmatpush1.msra.mxu0 0.0
    %2404 = vmatprep.subr.mxu0 0.0
    %2405 = vmatpush1.msra.mxu0 0.0
    %2406 = vmatprep.subr.mxu0 0.0
    %2407 = vmatpush1.msra.mxu0 0.0
    %2408 = vmatprep.subr.mxu0 0.0
    %2409 = vmatpush1.msra.mxu0 0.0
    %2410 = vmatprep.subr.mxu0 0.0
    %2411 = vmatpush1.msra.mxu0 0.0
    %2412 = vmatprep.subr.mxu0 0.0
    %2413 = vmatpush1.msra.mxu0 0.0
    %2414 = vmatprep.subr.mxu0 0.0
    %2415 = vmatpush1.msra.mxu0 0.0
    %2416 = vmatprep.subr.mxu0 0.0
    %2417 = vmatpush1.msra.mxu0 0.0
    %2418 = vmatprep.subr.mxu0 0.0
    %2419 = vmatpush1.msra.mxu0 0.0
    %2420 = vmatprep.subr.mxu0 0.0
    %2421 = vmatpush1.msra.mxu0 0.0
    %2422 = vmatprep.subr.mxu0 0.0
    %2423 = vmatpush1.msra.mxu0 0.0
    %2424 = vmatprep.subr.mxu0 0.0
    %2425 = vmatpush1.msra.mxu0 0.0
    %2426 = vmatprep.subr.mxu0 0.0
    %2427 = vmatpush1.msra.mxu0 0.0
    %2428 = vmatprep.subr.mxu0 0.0
    %2429 = vmatpush1.msra.mxu0 0.0
    %2430 = vmatprep.mubr.f32.mxu0 0.0
    %2431 = vmatmul.mubr.f32.gmra.mrb[0].mxu0 %v2349
    %v2432 = vpop.f32.mrb[0].mxu0
    %v2433 = vadd.f32 0.0, %v2432
    %v2434 = vpop.f32.mrb[0].mxu0
    %2435 = vmatprep.mubr.f32.mxu0 0.0
    %2436 = vmatmul.mubr.f32.gmra.mrb[0].mxu0 %v2352
    %v2437 = vpop.f32.mrb[0].mxu0
    %v2438 = vadd.f32 0.0, %v2437
    %v2439 = vpop.f32.mrb[0].mxu0
    %2440 = vmatprep.mubr.f32.mxu0 0.0
    %2441 = vmatmul.mubr.f32.gmra.mrb[0].mxu0 %v2355
    %v2442 = vpop.f32.mrb[0].mxu0
    %v2443 = vadd.f32 0.0, %v2442
    %v2444 = vpop.f32.mrb[0].mxu0
    %2445 = vmatprep.mubr.f32.mxu0 0.0
    %2446 = vmatmul.mubr.f32.gmra.mrb[0].mxu0 %v2358
    %v2447 = vpop.f32.mrb[0].mxu0
    %v2448 = vadd.f32 0.0, %v2447
    %v2449 = vpop.f32.mrb[0].mxu0
    %2450 = vmatprep.mubr.f32.mxu0 0.0
    %2451 = vmatmul.mubr.f32.gmra.mrb[0].mxu0 %v2361
    %v2452 = vpop.f32.mrb[0].mxu0
    %v2453 = vadd.f32 0.0, %v2452
    %v2454 = vpop.f32.mrb[0].mxu0
    %2455 = vmatprep.mubr.f32.mxu0 0.0
    %2456 = vmatmul.mubr.f32.gmra.mrb[0].mxu0 %v2364
    %v2457 = vpop.f32.mrb[0].mxu0
    %v2458 = vadd.f32 0.0, %v2457
    %v2459 = vpop.f32.mrb[0].mxu0
    %2460 = vdwg.mxu0
    %v2462 = vsel %vm374, %v971, 0
    %v2465 = vsel %vm374, %v1047, 0
    %v2468 = vsel %vm374, %v1123, 0
    %v2471 = vsel %vm374, %v1199, 0
    %v2474 = vsel %vm374, %v1275, 0
    %v2477 = vsel %vm374, %v1351, 0
    %2479 = vmatprep.subr.mxu0 0.0
    %2480 = vmatpush1.msra.mxu0 %v1354
    %2481 = vmatprep.subr.mxu0 0.0
    %2482 = vmatpush1.msra.mxu0 %v1355
    %2483 = vmatprep.subr.mxu0 0.0
    %2484 = vmatpush1.msra.mxu0 0.0
    %2485 = vmatprep.subr.mxu0 0.0
    %2486 = vmatpush1.msra.mxu0 0.0
    %2487 = vmatprep.subr.mxu0 0.0
    %2488 = vmatpush1.msra.mxu0 0.0
    %2489 = vmatprep.subr.mxu0 0.0
    %2490 = vmatpush1.msra.mxu0 0.0
    %2491 = vmatprep.subr.mxu0 0.0
    %2492 = vmatpush1.msra.mxu0 0.0
    %2493 = vmatprep.subr.mxu0 0.0
    %2494 = vmatpush1.msra.mxu0 0.0
    %2495 = vmatprep.subr.mxu0 0.0
    %2496 = vmatpush1.msra.mxu0 0.0
    %2497 = vmatprep.subr.mxu0 0.0
    %2498 = vmatpush1.msra.mxu0 0.0
    %2499 = vmatprep.subr.mxu0 0.0
    %2500 = vmatpush1.msra.mxu0 0.0
    %2501 = vmatprep.subr.mxu0 0.0
    %2502 = vmatpush1.msra.mxu0 0.0
    %2503 = vmatprep.subr.mxu0 0.0
    %2504 = vmatpush1.msra.mxu0 0.0
    %2505 = vmatprep.subr.mxu0 0.0
    %2506 = vmatpush1.msra.mxu0 0.0
    %2507 = vmatprep.subr.mxu0 0.0
    %2508 = vmatpush1.msra.mxu0 0.0
    %2509 = vmatprep.subr.mxu0 0.0
    %2510 = vmatpush1.msra.mxu0 0.0
    %2511 = vmatprep.subr.mxu0 0.0
    %2512 = vmatpush1.msra.mxu0 0.0
    %2513 = vmatprep.subr.mxu0 0.0
    %2514 = vmatpush1.msra.mxu0 0.0
    %2515 = vmatprep.subr.mxu0 0.0
    %2516 = vmatpush1.msra.mxu0 0.0
    %2517 = vmatprep.subr.mxu0 0.0
    %2518 = vmatpush1.msra.mxu0 0.0
    %2519 = vmatprep.subr.mxu0 0.0
    %2520 = vmatpush1.msra.mxu0 0.0
    %2521 = vmatprep.subr.mxu0 0.0
    %2522 = vmatpush1.msra.mxu0 0.0
    %2523 = vmatprep.subr.mxu0 0.0
    %2524 = vmatpush1.msra.mxu0 0.0
    %2525 = vmatprep.subr.mxu0 0.0
    %2526 = vmatpush1.msra.mxu0 0.0
    %2527 = vmatprep.subr.mxu0 0.0
    %2528 = vmatpush1.msra.mxu0 0.0
    %2529 = vmatprep.subr.mxu0 0.0
    %2530 = vmatpush1.msra.mxu0 0.0
    %2531 = vmatprep.subr.mxu0 0.0
    %2532 = vmatpush1.msra.mxu0 0.0
    %2533 = vmatprep.subr.mxu0 0.0
    %2534 = vmatpush1.msra.mxu0 0.0
    %2535 = vmatprep.subr.mxu0 0.0
    %2536 = vmatpush1.msra.mxu0 0.0
    %2537 = vmatprep.subr.mxu0 0.0
    %2538 = vmatpush1.msra.mxu0 0.0
    %2539 = vmatprep.subr.mxu0 0.0
    %2540 = vmatpush1.msra.mxu0 0.0
    %2541 = vmatprep.subr.mxu0 0.0
    %2542 = vmatpush1.msra.mxu0 0.0
    %2543 = vmatprep.mubr.f32.mxu0 0.0
    %2544 = vmatmul.mubr.f32.gmra.mrb[0].mxu0 %v2462
    %v2545 = vpop.f32.mrb[0].mxu0
    %v2546 = vadd.f32 %v2433, %v2545
    %v2547 = vpop.f32.mrb[0].mxu0
    %2548 = vmatprep.mubr.f32.mxu0 0.0
    %2549 = vmatmul.mubr.f32.gmra.mrb[0].mxu0 %v2465
    %v2550 = vpop.f32.mrb[0].mxu0
    %v2551 = vadd.f32 %v2438, %v2550
    %v2552 = vpop.f32.mrb[0].mxu0
    %2553 = vmatprep.mubr.f32.mxu0 0.0
    %2554 = vmatmul.mubr.f32.gmra.mrb[0].mxu0 %v2468
    %v2555 = vpop.f32.mrb[0].mxu0
    %v2556 = vadd.f32 %v2443, %v2555
    %v2557 = vpop.f32.mrb[0].mxu0
    %2558 = vmatprep.mubr.f32.mxu0 0.0
    %2559 = vmatmul.mubr.f32.gmra.mrb[0].mxu0 %v2471
    %v2560 = vpop.f32.mrb[0].mxu0
    %v2561 = vadd.f32 %v2448, %v2560
    %v2562 = vpop.f32.mrb[0].mxu0
    %2563 = vmatprep.mubr.f32.mxu0 0.0
    %2564 = vmatmul.mubr.f32.gmra.mrb[0].mxu0 %v2474
    %v2565 = vpop.f32.mrb[0].mxu0
    %v2566 = vadd.f32 %v2453, %v2565
    %v2567 = vpop.f32.mrb[0].mxu0
    %2568 = vmatprep.mubr.f32.mxu0 0.0
    %2569 = vmatmul.mubr.f32.gmra.mrb[0].mxu0 %v2477
    %v2570 = vpop.f32.mrb[0].mxu0
    %v2571 = vadd.f32 %v2458, %v2570
    %v2572 = vpop.f32.mrb[0].mxu0
    %2573 = vdwg.mxu0
    %2574 = vrot.lane.b32.xlu0 %v130, 96
    %v2575 = vpop.permute.xlu0 %2574
    %2576 = vrot.lane.b32.xlu0 %v276, 96
    %v2577 = vpop.permute.xlu0 %2576
    %v2578 = vsel %vm374, %v2575, 0
    %v2580 = vsel %vm374, %v2577, 0
    %2582 = vmatprep.subr.mxu0 0.0
    %2583 = vmatpush1.xpose.msra.mxu0 %v2580
    %2584 = vmatprep.subr.mxu0 0.0
    %2585 = vmatpush1.xpose.msra.mxu0 0.0
    %2586 = vmatprep.subr.mxu0 0.0
    %2587 = vmatpush1.xpose.msra.mxu0 0.0
    %2588 = vmatprep.subr.mxu0 0.0
    %2589 = vmatpush1.xpose.msra.mxu0 0.0
    %2590 = vmatprep.subr.mxu0 0.0
    %2591 = vmatpush1.xpose.msra.mxu0 0.0
    %2592 = vmatprep.subr.mxu0 0.0
    %2593 = vmatpush1.xpose.msra.mxu0 0.0
    %2594 = vmatprep.subr.mxu0 0.0
    %2595 = vmatpush1.xpose.msra.mxu0 0.0
    %2596 = vmatprep.subr.mxu0 0.0
    %2597 = vmatpush1.xpose.msra.mxu0 0.0
    %2598 = vmatprep.subr.mxu0 0.0
    %2599 = vmatpush1.xpose.msra.mxu0 0.0
    %2600 = vmatprep.subr.mxu0 0.0
    %2601 = vmatpush1.xpose.msra.mxu0 0.0
    %2602 = vmatprep.subr.mxu0 0.0
    %2603 = vmatpush1.xpose.msra.mxu0 0.0
    %2604 = vmatprep.subr.mxu0 0.0
    %2605 = vmatpush1.xpose.msra.mxu0 0.0
    %2606 = vmatprep.subr.mxu0 0.0
    %2607 = vmatpush1.xpose.msra.mxu0 0.0
    %2608 = vmatprep.subr.mxu0 0.0
    %2609 = vmatpush1.xpose.msra.mxu0 0.0
    %2610 = vmatprep.subr.mxu0 0.0
    %2611 = vmatpush1.xpose.msra.mxu0 0.0
    %2612 = vmatprep.subr.mxu0 0.0
    %2613 = vmatpush1.xpose.msra.mxu0 0.0
    %2614 = vmatprep.subr.mxu0 0.0
    %2615 = vmatpush1.xpose.msra.mxu0 0.0
    %2616 = vmatprep.subr.mxu0 0.0
    %2617 = vmatpush1.xpose.msra.mxu0 0.0
    %2618 = vmatprep.subr.mxu0 0.0
    %2619 = vmatpush1.xpose.msra.mxu0 0.0
    %2620 = vmatprep.subr.mxu0 0.0
    %2621 = vmatpush1.xpose.msra.mxu0 0.0
    %2622 = vmatprep.subr.mxu0 0.0
    %2623 = vmatpush1.xpose.msra.mxu0 0.0
    %2624 = vmatprep.subr.mxu0 0.0
    %2625 = vmatpush1.xpose.msra.mxu0 0.0
    %2626 = vmatprep.subr.mxu0 0.0
    %2627 = vmatpush1.xpose.msra.mxu0 0.0
    %2628 = vmatprep.subr.mxu0 0.0
    %2629 = vmatpush1.xpose.msra.mxu0 0.0
    %2630 = vmatprep.subr.mxu0 0.0
    %2631 = vmatpush1.xpose.msra.mxu0 0.0
    %2632 = vmatprep.subr.mxu0 0.0
    %2633 = vmatpush1.xpose.msra.mxu0 0.0
    %2634 = vmatprep.subr.mxu0 0.0
    %2635 = vmatpush1.xpose.msra.mxu0 0.0
    %2636 = vmatprep.subr.mxu0 0.0
    %2637 = vmatpush1.xpose.msra.mxu0 0.0
    %2638 = vmatprep.subr.mxu0 0.0
    %2639 = vmatpush1.xpose.msra.mxu0 0.0
    %2640 = vmatprep.subr.mxu0 0.0
    %2641 = vmatpush1.xpose.msra.mxu0 0.0
    %2642 = vmatprep.subr.mxu0 0.0
    %2643 = vmatpush1.xpose.msra.mxu0 0.0
    %2644 = vmatprep.subr.mxu0 0.0
    %2645 = vmatpush1.xpose.msra.mxu0 0.0
    %2646 = vmatprep.mubr.f32.mxu0 0.0
    %2647 = vmatmul.mubr.f32.gmra.mrb[0].mxu0 %v2578
    %v2648 = vpop.f32.mrb[0].mxu0
    %v2649 = vadd.f32 %v352, %v2648
    %v2650 = vpop.f32.mrb[0].mxu0
    %2651 = vdwg.mxu0
    %2652 = vrot.lane.b32.xlu0 %v135, 96
    %v2653 = vpop.permute.xlu0 %2652
    %2654 = vrot.lane.b32.xlu0 %v281, 96
    %v2655 = vpop.permute.xlu0 %2654
    %v2656 = vsel %vm374, %v2653, 0
    %v2658 = vsel %vm374, %v2655, 0
    %2660 = vmatprep.subr.mxu0 0.0
    %2661 = vmatpush1.xpose.msra.mxu0 %v2658
    %2662 = vmatprep.subr.mxu0 0.0
    %2663 = vmatpush1.xpose.msra.mxu0 0.0
    %2664 = vmatprep.subr.mxu0 0.0
    %2665 = vmatpush1.xpose.msra.mxu0 0.0
    %2666 = vmatprep.subr.mxu0 0.0
    %2667 = vmatpush1.xpose.msra.mxu0 0.0
    %2668 = vmatprep.subr.mxu0 0.0
    %2669 = vmatpush1.xpose.msra.mxu0 0.0
    %2670 = vmatprep.subr.mxu0 0.0
    %2671 = vmatpush1.xpose.msra.mxu0 0.0
    %2672 = vmatprep.subr.mxu0 0.0
    %2673 = vmatpush1.xpose.msra.mxu0 0.0
    %2674 = vmatprep.subr.mxu0 0.0
    %2675 = vmatpush1.xpose.msra.mxu0 0.0
    %2676 = vmatprep.subr.mxu0 0.0
    %2677 = vmatpush1.xpose.msra.mxu0 0.0
    %2678 = vmatprep.subr.mxu0 0.0
    %2679 = vmatpush1.xpose.msra.mxu0 0.0
    %2680 = vmatprep.subr.mxu0 0.0
    %2681 = vmatpush1.xpose.msra.mxu0 0.0
    %2682 = vmatprep.subr.mxu0 0.0
    %2683 = vmatpush1.xpose.msra.mxu0 0.0
    %2684 = vmatprep.subr.mxu0 0.0
    %2685 = vmatpush1.xpose.msra.mxu0 0.0
    %2686 = vmatprep.subr.mxu0 0.0
    %2687 = vmatpush1.xpose.msra.mxu0 0.0
    %2688 = vmatprep.subr.mxu0 0.0
    %2689 = vmatpush1.xpose.msra.mxu0 0.0
    %2690 = vmatprep.subr.mxu0 0.0
    %2691 = vmatpush1.xpose.msra.mxu0 0.0
    %2692 = vmatprep.subr.mxu0 0.0
    %2693 = vmatpush1.xpose.msra.mxu0 0.0
    %2694 = vmatprep.subr.mxu0 0.0
    %2695 = vmatpush1.xpose.msra.mxu0 0.0
    %2696 = vmatprep.subr.mxu0 0.0
    %2697 = vmatpush1.xpose.msra.mxu0 0.0
    %2698 = vmatprep.subr.mxu0 0.0
    %2699 = vmatpush1.xpose.msra.mxu0 0.0
    %2700 = vmatprep.subr.mxu0 0.0
    %2701 = vmatpush1.xpose.msra.mxu0 0.0
    %2702 = vmatprep.subr.mxu0 0.0
    %2703 = vmatpush1.xpose.msra.mxu0 0.0
    %2704 = vmatprep.subr.mxu0 0.0
    %2705 = vmatpush1.xpose.msra.mxu0 0.0
    %2706 = vmatprep.subr.mxu0 0.0
    %2707 = vmatpush1.xpose.msra.mxu0 0.0
    %2708 = vmatprep.subr.mxu0 0.0
    %2709 = vmatpush1.xpose.msra.mxu0 0.0
    %2710 = vmatprep.subr.mxu0 0.0
    %2711 = vmatpush1.xpose.msra.mxu0 0.0
    %2712 = vmatprep.subr.mxu0 0.0
    %2713 = vmatpush1.xpose.msra.mxu0 0.0
    %2714 = vmatprep.subr.mxu0 0.0
    %2715 = vmatpush1.xpose.msra.mxu0 0.0
    %2716 = vmatprep.subr.mxu0 0.0
    %2717 = vmatpush1.xpose.msra.mxu0 0.0
    %2718 = vmatprep.subr.mxu0 0.0
    %2719 = vmatpush1.xpose.msra.mxu0 0.0
    %2720 = vmatprep.subr.mxu0 0.0
    %2721 = vmatpush1.xpose.msra.mxu0 0.0
    %2722 = vmatprep.subr.mxu0 0.0
    %2723 = vmatpush1.xpose.msra.mxu0 0.0
    %2724 = vmatprep.mubr.f32.mxu0 0.0
    %2725 = vmatmul.mubr.f32.gmra.mrb[0].mxu0 %v2656
    %v2726 = vpop.f32.mrb[0].mxu0
    %v2727 = vadd.f32 %v356, %v2726
    %v2728 = vpop.f32.mrb[0].mxu0
    %2729 = vdwg.mxu0
    %2730 = vrot.lane.b32.xlu0 %v140, 96
    %v2731 = vpop.permute.xlu0 %2730
    %2732 = vrot.lane.b32.xlu0 %v286, 96
    %v2733 = vpop.permute.xlu0 %2732
    %v2734 = vsel %vm374, %v2731, 0
    %v2736 = vsel %vm374, %v2733, 0
    %2738 = vmatprep.subr.mxu0 0.0
    %2739 = vmatpush1.xpose.msra.mxu0 %v2736
    %2740 = vmatprep.subr.mxu0 0.0
    %2741 = vmatpush1.xpose.msra.mxu0 0.0
    %2742 = vmatprep.subr.mxu0 0.0
    %2743 = vmatpush1.xpose.msra.mxu0 0.0
    %2744 = vmatprep.subr.mxu0 0.0
    %2745 = vmatpush1.xpose.msra.mxu0 0.0
    %2746 = vmatprep.subr.mxu0 0.0
    %2747 = vmatpush1.xpose.msra.mxu0 0.0
    %2748 = vmatprep.subr.mxu0 0.0
    %2749 = vmatpush1.xpose.msra.mxu0 0.0
    %2750 = vmatprep.subr.mxu0 0.0
    %2751 = vmatpush1.xpose.msra.mxu0 0.0
    %2752 = vmatprep.subr.mxu0 0.0
    %2753 = vmatpush1.xpose.msra.mxu0 0.0
    %2754 = vmatprep.subr.mxu0 0.0
    %2755 = vmatpush1.xpose.msra.mxu0 0.0
    %2756 = vmatprep.subr.mxu0 0.0
    %2757 = vmatpush1.xpose.msra.mxu0 0.0
    %2758 = vmatprep.subr.mxu0 0.0
    %2759 = vmatpush1.xpose.msra.mxu0 0.0
    %2760 = vmatprep.subr.mxu0 0.0
    %2761 = vmatpush1.xpose.msra.mxu0 0.0
    %2762 = vmatprep.subr.mxu0 0.0
    %2763 = vmatpush1.xpose.msra.mxu0 0.0
    %2764 = vmatprep.subr.mxu0 0.0
    %2765 = vmatpush1.xpose.msra.mxu0 0.0
    %2766 = vmatprep.subr.mxu0 0.0
    %2767 = vmatpush1.xpose.msra.mxu0 0.0
    %2768 = vmatprep.subr.mxu0 0.0
    %2769 = vmatpush1.xpose.msra.mxu0 0.0
    %2770 = vmatprep.subr.mxu0 0.0
    %2771 = vmatpush1.xpose.msra.mxu0 0.0
    %2772 = vmatprep.subr.mxu0 0.0
    %2773 = vmatpush1.xpose.msra.mxu0 0.0
    %2774 = vmatprep.subr.mxu0 0.0
    %2775 = vmatpush1.xpose.msra.mxu0 0.0
    %2776 = vmatprep.subr.mxu0 0.0
    %2777 = vmatpush1.xpose.msra.mxu0 0.0
    %2778 = vmatprep.subr.mxu0 0.0
    %2779 = vmatpush1.xpose.msra.mxu0 0.0
    %2780 = vmatprep.subr.mxu0 0.0
    %2781 = vmatpush1.xpose.msra.mxu0 0.0
    %2782 = vmatprep.subr.mxu0 0.0
    %2783 = vmatpush1.xpose.msra.mxu0 0.0
    %2784 = vmatprep.subr.mxu0 0.0
    %2785 = vmatpush1.xpose.msra.mxu0 0.0
    %2786 = vmatprep.subr.mxu0 0.0
    %2787 = vmatpush1.xpose.msra.mxu0 0.0
    %2788 = vmatprep.subr.mxu0 0.0
    %2789 = vmatpush1.xpose.msra.mxu0 0.0
    %2790 = vmatprep.subr.mxu0 0.0
    %2791 = vmatpush1.xpose.msra.mxu0 0.0
    %2792 = vmatprep.subr.mxu0 0.0
    %2793 = vmatpush1.xpose.msra.mxu0 0.0
    %2794 = vmatprep.subr.mxu0 0.0
    %2795 = vmatpush1.xpose.msra.mxu0 0.0
    %2796 = vmatprep.subr.mxu0 0.0
    %2797 = vmatpush1.xpose.msra.mxu0 0.0
    %2798 = vmatprep.subr.mxu0 0.0
    %2799 = vmatpush1.xpose.msra.mxu0 0.0
    %2800 = vmatprep.subr.mxu0 0.0
    %2801 = vmatpush1.xpose.msra.mxu0 0.0
    %2802 = vmatprep.mubr.f32.mxu0 0.0
    %2803 = vmatmul.mubr.f32.gmra.mrb[0].mxu0 %v2734
    %v2804 = vpop.f32.mrb[0].mxu0
    %v2805 = vadd.f32 %v360, %v2804
    %v2806 = vpop.f32.mrb[0].mxu0
    %2807 = vdwg.mxu0
    %2808 = vrot.lane.b32.xlu0 %v145, 96
    %v2809 = vpop.permute.xlu0 %2808
    %2810 = vrot.lane.b32.xlu0 %v291, 96
    %v2811 = vpop.permute.xlu0 %2810
    %v2812 = vsel %vm374, %v2809, 0
    %v2814 = vsel %vm374, %v2811, 0
    %2816 = vmatprep.subr.mxu0 0.0
    %2817 = vmatpush1.xpose.msra.mxu0 %v2814
    %2818 = vmatprep.subr.mxu0 0.0
    %2819 = vmatpush1.xpose.msra.mxu0 0.0
    %2820 = vmatprep.subr.mxu0 0.0
    %2821 = vmatpush1.xpose.msra.mxu0 0.0
    %2822 = vmatprep.subr.mxu0 0.0
    %2823 = vmatpush1.xpose.msra.mxu0 0.0
    %2824 = vmatprep.subr.mxu0 0.0
    %2825 = vmatpush1.xpose.msra.mxu0 0.0
    %2826 = vmatprep.subr.mxu0 0.0
    %2827 = vmatpush1.xpose.msra.mxu0 0.0
    %2828 = vmatprep.subr.mxu0 0.0
    %2829 = vmatpush1.xpose.msra.mxu0 0.0
    %2830 = vmatprep.subr.mxu0 0.0
    %2831 = vmatpush1.xpose.msra.mxu0 0.0
    %2832 = vmatprep.subr.mxu0 0.0
    %2833 = vmatpush1.xpose.msra.mxu0 0.0
    %2834 = vmatprep.subr.mxu0 0.0
    %2835 = vmatpush1.xpose.msra.mxu0 0.0
    %2836 = vmatprep.subr.mxu0 0.0
    %2837 = vmatpush1.xpose.msra.mxu0 0.0
    %2838 = vmatprep.subr.mxu0 0.0
    %2839 = vmatpush1.xpose.msra.mxu0 0.0
    %2840 = vmatprep.subr.mxu0 0.0
    %2841 = vmatpush1.xpose.msra.mxu0 0.0
    %2842 = vmatprep.subr.mxu0 0.0
    %2843 = vmatpush1.xpose.msra.mxu0 0.0
    %2844 = vmatprep.subr.mxu0 0.0
    %2845 = vmatpush1.xpose.msra.mxu0 0.0
    %2846 = vmatprep.subr.mxu0 0.0
    %2847 = vmatpush1.xpose.msra.mxu0 0.0
    %2848 = vmatprep.subr.mxu0 0.0
    %2849 = vmatpush1.xpose.msra.mxu0 0.0
    %2850 = vmatprep.subr.mxu0 0.0
    %2851 = vmatpush1.xpose.msra.mxu0 0.0
    %2852 = vmatprep.subr.mxu0 0.0
    %2853 = vmatpush1.xpose.msra.mxu0 0.0
    %2854 = vmatprep.subr.mxu0 0.0
    %2855 = vmatpush1.xpose.msra.mxu0 0.0
    %2856 = vmatprep.subr.mxu0 0.0
    %2857 = vmatpush1.xpose.msra.mxu0 0.0
    %2858 = vmatprep.subr.mxu0 0.0
    %2859 = vmatpush1.xpose.msra.mxu0 0.0
    %2860 = vmatprep.subr.mxu0 0.0
    %2861 = vmatpush1.xpose.msra.mxu0 0.0
    %2862 = vmatprep.subr.mxu0 0.0
    %2863 = vmatpush1.xpose.msra.mxu0 0.0
    %2864 = vmatprep.subr.mxu0 0.0
    %2865 = vmatpush1.xpose.msra.mxu0 0.0
    %2866 = vmatprep.subr.mxu0 0.0
    %2867 = vmatpush1.xpose.msra.mxu0 0.0
    %2868 = vmatprep.subr.mxu0 0.0
    %2869 = vmatpush1.xpose.msra.mxu0 0.0
    %2870 = vmatprep.subr.mxu0 0.0
    %2871 = vmatpush1.xpose.msra.mxu0 0.0
    %2872 = vmatprep.subr.mxu0 0.0
    %2873 = vmatpush1.xpose.msra.mxu0 0.0
    %2874 = vmatprep.subr.mxu0 0.0
    %2875 = vmatpush1.xpose.msra.mxu0 0.0
    %2876 = vmatprep.subr.mxu0 0.0
    %2877 = vmatpush1.xpose.msra.mxu0 0.0
    %2878 = vmatprep.subr.mxu0 0.0
    %2879 = vmatpush1.xpose.msra.mxu0 0.0
    %2880 = vmatprep.mubr.f32.mxu0 0.0
    %2881 = vmatmul.mubr.f32.gmra.mrb[0].mxu0 %v2812
    %v2882 = vpop.f32.mrb[0].mxu0
    %v2883 = vadd.f32 %v364, %v2882
    %v2884 = vpop.f32.mrb[0].mxu0
    %2885 = vdwg.mxu0
    %2886 = vrot.lane.b32.xlu0 %v150, 96
    %v2887 = vpop.permute.xlu0 %2886
    %2888 = vrot.lane.b32.xlu0 %v296, 96
    %v2889 = vpop.permute.xlu0 %2888
    %v2890 = vsel %vm374, %v2887, 0
    %v2892 = vsel %vm374, %v2889, 0
    %2894 = vmatprep.subr.mxu0 0.0
    %2895 = vmatpush1.xpose.msra.mxu0 %v2892
    %2896 = vmatprep.subr.mxu0 0.0
    %2897 = vmatpush1.xpose.msra.mxu0 0.0
    %2898 = vmatprep.subr.mxu0 0.0
    %2899 = vmatpush1.xpose.msra.mxu0 0.0
    %2900 = vmatprep.subr.mxu0 0.0
    %2901 = vmatpush1.xpose.msra.mxu0 0.0
    %2902 = vmatprep.subr.mxu0 0.0
    %2903 = vmatpush1.xpose.msra.mxu0 0.0
    %2904 = vmatprep.subr.mxu0 0.0
    %2905 = vmatpush1.xpose.msra.mxu0 0.0
    %2906 = vmatprep.subr.mxu0 0.0
    %2907 = vmatpush1.xpose.msra.mxu0 0.0
    %2908 = vmatprep.subr.mxu0 0.0
    %2909 = vmatpush1.xpose.msra.mxu0 0.0
    %2910 = vmatprep.subr.mxu0 0.0
    %2911 = vmatpush1.xpose.msra.mxu0 0.0
    %2912 = vmatprep.subr.mxu0 0.0
    %2913 = vmatpush1.xpose.msra.mxu0 0.0
    %2914 = vmatprep.subr.mxu0 0.0
    %2915 = vmatpush1.xpose.msra.mxu0 0.0
    %2916 = vmatprep.subr.mxu0 0.0
    %2917 = vmatpush1.xpose.msra.mxu0 0.0
    %2918 = vmatprep.subr.mxu0 0.0
    %2919 = vmatpush1.xpose.msra.mxu0 0.0
    %2920 = vmatprep.subr.mxu0 0.0
    %2921 = vmatpush1.xpose.msra.mxu0 0.0
    %2922 = vmatprep.subr.mxu0 0.0
    %2923 = vmatpush1.xpose.msra.mxu0 0.0
    %2924 = vmatprep.subr.mxu0 0.0
    %2925 = vmatpush1.xpose.msra.mxu0 0.0
    %2926 = vmatprep.subr.mxu0 0.0
    %2927 = vmatpush1.xpose.msra.mxu0 0.0
    %2928 = vmatprep.subr.mxu0 0.0
    %2929 = vmatpush1.xpose.msra.mxu0 0.0
    %2930 = vmatprep.subr.mxu0 0.0
    %2931 = vmatpush1.xpose.msra.mxu0 0.0
    %2932 = vmatprep.subr.mxu0 0.0
    %2933 = vmatpush1.xpose.msra.mxu0 0.0
    %2934 = vmatprep.subr.mxu0 0.0
    %2935 = vmatpush1.xpose.msra.mxu0 0.0
    %2936 = vmatprep.subr.mxu0 0.0
    %2937 = vmatpush1.xpose.msra.mxu0 0.0
    %2938 = vmatprep.subr.mxu0 0.0
    %2939 = vmatpush1.xpose.msra.mxu0 0.0
    %2940 = vmatprep.subr.mxu0 0.0
    %2941 = vmatpush1.xpose.msra.mxu0 0.0
    %2942 = vmatprep.subr.mxu0 0.0
    %2943 = vmatpush1.xpose.msra.mxu0 0.0
    %2944 = vmatprep.subr.mxu0 0.0
    %2945 = vmatpush1.xpose.msra.mxu0 0.0
    %2946 = vmatprep.subr.mxu0 0.0
    %2947 = vmatpush1.xpose.msra.mxu0 0.0
    %2948 = vmatprep.subr.mxu0 0.0
    %2949 = vmatpush1.xpose.msra.mxu0 0.0
    %2950 = vmatprep.subr.mxu0 0.0
    %2951 = vmatpush1.xpose.msra.mxu0 0.0
    %2952 = vmatprep.subr.mxu0 0.0
    %2953 = vmatpush1.xpose.msra.mxu0 0.0
    %2954 = vmatprep.subr.mxu0 0.0
    %2955 = vmatpush1.xpose.msra.mxu0 0.0
    %2956 = vmatprep.subr.mxu0 0.0
    %2957 = vmatpush1.xpose.msra.mxu0 0.0
    %2958 = vmatprep.mubr.f32.mxu0 0.0
    %2959 = vmatmul.mubr.f32.gmra.mrb[0].mxu0 %v2890
    %v2960 = vpop.f32.mrb[0].mxu0
    %v2961 = vadd.f32 %v368, %v2960
    %v2962 = vpop.f32.mrb[0].mxu0
    %2963 = vdwg.mxu0
    %2964 = vrot.lane.b32.xlu0 %v155, 96
    %v2965 = vpop.permute.xlu0 %2964
    %2966 = vrot.lane.b32.xlu0 %v301, 96
    %v2967 = vpop.permute.xlu0 %2966
    %v2968 = vsel %vm374, %v2965, 0
    %v2970 = vsel %vm374, %v2967, 0
    %2972 = vmatprep.subr.mxu0 0.0
    %2973 = vmatpush1.xpose.msra.mxu0 %v2970
    %2974 = vmatprep.subr.mxu0 0.0
    %2975 = vmatpush1.xpose.msra.mxu0 0.0
    %2976 = vmatprep.subr.mxu0 0.0
    %2977 = vmatpush1.xpose.msra.mxu0 0.0
    %2978 = vmatprep.subr.mxu0 0.0
    %2979 = vmatpush1.xpose.msra.mxu0 0.0
    %2980 = vmatprep.subr.mxu0 0.0
    %2981 = vmatpush1.xpose.msra.mxu0 0.0
    %2982 = vmatprep.subr.mxu0 0.0
    %2983 = vmatpush1.xpose.msra.mxu0 0.0
    %2984 = vmatprep.subr.mxu0 0.0
    %2985 = vmatpush1.xpose.msra.mxu0 0.0
    %2986 = vmatprep.subr.mxu0 0.0
    %2987 = vmatpush1.xpose.msra.mxu0 0.0
    %2988 = vmatprep.subr.mxu0 0.0
    %2989 = vmatpush1.xpose.msra.mxu0 0.0
    %2990 = vmatprep.subr.mxu0 0.0
    %2991 = vmatpush1.xpose.msra.mxu0 0.0
    %2992 = vmatprep.subr.mxu0 0.0
    %2993 = vmatpush1.xpose.msra.mxu0 0.0
    %2994 = vmatprep.subr.mxu0 0.0
    %2995 = vmatpush1.xpose.msra.mxu0 0.0
    %2996 = vmatprep.subr.mxu0 0.0
    %2997 = vmatpush1.xpose.msra.mxu0 0.0
    %2998 = vmatprep.subr.mxu0 0.0
    %2999 = vmatpush1.xpose.msra.mxu0 0.0
    %3000 = vmatprep.subr.mxu0 0.0
    %3001 = vmatpush1.xpose.msra.mxu0 0.0
    %3002 = vmatprep.subr.mxu0 0.0
    %3003 = vmatpush1.xpose.msra.mxu0 0.0
    %3004 = vmatprep.subr.mxu0 0.0
    %3005 = vmatpush1.xpose.msra.mxu0 0.0
    %3006 = vmatprep.subr.mxu0 0.0
    %3007 = vmatpush1.xpose.msra.mxu0 0.0
    %3008 = vmatprep.subr.mxu0 0.0
    %3009 = vmatpush1.xpose.msra.mxu0 0.0
    %3010 = vmatprep.subr.mxu0 0.0
    %3011 = vmatpush1.xpose.msra.mxu0 0.0
    %3012 = vmatprep.subr.mxu0 0.0
    %3013 = vmatpush1.xpose.msra.mxu0 0.0
    %3014 = vmatprep.subr.mxu0 0.0
    %3015 = vmatpush1.xpose.msra.mxu0 0.0
    %3016 = vmatprep.subr.mxu0 0.0
    %3017 = vmatpush1.xpose.msra.mxu0 0.0
    %3018 = vmatprep.subr.mxu0 0.0
    %3019 = vmatpush1.xpose.msra.mxu0 0.0
    %3020 = vmatprep.subr.mxu0 0.0
    %3021 = vmatpush1.xpose.msra.mxu0 0.0
    %3022 = vmatprep.subr.mxu0 0.0
    %3023 = vmatpush1.xpose.msra.mxu0 0.0
    %3024 = vmatprep.subr.mxu0 0.0
    %3025 = vmatpush1.xpose.msra.mxu0 0.0
    %3026 = vmatprep.subr.mxu0 0.0
    %3027 = vmatpush1.xpose.msra.mxu0 0.0
    %3028 = vmatprep.subr.mxu0 0.0
    %3029 = vmatpush1.xpose.msra.mxu0 0.0
    %3030 = vmatprep.subr.mxu0 0.0
    %3031 = vmatpush1.xpose.msra.mxu0 0.0
    %3032 = vmatprep.subr.mxu0 0.0
    %3033 = vmatpush1.xpose.msra.mxu0 0.0
    %3034 = vmatprep.subr.mxu0 0.0
    %3035 = vmatpush1.xpose.msra.mxu0 0.0
    %3036 = vmatprep.mubr.f32.mxu0 0.0
    %3037 = vmatmul.mubr.f32.gmra.mrb[0].mxu0 %v2968
    %v3038 = vpop.f32.mrb[0].mxu0
    %v3039 = vadd.f32 %v372, %v3038
    %v3040 = vpop.f32.mrb[0].mxu0
    %3041 = vdwg.mxu0
    %v3042 = vsel %vm831, %v2649, -inf
    %3043 = vmax.xlane.f32.xlu0 %v3042
    %v3044 = vpop.xlane.xlu0 %3043
    %v3045 = vsel %vm831, %v2727, -inf
    %3046 = vmax.xlane.f32.xlu0 %v3045
    %v3047 = vpop.xlane.xlu0 %3046
    %v3048 = vsel %vm831, %v2805, -inf
    %3049 = vmax.xlane.f32.xlu0 %v3048
    %v3050 = vpop.xlane.xlu0 %3049
    %v3051 = vsel %vm831, %v2883, -inf
    %3052 = vmax.xlane.f32.xlu0 %v3051
    %v3053 = vpop.xlane.xlu0 %3052
    %v3054 = vsel %vm831, %v2961, -inf
    %3055 = vmax.xlane.f32.xlu0 %v3054
    %v3056 = vpop.xlane.xlu0 %3055
    %v3057 = vsel %vm831, %v3039, -inf
    %3058 = vmax.xlane.f32.xlu0 %v3057
    %v3059 = vpop.xlane.xlu0 %3058
    %v3060 = vsub.f32 %v2649, %v3044
    %v3061 = vsub.f32 %v2727, %v3047
    %v3062 = vsub.f32 %v2805, %v3050
    %v3063 = vsub.f32 %v2883, %v3053
    %v3064 = vsub.f32 %v2961, %v3056
    %v3065 = vsub.f32 %v3039, %v3059
    %v3066 = vmul.f32 %v3060, 1.442695
    %v3067 = vpow.pop %v3066
    %v3068 = vmul.f32 %v3061, 1.442695
    %v3069 = vpow.pop %v3068
    %v3070 = vmul.f32 %v3062, 1.442695
    %v3071 = vpow.pop %v3070
    %v3072 = vmul.f32 %v3063, 1.442695
    %v3073 = vpow.pop %v3072
    %v3074 = vmul.f32 %v3064, 1.442695
    %v3075 = vpow.pop %v3074
    %v3076 = vmul.f32 %v3065, 1.442695
    %v3077 = vpow.pop %v3076
    %v3078 = vsel %vm831, %v3067, 0.0
    %3079 = vadd.xlane.f32.xlu0 %v3078
    %v3080 = vpop.xlane.xlu0 %3079
    %v3081 = vsel %vm831, %v3069, 0.0
    %3082 = vadd.xlane.f32.xlu0 %v3081
    %v3083 = vpop.xlane.xlu0 %3082
    %v3084 = vsel %vm831, %v3071, 0.0
    %3085 = vadd.xlane.f32.xlu0 %v3084
    %v3086 = vpop.xlane.xlu0 %3085
    %v3087 = vsel %vm831, %v3073, 0.0
    %3088 = vadd.xlane.f32.xlu0 %v3087
    %v3089 = vpop.xlane.xlu0 %3088
    %v3090 = vsel %vm831, %v3075, 0.0
    %3091 = vadd.xlane.f32.xlu0 %v3090
    %v3092 = vpop.xlane.xlu0 %3091
    %v3093 = vsel %vm831, %v3077, 0.0
    %3094 = vadd.xlane.f32.xlu0 %v3093
    %v3095 = vpop.xlane.xlu0 %3094
    %v3096 = vrcp.pop %v3080
    %v3097 = vrcp.pop %v3083
    %v3098 = vrcp.pop %v3086
    %v3099 = vrcp.pop %v3089
    %v3100 = vrcp.pop %v3092
    %v3101 = vrcp.pop %v3095
    %v3102 = vmul.f32 %v3067, %v3096
    %v3103 = vmul.f32 %v3069, %v3097
    %v3104 = vmul.f32 %v3071, %v3098
    %v3105 = vmul.f32 %v3073, %v3099
    %v3106 = vmul.f32 %v3075, %v3100
    %v3107 = vmul.f32 %v3077, %v3101
    %3108 = vrot.lane.b32.xlu0 %v276, 32
    %v3109 = vpop.permute.xlu0 %3108
    %v3112 = vsel %vm831, %v3102, 0
    %3114 = vmatprep.subr.mxu0 0.0
    %3115 = vmatpush1.msra.mxu0 %v3109
    %3116 = vmatprep.subr.mxu0 0.0
    %3117 = vmatpush1.msra.mxu0 0.0
    %3118 = vmatprep.subr.mxu0 0.0
    %3119 = vmatpush1.msra.mxu0 0.0
    %3120 = vmatprep.subr.mxu0 0.0
    %3121 = vmatpush1.msra.mxu0 0.0
    %3122 = vmatprep.subr.mxu0 0.0
    %3123 = vmatpush1.msra.mxu0 0.0
    %3124 = vmatprep.subr.mxu0 0.0
    %3125 = vmatpush1.msra.mxu0 0.0
    %3126 = vmatprep.subr.mxu0 0.0
    %3127 = vmatpush1.msra.mxu0 0.0
    %3128 = vmatprep.subr.mxu0 0.0
    %3129 = vmatpush1.msra.mxu0 0.0
    %3130 = vmatprep.subr.mxu0 0.0
    %3131 = vmatpush1.msra.mxu0 0.0
    %3132 = vmatprep.subr.mxu0 0.0
    %3133 = vmatpush1.msra.mxu0 0.0
    %3134 = vmatprep.subr.mxu0 0.0
    %3135 = vmatpush1.msra.mxu0 0.0
    %3136 = vmatprep.subr.mxu0 0.0
    %3137 = vmatpush1.msra.mxu0 0.0
    %3138 = vmatprep.subr.mxu0 0.0
    %3139 = vmatpush1.msra.mxu0 0.0
    %3140 = vmatprep.subr.mxu0 0.0
    %3141 = vmatpush1.msra.mxu0 0.0
    %3142 = vmatprep.subr.mxu0 0.0
    %3143 = vmatpush1.msra.mxu0 0.0
    %3144 = vmatprep.subr.mxu0 0.0
    %3145 = vmatpush1.msra.mxu0 0.0
    %3146 = vmatprep.subr.mxu0 0.0
    %3147 = vmatpush1.msra.mxu0 0.0
    %3148 = vmatprep.subr.mxu0 0.0
    %3149 = vmatpush1.msra.mxu0 0.0
    %3150 = vmatprep.subr.mxu0 0.0
    %3151 = vmatpush1.msra.mxu0 0.0
    %3152 = vmatprep.subr.mxu0 0.0
    %3153 = vmatpush1.msra.mxu0 0.0
    %3154 = vmatprep.subr.mxu0 0.0
    %3155 = vmatpush1.msra.mxu0 0.0
    %3156 = vmatprep.subr.mxu0 0.0
    %3157 = vmatpush1.msra.mxu0 0.0
    %3158 = vmatprep.subr.mxu0 0.0
    %3159 = vmatpush1.msra.mxu0 0.0
    %3160 = vmatprep.subr.mxu0 0.0
    %3161 = vmatpush1.msra.mxu0 0.0
    %3162 = vmatprep.subr.mxu0 0.0
    %3163 = vmatpush1.msra.mxu0 0.0
    %3164 = vmatprep.subr.mxu0 0.0
    %3165 = vmatpush1.msra.mxu0 0.0
    %3166 = vmatprep.subr.mxu0 0.0
    %3167 = vmatpush1.msra.mxu0 0.0
    %3168 = vmatprep.subr.mxu0 0.0
    %3169 = vmatpush1.msra.mxu0 0.0
    %3170 = vmatprep.subr.mxu0 0.0
    %3171 = vmatpush1.msra.mxu0 0.0
    %3172 = vmatprep.subr.mxu0 0.0
    %3173 = vmatpush1.msra.mxu0 0.0
    %3174 = vmatprep.subr.mxu0 0.0
    %3175 = vmatpush1.msra.mxu0 0.0
    %3176 = vmatprep.subr.mxu0 0.0
    %3177 = vmatpush1.msra.mxu0 0.0
    %3178 = vmatprep.mubr.f32.mxu0 0.0
    %3179 = vmatmul.mubr.f32.gmra.mrb[0].mxu0 %v3112
    %v3180 = vpop.f32.mrb[0].mxu0
    %v3181 = vadd.f32 0.0, %v3180
    %v3182 = vpop.f32.mrb[0].mxu0
    %3183 = vdwg.mxu0
    %3184 = vrot.lane.b32.xlu0 %v281, 32
    %v3185 = vpop.permute.xlu0 %3184
    %v3188 = vsel %vm831, %v3103, 0
    %3190 = vmatprep.subr.mxu0 0.0
    %3191 = vmatpush1.msra.mxu0 %v3185
    %3192 = vmatprep.subr.mxu0 0.0
    %3193 = vmatpush1.msra.mxu0 0.0
    %3194 = vmatprep.subr.mxu0 0.0
    %3195 = vmatpush1.msra.mxu0 0.0
    %3196 = vmatprep.subr.mxu0 0.0
    %3197 = vmatpush1.msra.mxu0 0.0
    %3198 = vmatprep.subr.mxu0 0.0
    %3199 = vmatpush1.msra.mxu0 0.0
    %3200 = vmatprep.subr.mxu0 0.0
    %3201 = vmatpush1.msra.mxu0 0.0
    %3202 = vmatprep.subr.mxu0 0.0
    %3203 = vmatpush1.msra.mxu0 0.0
    %3204 = vmatprep.subr.mxu0 0.0
    %3205 = vmatpush1.msra.mxu0 0.0
    %3206 = vmatprep.subr.mxu0 0.0
    %3207 = vmatpush1.msra.mxu0 0.0
    %3208 = vmatprep.subr.mxu0 0.0
    %3209 = vmatpush1.msra.mxu0 0.0
    %3210 = vmatprep.subr.mxu0 0.0
    %3211 = vmatpush1.msra.mxu0 0.0
    %3212 = vmatprep.subr.mxu0 0.0
    %3213 = vmatpush1.msra.mxu0 0.0
    %3214 = vmatprep.subr.mxu0 0.0
    %3215 = vmatpush1.msra.mxu0 0.0
    %3216 = vmatprep.subr.mxu0 0.0
    %3217 = vmatpush1.msra.mxu0 0.0
    %3218 = vmatprep.subr.mxu0 0.0
    %3219 = vmatpush1.msra.mxu0 0.0
    %3220 = vmatprep.subr.mxu0 0.0
    %3221 = vmatpush1.msra.mxu0 0.0
    %3222 = vmatprep.subr.mxu0 0.0
    %3223 = vmatpush1.msra.mxu0 0.0
    %3224 = vmatprep.subr.mxu0 0.0
    %3225 = vmatpush1.msra.mxu0 0.0
    %3226 = vmatprep.subr.mxu0 0.0
    %3227 = vmatpush1.msra.mxu0 0.0
    %3228 = vmatprep.subr.mxu0 0.0
    %3229 = vmatpush1.msra.mxu0 0.0
    %3230 = vmatprep.subr.mxu0 0.0
    %3231 = vmatpush1.msra.mxu0 0.0
    %3232 = vmatprep.subr.mxu0 0.0
    %3233 = vmatpush1.msra.mxu0 0.0
    %3234 = vmatprep.subr.mxu0 0.0
    %3235 = vmatpush1.msra.mxu0 0.0
    %3236 = vmatprep.subr.mxu0 0.0
    %3237 = vmatpush1.msra.mxu0 0.0
    %3238 = vmatprep.subr.mxu0 0.0
    %3239 = vmatpush1.msra.mxu0 0.0
    %3240 = vmatprep.subr.mxu0 0.0
    %3241 = vmatpush1.msra.mxu0 0.0
    %3242 = vmatprep.subr.mxu0 0.0
    %3243 = vmatpush1.msra.mxu0 0.0
    %3244 = vmatprep.subr.mxu0 0.0
    %3245 = vmatpush1.msra.mxu0 0.0
    %3246 = vmatprep.subr.mxu0 0.0
    %3247 = vmatpush1.msra.mxu0 0.0
    %3248 = vmatprep.subr.mxu0 0.0
    %3249 = vmatpush1.msra.mxu0 0.0
    %3250 = vmatprep.subr.mxu0 0.0
    %3251 = vmatpush1.msra.mxu0 0.0
    %3252 = vmatprep.subr.mxu0 0.0
    %3253 = vmatpush1.msra.mxu0 0.0
    %3254 = vmatprep.mubr.f32.mxu0 0.0
    %3255 = vmatmul.mubr.f32.gmra.mrb[0].mxu0 %v3188
    %v3256 = vpop.f32.mrb[0].mxu0
    %v3257 = vadd.f32 0.0, %v3256
    %v3258 = vpop.f32.mrb[0].mxu0
    %3259 = vdwg.mxu0
    %3260 = vrot.lane.b32.xlu0 %v286, 32
    %v3261 = vpop.permute.xlu0 %3260
    %v3264 = vsel %vm831, %v3104, 0
    %3266 = vmatprep.subr.mxu0 0.0
    %3267 = vmatpush1.msra.mxu0 %v3261
    %3268 = vmatprep.subr.mxu0 0.0
    %3269 = vmatpush1.msra.mxu0 0.0
    %3270 = vmatprep.subr.mxu0 0.0
    %3271 = vmatpush1.msra.mxu0 0.0
    %3272 = vmatprep.subr.mxu0 0.0
    %3273 = vmatpush1.msra.mxu0 0.0
    %3274 = vmatprep.subr.mxu0 0.0
    %3275 = vmatpush1.msra.mxu0 0.0
    %3276 = vmatprep.subr.mxu0 0.0
    %3277 = vmatpush1.msra.mxu0 0.0
    %3278 = vmatprep.subr.mxu0 0.0
    %3279 = vmatpush1.msra.mxu0 0.0
    %3280 = vmatprep.subr.mxu0 0.0
    %3281 = vmatpush1.msra.mxu0 0.0
    %3282 = vmatprep.subr.mxu0 0.0
    %3283 = vmatpush1.msra.mxu0 0.0
    %3284 = vmatprep.subr.mxu0 0.0
    %3285 = vmatpush1.msra.mxu0 0.0
    %3286 = vmatprep.subr.mxu0 0.0
    %3287 = vmatpush1.msra.mxu0 0.0
    %3288 = vmatprep.subr.mxu0 0.0
    %3289 = vmatpush1.msra.mxu0 0.0
    %3290 = vmatprep.subr.mxu0 0.0
    %3291 = vmatpush1.msra.mxu0 0.0
    %3292 = vmatprep.subr.mxu0 0.0
    %3293 = vmatpush1.msra.mxu0 0.0
    %3294 = vmatprep.subr.mxu0 0.0
    %3295 = vmatpush1.msra.mxu0 0.0
    %3296 = vmatprep.subr.mxu0 0.0
    %3297 = vmatpush1.msra.mxu0 0.0
    %3298 = vmatprep.subr.mxu0 0.0
    %3299 = vmatpush1.msra.mxu0 0.0
    %3300 = vmatprep.subr.mxu0 0.0
    %3301 = vmatpush1.msra.mxu0 0.0
    %3302 = vmatprep.subr.mxu0 0.0
    %3303 = vmatpush1.msra.mxu0 0.0
    %3304 = vmatprep.subr.mxu0 0.0
    %3305 = vmatpush1.msra.mxu0 0.0
    %3306 = vmatprep.subr.mxu0 0.0
    %3307 = vmatpush1.msra.mxu0 0.0
    %3308 = vmatprep.subr.mxu0 0.0
    %3309 = vmatpush1.msra.mxu0 0.0
    %3310 = vmatprep.subr.mxu0 0.0
    %3311 = vmatpush1.msra.mxu0 0.0
    %3312 = vmatprep.subr.mxu0 0.0
    %3313 = vmatpush1.msra.mxu0 0.0
    %3314 = vmatprep.subr.mxu0 0.0
    %3315 = vmatpush1.msra.mxu0 0.0
    %3316 = vmatprep.subr.mxu0 0.0
    %3317 = vmatpush1.msra.mxu0 0.0
    %3318 = vmatprep.subr.mxu0 0.0
    %3319 = vmatpush1.msra.mxu0 0.0
    %3320 = vmatprep.subr.mxu0 0.0
    %3321 = vmatpush1.msra.mxu0 0.0
    %3322 = vmatprep.subr.mxu0 0.0
    %3323 = vmatpush1.msra.mxu0 0.0
    %3324 = vmatprep.subr.mxu0 0.0
    %3325 = vmatpush1.msra.mxu0 0.0
    %3326 = vmatprep.subr.mxu0 0.0
    %3327 = vmatpush1.msra.mxu0 0.0
    %3328 = vmatprep.subr.mxu0 0.0
    %3329 = vmatpush1.msra.mxu0 0.0
    %3330 = vmatprep.mubr.f32.mxu0 0.0
    %3331 = vmatmul.mubr.f32.gmra.mrb[0].mxu0 %v3264
    %v3332 = vpop.f32.mrb[0].mxu0
    %v3333 = vadd.f32 0.0, %v3332
    %v3334 = vpop.f32.mrb[0].mxu0
    %3335 = vdwg.mxu0
    %3336 = vrot.lane.b32.xlu0 %v291, 32
    %v3337 = vpop.permute.xlu0 %3336
    %v3340 = vsel %vm831, %v3105, 0
    %3342 = vmatprep.subr.mxu0 0.0
    %3343 = vmatpush1.msra.mxu0 %v3337
    %3344 = vmatprep.subr.mxu0 0.0
    %3345 = vmatpush1.msra.mxu0 0.0
    %3346 = vmatprep.subr.mxu0 0.0
    %3347 = vmatpush1.msra.mxu0 0.0
    %3348 = vmatprep.subr.mxu0 0.0
    %3349 = vmatpush1.msra.mxu0 0.0
    %3350 = vmatprep.subr.mxu0 0.0
    %3351 = vmatpush1.msra.mxu0 0.0
    %3352 = vmatprep.subr.mxu0 0.0
    %3353 = vmatpush1.msra.mxu0 0.0
    %3354 = vmatprep.subr.mxu0 0.0
    %3355 = vmatpush1.msra.mxu0 0.0
    %3356 = vmatprep.subr.mxu0 0.0
    %3357 = vmatpush1.msra.mxu0 0.0
    %3358 = vmatprep.subr.mxu0 0.0
    %3359 = vmatpush1.msra.mxu0 0.0
    %3360 = vmatprep.subr.mxu0 0.0
    %3361 = vmatpush1.msra.mxu0 0.0
    %3362 = vmatprep.subr.mxu0 0.0
    %3363 = vmatpush1.msra.mxu0 0.0
    %3364 = vmatprep.subr.mxu0 0.0
    %3365 = vmatpush1.msra.mxu0 0.0
    %3366 = vmatprep.subr.mxu0 0.0
    %3367 = vmatpush1.msra.mxu0 0.0
    %3368 = vmatprep.subr.mxu0 0.0
    %3369 = vmatpush1.msra.mxu0 0.0
    %3370 = vmatprep.subr.mxu0 0.0
    %3371 = vmatpush1.msra.mxu0 0.0
    %3372 = vmatprep.subr.mxu0 0.0
    %3373 = vmatpush1.msra.mxu0 0.0
    %3374 = vmatprep.subr.mxu0 0.0
    %3375 = vmatpush1.msra.mxu0 0.0
    %3376 = vmatprep.subr.mxu0 0.0
    %3377 = vmatpush1.msra.mxu0 0.0
    %3378 = vmatprep.subr.mxu0 0.0
    %3379 = vmatpush1.msra.mxu0 0.0
    %3380 = vmatprep.subr.mxu0 0.0
    %3381 = vmatpush1.msra.mxu0 0.0
    %3382 = vmatprep.subr.mxu0 0.0
    %3383 = vmatpush1.msra.mxu0 0.0
    %3384 = vmatprep.subr.mxu0 0.0
    %3385 = vmatpush1.msra.mxu0 0.0
    %3386 = vmatprep.subr.mxu0 0.0
    %3387 = vmatpush1.msra.mxu0 0.0
    %3388 = vmatprep.subr.mxu0 0.0
    %3389 = vmatpush1.msra.mxu0 0.0
    %3390 = vmatprep.subr.mxu0 0.0
    %3391 = vmatpush1.msra.mxu0 0.0
    %3392 = vmatprep.subr.mxu0 0.0
    %3393 = vmatpush1.msra.mxu0 0.0
    %3394 = vmatprep.subr.mxu0 0.0
    %3395 = vmatpush1.msra.mxu0 0.0
    %3396 = vmatprep.subr.mxu0 0.0
    %3397 = vmatpush1.msra.mxu0 0.0
    %3398 = vmatprep.subr.mxu0 0.0
    %3399 = vmatpush1.msra.mxu0 0.0
    %3400 = vmatprep.subr.mxu0 0.0
    %3401 = vmatpush1.msra.mxu0 0.0
    %3402 = vmatprep.subr.mxu0 0.0
    %3403 = vmatpush1.msra.mxu0 0.0
    %3404 = vmatprep.subr.mxu0 0.0
    %3405 = vmatpush1.msra.mxu0 0.0
    %3406 = vmatprep.mubr.f32.mxu0 0.0
    %3407 = vmatmul.mubr.f32.gmra.mrb[0].mxu0 %v3340
    %v3408 = vpop.f32.mrb[0].mxu0
    %v3409 = vadd.f32 0.0, %v3408
    %v3410 = vpop.f32.mrb[0].mxu0
    %3411 = vdwg.mxu0
    %3412 = vrot.lane.b32.xlu0 %v296, 32
    %v3413 = vpop.permute.xlu0 %3412
    %v3416 = vsel %vm831, %v3106, 0
    %3418 = vmatprep.subr.mxu0 0.0
    %3419 = vmatpush1.msra.mxu0 %v3413
    %3420 = vmatprep.subr.mxu0 0.0
    %3421 = vmatpush1.msra.mxu0 0.0
    %3422 = vmatprep.subr.mxu0 0.0
    %3423 = vmatpush1.msra.mxu0 0.0
    %3424 = vmatprep.subr.mxu0 0.0
    %3425 = vmatpush1.msra.mxu0 0.0
    %3426 = vmatprep.subr.mxu0 0.0
    %3427 = vmatpush1.msra.mxu0 0.0
    %3428 = vmatprep.subr.mxu0 0.0
    %3429 = vmatpush1.msra.mxu0 0.0
    %3430 = vmatprep.subr.mxu0 0.0
    %3431 = vmatpush1.msra.mxu0 0.0
    %3432 = vmatprep.subr.mxu0 0.0
    %3433 = vmatpush1.msra.mxu0 0.0
    %3434 = vmatprep.subr.mxu0 0.0
    %3435 = vmatpush1.msra.mxu0 0.0
    %3436 = vmatprep.subr.mxu0 0.0
    %3437 = vmatpush1.msra.mxu0 0.0
    %3438 = vmatprep.subr.mxu0 0.0
    %3439 = vmatpush1.msra.mxu0 0.0
    %3440 = vmatprep.subr.mxu0 0.0
    %3441 = vmatpush1.msra.mxu0 0.0
    %3442 = vmatprep.subr.mxu0 0.0
    %3443 = vmatpush1.msra.mxu0 0.0
    %3444 = vmatprep.subr.mxu0 0.0
    %3445 = vmatpush1.msra.mxu0 0.0
    %3446 = vmatprep.subr.mxu0 0.0
    %3447 = vmatpush1.msra.mxu0 0.0
    %3448 = vmatprep.subr.mxu0 0.0
    %3449 = vmatpush1.msra.mxu0 0.0
    %3450 = vmatprep.subr.mxu0 0.0
    %3451 = vmatpush1.msra.mxu0 0.0
    %3452 = vmatprep.subr.mxu0 0.0
    %3453 = vmatpush1.msra.mxu0 0.0
    %3454 = vmatprep.subr.mxu0 0.0
    %3455 = vmatpush1.msra.mxu0 0.0
    %3456 = vmatprep.subr.mxu0 0.0
    %3457 = vmatpush1.msra.mxu0 0.0
    %3458 = vmatprep.subr.mxu0 0.0
    %3459 = vmatpush1.msra.mxu0 0.0
    %3460 = vmatprep.subr.mxu0 0.0
    %3461 = vmatpush1.msra.mxu0 0.0
    %3462 = vmatprep.subr.mxu0 0.0
    %3463 = vmatpush1.msra.mxu0 0.0
    %3464 = vmatprep.subr.mxu0 0.0
    %3465 = vmatpush1.msra.mxu0 0.0
    %3466 = vmatprep.subr.mxu0 0.0
    %3467 = vmatpush1.msra.mxu0 0.0
    %3468 = vmatprep.subr.mxu0 0.0
    %3469 = vmatpush1.msra.mxu0 0.0
    %3470 = vmatprep.subr.mxu0 0.0
    %3471 = vmatpush1.msra.mxu0 0.0
    %3472 = vmatprep.subr.mxu0 0.0
    %3473 = vmatpush1.msra.mxu0 0.0
    %3474 = vmatprep.subr.mxu0 0.0
    %3475 = vmatpush1.msra.mxu0 0.0
    %3476 = vmatprep.subr.mxu0 0.0
    %3477 = vmatpush1.msra.mxu0 0.0
    %3478 = vmatprep.subr.mxu0 0.0
    %3479 = vmatpush1.msra.mxu0 0.0
    %3480 = vmatprep.subr.mxu0 0.0
    %3481 = vmatpush1.msra.mxu0 0.0
    %3482 = vmatprep.mubr.f32.mxu0 0.0
    %3483 = vmatmul.mubr.f32.gmra.mrb[0].mxu0 %v3416
    %v3484 = vpop.f32.mrb[0].mxu0
    %v3485 = vadd.f32 0.0, %v3484
    %v3486 = vpop.f32.mrb[0].mxu0
    %3487 = vdwg.mxu0
    %3488 = vrot.lane.b32.xlu0 %v301, 32
    %v3489 = vpop.permute.xlu0 %3488
    %v3492 = vsel %vm831, %v3107, 0
    %3494 = vmatprep.subr.mxu0 0.0
    %3495 = vmatpush1.msra.mxu0 %v3489
    %3496 = vmatprep.subr.mxu0 0.0
    %3497 = vmatpush1.msra.mxu0 0.0
    %3498 = vmatprep.subr.mxu0 0.0
    %3499 = vmatpush1.msra.mxu0 0.0
    %3500 = vmatprep.subr.mxu0 0.0
    %3501 = vmatpush1.msra.mxu0 0.0
    %3502 = vmatprep.subr.mxu0 0.0
    %3503 = vmatpush1.msra.mxu0 0.0
    %3504 = vmatprep.subr.mxu0 0.0
    %3505 = vmatpush1.msra.mxu0 0.0
    %3506 = vmatprep.subr.mxu0 0.0
    %3507 = vmatpush1.msra.mxu0 0.0
    %3508 = vmatprep.subr.mxu0 0.0
    %3509 = vmatpush1.msra.mxu0 0.0
    %3510 = vmatprep.subr.mxu0 0.0
    %3511 = vmatpush1.msra.mxu0 0.0
    %3512 = vmatprep.subr.mxu0 0.0
    %3513 = vmatpush1.msra.mxu0 0.0
    %3514 = vmatprep.subr.mxu0 0.0
    %3515 = vmatpush1.msra.mxu0 0.0
    %3516 = vmatprep.subr.mxu0 0.0
    %3517 = vmatpush1.msra.mxu0 0.0
    %3518 = vmatprep.subr.mxu0 0.0
    %3519 = vmatpush1.msra.mxu0 0.0
    %3520 = vmatprep.subr.mxu0 0.0
    %3521 = vmatpush1.msra.mxu0 0.0
    %3522 = vmatprep.subr.mxu0 0.0
    %3523 = vmatpush1.msra.mxu0 0.0
    %3524 = vmatprep.subr.mxu0 0.0
    %3525 = vmatpush1.msra.mxu0 0.0
    %3526 = vmatprep.subr.mxu0 0.0
    %3527 = vmatpush1.msra.mxu0 0.0
    %3528 = vmatprep.subr.mxu0 0.0
    %3529 = vmatpush1.msra.mxu0 0.0
    %3530 = vmatprep.subr.mxu0 0.0
    %3531 = vmatpush1.msra.mxu0 0.0
    %3532 = vmatprep.subr.mxu0 0.0
    %3533 = vmatpush1.msra.mxu0 0.0
    %3534 = vmatprep.subr.mxu0 0.0
    %3535 = vmatpush1.msra.mxu0 0.0
    %3536 = vmatprep.subr.mxu0 0.0
    %3537 = vmatpush1.msra.mxu0 0.0
    %3538 = vmatprep.subr.mxu0 0.0
    %3539 = vmatpush1.msra.mxu0 0.0
    %3540 = vmatprep.subr.mxu0 0.0
    %3541 = vmatpush1.msra.mxu0 0.0
    %3542 = vmatprep.subr.mxu0 0.0
    %3543 = vmatpush1.msra.mxu0 0.0
    %3544 = vmatprep.subr.mxu0 0.0
    %3545 = vmatpush1.msra.mxu0 0.0
    %3546 = vmatprep.subr.mxu0 0.0
    %3547 = vmatpush1.msra.mxu0 0.0
    %3548 = vmatprep.subr.mxu0 0.0
    %3549 = vmatpush1.msra.mxu0 0.0
    %3550 = vmatprep.subr.mxu0 0.0
    %3551 = vmatpush1.msra.mxu0 0.0
    %3552 = vmatprep.subr.mxu0 0.0
    %3553 = vmatpush1.msra.mxu0 0.0
    %3554 = vmatprep.subr.mxu0 0.0
    %3555 = vmatpush1.msra.mxu0 0.0
    %3556 = vmatprep.subr.mxu0 0.0
    %3557 = vmatpush1.msra.mxu0 0.0
    %3558 = vmatprep.mubr.f32.mxu0 0.0
    %3559 = vmatmul.mubr.f32.gmra.mrb[0].mxu0 %v3492
    %v3560 = vpop.f32.mrb[0].mxu0
    %v3561 = vadd.f32 0.0, %v3560
    %v3562 = vpop.f32.mrb[0].mxu0
    %3563 = vdwg.mxu0
    %v3564 = vld [vmem:[%s5 + $0x20] sm:$0xff]
    %v3565 = vld [vmem:[%s5 + $0x28] sm:$0xff]
    %v3567 = vsel %vm374, %v3181, 0
    %v3570 = vsel %vm374, %v3257, 0
    %v3573 = vsel %vm374, %v3333, 0
    %v3576 = vsel %vm374, %v3409, 0
    %v3579 = vsel %vm374, %v3485, 0
    %v3582 = vsel %vm374, %v3561, 0
    %3584 = vmatprep.subr.mxu0 0.0
    %3585 = vmatpush1.msra.mxu0 %v3564
    %3586 = vmatprep.subr.mxu0 0.0
    %3587 = vmatpush1.msra.mxu0 %v3565
    %3588 = vmatprep.subr.mxu0 0.0
    %3589 = vmatpush1.msra.mxu0 0.0
    %3590 = vmatprep.subr.mxu0 0.0
    %3591 = vmatpush1.msra.mxu0 0.0
    %3592 = vmatprep.subr.mxu0 0.0
    %3593 = vmatpush1.msra.mxu0 0.0
    %3594 = vmatprep.subr.mxu0 0.0
    %3595 = vmatpush1.msra.mxu0 0.0
    %3596 = vmatprep.subr.mxu0 0.0
    %3597 = vmatpush1.msra.mxu0 0.0
    %3598 = vmatprep.subr.mxu0 0.0
    %3599 = vmatpush1.msra.mxu0 0.0
    %3600 = vmatprep.subr.mxu0 0.0
    %3601 = vmatpush1.msra.mxu0 0.0
    %3602 = vmatprep.subr.mxu0 0.0
    %3603 = vmatpush1.msra.mxu0 0.0
    %3604 = vmatprep.subr.mxu0 0.0
    %3605 = vmatpush1.msra.mxu0 0.0
    %3606 = vmatprep.subr.mxu0 0.0
    %3607 = vmatpush1.msra.mxu0 0.0
    %3608 = vmatprep.subr.mxu0 0.0
    %3609 = vmatpush1.msra.mxu0 0.0
    %3610 = vmatprep.subr.mxu0 0.0
    %3611 = vmatpush1.msra.mxu0 0.0
    %3612 = vmatprep.subr.mxu0 0.0
    %3613 = vmatpush1.msra.mxu0 0.0
    %3614 = vmatprep.subr.mxu0 0.0
    %3615 = vmatpush1.msra.mxu0 0.0
    %3616 = vmatprep.subr.mxu0 0.0
    %3617 = vmatpush1.msra.mxu0 0.0
    %3618 = vmatprep.subr.mxu0 0.0
    %3619 = vmatpush1.msra.mxu0 0.0
    %3620 = vmatprep.subr.mxu0 0.0
    %3621 = vmatpush1.msra.mxu0 0.0
    %3622 = vmatprep.subr.mxu0 0.0
    %3623 = vmatpush1.msra.mxu0 0.0
    %3624 = vmatprep.subr.mxu0 0.0
    %3625 = vmatpush1.msra.mxu0 0.0
    %3626 = vmatprep.subr.mxu0 0.0
    %3627 = vmatpush1.msra.mxu0 0.0
    %3628 = vmatprep.subr.mxu0 0.0
    %3629 = vmatpush1.msra.mxu0 0.0
    %3630 = vmatprep.subr.mxu0 0.0
    %3631 = vmatpush1.msra.mxu0 0.0
    %3632 = vmatprep.subr.mxu0 0.0
    %3633 = vmatpush1.msra.mxu0 0.0
    %3634 = vmatprep.subr.mxu0 0.0
    %3635 = vmatpush1.msra.mxu0 0.0
    %3636 = vmatprep.subr.mxu0 0.0
    %3637 = vmatpush1.msra.mxu0 0.0
    %3638 = vmatprep.subr.mxu0 0.0
    %3639 = vmatpush1.msra.mxu0 0.0
    %3640 = vmatprep.subr.mxu0 0.0
    %3641 = vmatpush1.msra.mxu0 0.0
    %3642 = vmatprep.subr.mxu0 0.0
    %3643 = vmatpush1.msra.mxu0 0.0
    %3644 = vmatprep.subr.mxu0 0.0
    %3645 = vmatpush1.msra.mxu0 0.0
    %3646 = vmatprep.subr.mxu0 0.0
    %3647 = vmatpush1.msra.mxu0 0.0
    %3648 = vmatprep.mubr.f32.mxu0 0.0
    %3649 = vmatmul.mubr.f32.gmra.mrb[0].mxu0 %v3567
    %v3650 = vpop.f32.mrb[0].mxu0
    %v3651 = vadd.f32 0.0, %v3650
    %v3652 = vpop.f32.mrb[0].mxu0
    %3653 = vmatprep.mubr.f32.mxu0 0.0
    %3654 = vmatmul.mubr.f32.gmra.mrb[0].mxu0 %v3570
    %v3655 = vpop.f32.mrb[0].mxu0
    %v3656 = vadd.f32 0.0, %v3655
    %v3657 = vpop.f32.mrb[0].mxu0
    %3658 = vmatprep.mubr.f32.mxu0 0.0
    %3659 = vmatmul.mubr.f32.gmra.mrb[0].mxu0 %v3573
    %v3660 = vpop.f32.mrb[0].mxu0
    %v3661 = vadd.f32 0.0, %v3660
    %v3662 = vpop.f32.mrb[0].mxu0
    %3663 = vmatprep.mubr.f32.mxu0 0.0
    %3664 = vmatmul.mubr.f32.gmra.mrb[0].mxu0 %v3576
    %v3665 = vpop.f32.mrb[0].mxu0
    %v3666 = vadd.f32 0.0, %v3665
    %v3667 = vpop.f32.mrb[0].mxu0
    %3668 = vmatprep.mubr.f32.mxu0 0.0
    %3669 = vmatmul.mubr.f32.gmra.mrb[0].mxu0 %v3579
    %v3670 = vpop.f32.mrb[0].mxu0
    %v3671 = vadd.f32 0.0, %v3670
    %v3672 = vpop.f32.mrb[0].mxu0
    %3673 = vmatprep.mubr.f32.mxu0 0.0
    %3674 = vmatmul.mubr.f32.gmra.mrb[0].mxu0 %v3582
    %v3675 = vpop.f32.mrb[0].mxu0
    %v3676 = vadd.f32 0.0, %v3675
    %v3677 = vpop.f32.mrb[0].mxu0
    %3678 = vdwg.mxu0
    %v3679 = vadd.f32 %v2546, %v3651
    %v3680 = vadd.f32 %v2551, %v3656
    %v3681 = vadd.f32 %v2556, %v3661
    %v3682 = vadd.f32 %v2561, %v3666
    %v3683 = vadd.f32 %v2566, %v3671
    %v3684 = vadd.f32 %v2571, %v3676
    %3685 = vrot.lane.b32.xlu0 %v130, 80
    %v3686 = vpop.permute.xlu0 %3685
    %3687 = vrot.lane.b32.xlu0 %v276, 80
    %v3688 = vpop.permute.xlu0 %3687
    %v3689 = vsel %vm374, %v3686, 0
    %v3691 = vsel %vm374, %v3688, 0
    %3693 = vmatprep.subr.mxu0 0.0
    %3694 = vmatpush1.xpose.msra.mxu0 %v3691
    %3695 = vmatprep.subr.mxu0 0.0
    %3696 = vmatpush1.xpose.msra.mxu0 0.0
    %3697 = vmatprep.subr.mxu0 0.0
    %3698 = vmatpush1.xpose.msra.mxu0 0.0
    %3699 = vmatprep.subr.mxu0 0.0
    %3700 = vmatpush1.xpose.msra.mxu0 0.0
    %3701 = vmatprep.subr.mxu0 0.0
    %3702 = vmatpush1.xpose.msra.mxu0 0.0
    %3703 = vmatprep.subr.mxu0 0.0
    %3704 = vmatpush1.xpose.msra.mxu0 0.0
    %3705 = vmatprep.subr.mxu0 0.0
    %3706 = vmatpush1.xpose.msra.mxu0 0.0
    %3707 = vmatprep.subr.mxu0 0.0
    %3708 = vmatpush1.xpose.msra.mxu0 0.0
    %3709 = vmatprep.subr.mxu0 0.0
    %3710 = vmatpush1.xpose.msra.mxu0 0.0
    %3711 = vmatprep.subr.mxu0 0.0
    %3712 = vmatpush1.xpose.msra.mxu0 0.0
    %3713 = vmatprep.subr.mxu0 0.0
    %3714 = vmatpush1.xpose.msra.mxu0 0.0
    %3715 = vmatprep.subr.mxu0 0.0
    %3716 = vmatpush1.xpose.msra.mxu0 0.0
    %3717 = vmatprep.subr.mxu0 0.0
    %3718 = vmatpush1.xpose.msra.mxu0 0.0
    %3719 = vmatprep.subr.mxu0 0.0
    %3720 = vmatpush1.xpose.msra.mxu0 0.0
    %3721 = vmatprep.subr.mxu0 0.0
    %3722 = vmatpush1.xpose.msra.mxu0 0.0
    %3723 = vmatprep.subr.mxu0 0.0
    %3724 = vmatpush1.xpose.msra.mxu0 0.0
    %3725 = vmatprep.subr.mxu0 0.0
    %3726 = vmatpush1.xpose.msra.mxu0 0.0
    %3727 = vmatprep.subr.mxu0 0.0
    %3728 = vmatpush1.xpose.msra.mxu0 0.0
    %3729 = vmatprep.subr.mxu0 0.0
    %3730 = vmatpush1.xpose.msra.mxu0 0.0
    %3731 = vmatprep.subr.mxu0 0.0
    %3732 = vmatpush1.xpose.msra.mxu0 0.0
    %3733 = vmatprep.subr.mxu0 0.0
    %3734 = vmatpush1.xpose.msra.mxu0 0.0
    %3735 = vmatprep.subr.mxu0 0.0
    %3736 = vmatpush1.xpose.msra.mxu0 0.0
    %3737 = vmatprep.subr.mxu0 0.0
    %3738 = vmatpush1.xpose.msra.mxu0 0.0
    %3739 = vmatprep.subr.mxu0 0.0
    %3740 = vmatpush1.xpose.msra.mxu0 0.0
    %3741 = vmatprep.subr.mxu0 0.0
    %3742 = vmatpush1.xpose.msra.mxu0 0.0
    %3743 = vmatprep.subr.mxu0 0.0
    %3744 = vmatpush1.xpose.msra.mxu0 0.0
    %3745 = vmatprep.subr.mxu0 0.0
    %3746 = vmatpush1.xpose.msra.mxu0 0.0
    %3747 = vmatprep.subr.mxu0 0.0
    %3748 = vmatpush1.xpose.msra.mxu0 0.0
    %3749 = vmatprep.subr.mxu0 0.0
    %3750 = vmatpush1.xpose.msra.mxu0 0.0
    %3751 = vmatprep.subr.mxu0 0.0
    %3752 = vmatpush1.xpose.msra.mxu0 0.0
    %3753 = vmatprep.subr.mxu0 0.0
    %3754 = vmatpush1.xpose.msra.mxu0 0.0
    %3755 = vmatprep.subr.mxu0 0.0
    %3756 = vmatpush1.xpose.msra.mxu0 0.0
    %3757 = vmatprep.mubr.f32.mxu0 0.0
    %3758 = vmatmul.mubr.f32.gmra.mrb[0].mxu0 %v3689
    %v3759 = vpop.f32.mrb[0].mxu0
    %v3760 = vadd.f32 %v353, %v3759
    %v3761 = vpop.f32.mrb[0].mxu0
    %3762 = vdwg.mxu0
    %3763 = vrot.lane.b32.xlu0 %v135, 80
    %v3764 = vpop.permute.xlu0 %3763
    %3765 = vrot.lane.b32.xlu0 %v281, 80
    %v3766 = vpop.permute.xlu0 %3765
    %v3767 = vsel %vm374, %v3764, 0
    %v3769 = vsel %vm374, %v3766, 0
    %3771 = vmatprep.subr.mxu0 0.0
    %3772 = vmatpush1.xpose.msra.mxu0 %v3769
    %3773 = vmatprep.subr.mxu0 0.0
    %3774 = vmatpush1.xpose.msra.mxu0 0.0
    %3775 = vmatprep.subr.mxu0 0.0
    %3776 = vmatpush1.xpose.msra.mxu0 0.0
    %3777 = vmatprep.subr.mxu0 0.0
    %3778 = vmatpush1.xpose.msra.mxu0 0.0
    %3779 = vmatprep.subr.mxu0 0.0
    %3780 = vmatpush1.xpose.msra.mxu0 0.0
    %3781 = vmatprep.subr.mxu0 0.0
    %3782 = vmatpush1.xpose.msra.mxu0 0.0
    %3783 = vmatprep.subr.mxu0 0.0
    %3784 = vmatpush1.xpose.msra.mxu0 0.0
    %3785 = vmatprep.subr.mxu0 0.0
    %3786 = vmatpush1.xpose.msra.mxu0 0.0
    %3787 = vmatprep.subr.mxu0 0.0
    %3788 = vmatpush1.xpose.msra.mxu0 0.0
    %3789 = vmatprep.subr.mxu0 0.0
    %3790 = vmatpush1.xpose.msra.mxu0 0.0
    %3791 = vmatprep.subr.mxu0 0.0
    %3792 = vmatpush1.xpose.msra.mxu0 0.0
    %3793 = vmatprep.subr.mxu0 0.0
    %3794 = vmatpush1.xpose.msra.mxu0 0.0
    %3795 = vmatprep.subr.mxu0 0.0
    %3796 = vmatpush1.xpose.msra.mxu0 0.0
    %3797 = vmatprep.subr.mxu0 0.0
    %3798 = vmatpush1.xpose.msra.mxu0 0.0
    %3799 = vmatprep.subr.mxu0 0.0
    %3800 = vmatpush1.xpose.msra.mxu0 0.0
    %3801 = vmatprep.subr.mxu0 0.0
    %3802 = vmatpush1.xpose.msra.mxu0 0.0
    %3803 = vmatprep.subr.mxu0 0.0
    %3804 = vmatpush1.xpose.msra.mxu0 0.0
    %3805 = vmatprep.subr.mxu0 0.0
    %3806 = vmatpush1.xpose.msra.mxu0 0.0
    %3807 = vmatprep.subr.mxu0 0.0
    %3808 = vmatpush1.xpose.msra.mxu0 0.0
    %3809 = vmatprep.subr.mxu0 0.0
    %3810 = vmatpush1.xpose.msra.mxu0 0.0
    %3811 = vmatprep.subr.mxu0 0.0
    %3812 = vmatpush1.xpose.msra.mxu0 0.0
    %3813 = vmatprep.subr.mxu0 0.0
    %3814 = vmatpush1.xpose.msra.mxu0 0.0
    %3815 = vmatprep.subr.mxu0 0.0
    %3816 = vmatpush1.xpose.msra.mxu0 0.0
    %3817 = vmatprep.subr.mxu0 0.0
    %3818 = vmatpush1.xpose.msra.mxu0 0.0
    %3819 = vmatprep.subr.mxu0 0.0
    %3820 = vmatpush1.xpose.msra.mxu0 0.0
    %3821 = vmatprep.subr.mxu0 0.0
    %3822 = vmatpush1.xpose.msra.mxu0 0.0
    %3823 = vmatprep.subr.mxu0 0.0
    %3824 = vmatpush1.xpose.msra.mxu0 0.0
    %3825 = vmatprep.subr.mxu0 0.0
    %3826 = vmatpush1.xpose.msra.mxu0 0.0
    %3827 = vmatprep.subr.mxu0 0.0
    %3828 = vmatpush1.xpose.msra.mxu0 0.0
    %3829 = vmatprep.subr.mxu0 0.0
    %3830 = vmatpush1.xpose.msra.mxu0 0.0
    %3831 = vmatprep.subr.mxu0 0.0
    %3832 = vmatpush1.xpose.msra.mxu0 0.0
    %3833 = vmatprep.subr.mxu0 0.0
    %3834 = vmatpush1.xpose.msra.mxu0 0.0
    %3835 = vmatprep.mubr.f32.mxu0 0.0
    %3836 = vmatmul.mubr.f32.gmra.mrb[0].mxu0 %v3767
    %v3837 = vpop.f32.mrb[0].mxu0
    %v3838 = vadd.f32 %v357, %v3837
    %v3839 = vpop.f32.mrb[0].mxu0
    %3840 = vdwg.mxu0
    %3841 = vrot.lane.b32.xlu0 %v140, 80
    %v3842 = vpop.permute.xlu0 %3841
    %3843 = vrot.lane.b32.xlu0 %v286, 80
    %v3844 = vpop.permute.xlu0 %3843
    %v3845 = vsel %vm374, %v3842, 0
    %v3847 = vsel %vm374, %v3844, 0
    %3849 = vmatprep.subr.mxu0 0.0
    %3850 = vmatpush1.xpose.msra.mxu0 %v3847
    %3851 = vmatprep.subr.mxu0 0.0
    %3852 = vmatpush1.xpose.msra.mxu0 0.0
    %3853 = vmatprep.subr.mxu0 0.0
    %3854 = vmatpush1.xpose.msra.mxu0 0.0
    %3855 = vmatprep.subr.mxu0 0.0
    %3856 = vmatpush1.xpose.msra.mxu0 0.0
    %3857 = vmatprep.subr.mxu0 0.0
    %3858 = vmatpush1.xpose.msra.mxu0 0.0
    %3859 = vmatprep.subr.mxu0 0.0
    %3860 = vmatpush1.xpose.msra.mxu0 0.0
    %3861 = vmatprep.subr.mxu0 0.0
    %3862 = vmatpush1.xpose.msra.mxu0 0.0
    %3863 = vmatprep.subr.mxu0 0.0
    %3864 = vmatpush1.xpose.msra.mxu0 0.0
    %3865 = vmatprep.subr.mxu0 0.0
    %3866 = vmatpush1.xpose.msra.mxu0 0.0
    %3867 = vmatprep.subr.mxu0 0.0
    %3868 = vmatpush1.xpose.msra.mxu0 0.0
    %3869 = vmatprep.subr.mxu0 0.0
    %3870 = vmatpush1.xpose.msra.mxu0 0.0
    %3871 = vmatprep.subr.mxu0 0.0
    %3872 = vmatpush1.xpose.msra.mxu0 0.0
    %3873 = vmatprep.subr.mxu0 0.0
    %3874 = vmatpush1.xpose.msra.mxu0 0.0
    %3875 = vmatprep.subr.mxu0 0.0
    %3876 = vmatpush1.xpose.msra.mxu0 0.0
    %3877 = vmatprep.subr.mxu0 0.0
    %3878 = vmatpush1.xpose.msra.mxu0 0.0
    %3879 = vmatprep.subr.mxu0 0.0
    %3880 = vmatpush1.xpose.msra.mxu0 0.0
    %3881 = vmatprep.subr.mxu0 0.0
    %3882 = vmatpush1.xpose.msra.mxu0 0.0
    %3883 = vmatprep.subr.mxu0 0.0
    %3884 = vmatpush1.xpose.msra.mxu0 0.0
    %3885 = vmatprep.subr.mxu0 0.0
    %3886 = vmatpush1.xpose.msra.mxu0 0.0
    %3887 = vmatprep.subr.mxu0 0.0
    %3888 = vmatpush1.xpose.msra.mxu0 0.0
    %3889 = vmatprep.subr.mxu0 0.0
    %3890 = vmatpush1.xpose.msra.mxu0 0.0
    %3891 = vmatprep.subr.mxu0 0.0
    %3892 = vmatpush1.xpose.msra.mxu0 0.0
    %3893 = vmatprep.subr.mxu0 0.0
    %3894 = vmatpush1.xpose.msra.mxu0 0.0
    %3895 = vmatprep.subr.mxu0 0.0
    %3896 = vmatpush1.xpose.msra.mxu0 0.0
    %3897 = vmatprep.subr.mxu0 0.0
    %3898 = vmatpush1.xpose.msra.mxu0 0.0
    %3899 = vmatprep.subr.mxu0 0.0
    %3900 = vmatpush1.xpose.msra.mxu0 0.0
    %3901 = vmatprep.subr.mxu0 0.0
    %3902 = vmatpush1.xpose.msra.mxu0 0.0
    %3903 = vmatprep.subr.mxu0 0.0
    %3904 = vmatpush1.xpose.msra.mxu0 0.0
    %3905 = vmatprep.subr.mxu0 0.0
    %3906 = vmatpush1.xpose.msra.mxu0 0.0
    %3907 = vmatprep.subr.mxu0 0.0
    %3908 = vmatpush1.xpose.msra.mxu0 0.0
    %3909 = vmatprep.subr.mxu0 0.0
    %3910 = vmatpush1.xpose.msra.mxu0 0.0
    %3911 = vmatprep.subr.mxu0 0.0
    %3912 = vmatpush1.xpose.msra.mxu0 0.0
    %3913 = vmatprep.mubr.f32.mxu0 0.0
    %3914 = vmatmul.mubr.f32.gmra.mrb[0].mxu0 %v3845
    %v3915 = vpop.f32.mrb[0].mxu0
    %v3916 = vadd.f32 %v361, %v3915
    %v3917 = vpop.f32.mrb[0].mxu0
    %3918 = vdwg.mxu0
    %3919 = vrot.lane.b32.xlu0 %v145, 80
    %v3920 = vpop.permute.xlu0 %3919
    %3921 = vrot.lane.b32.xlu0 %v291, 80
    %v3922 = vpop.permute.xlu0 %3921
    %v3923 = vsel %vm374, %v3920, 0
    %v3925 = vsel %vm374, %v3922, 0
    %3927 = vmatprep.subr.mxu0 0.0
    %3928 = vmatpush1.xpose.msra.mxu0 %v3925
    %3929 = vmatprep.subr.mxu0 0.0
    %3930 = vmatpush1.xpose.msra.mxu0 0.0
    %3931 = vmatprep.subr.mxu0 0.0
    %3932 = vmatpush1.xpose.msra.mxu0 0.0
    %3933 = vmatprep.subr.mxu0 0.0
    %3934 = vmatpush1.xpose.msra.mxu0 0.0
    %3935 = vmatprep.subr.mxu0 0.0
    %3936 = vmatpush1.xpose.msra.mxu0 0.0
    %3937 = vmatprep.subr.mxu0 0.0
    %3938 = vmatpush1.xpose.msra.mxu0 0.0
    %3939 = vmatprep.subr.mxu0 0.0
    %3940 = vmatpush1.xpose.msra.mxu0 0.0
    %3941 = vmatprep.subr.mxu0 0.0
    %3942 = vmatpush1.xpose.msra.mxu0 0.0
    %3943 = vmatprep.subr.mxu0 0.0
    %3944 = vmatpush1.xpose.msra.mxu0 0.0
    %3945 = vmatprep.subr.mxu0 0.0
    %3946 = vmatpush1.xpose.msra.mxu0 0.0
    %3947 = vmatprep.subr.mxu0 0.0
    %3948 = vmatpush1.xpose.msra.mxu0 0.0
    %3949 = vmatprep.subr.mxu0 0.0
    %3950 = vmatpush1.xpose.msra.mxu0 0.0
    %3951 = vmatprep.subr.mxu0 0.0
    %3952 = vmatpush1.xpose.msra.mxu0 0.0
    %3953 = vmatprep.subr.mxu0 0.0
    %3954 = vmatpush1.xpose.msra.mxu0 0.0
    %3955 = vmatprep.subr.mxu0 0.0
    %3956 = vmatpush1.xpose.msra.mxu0 0.0
    %3957 = vmatprep.subr.mxu0 0.0
    %3958 = vmatpush1.xpose.msra.mxu0 0.0
    %3959 = vmatprep.subr.mxu0 0.0
    %3960 = vmatpush1.xpose.msra.mxu0 0.0
    %3961 = vmatprep.subr.mxu0 0.0
    %3962 = vmatpush1.xpose.msra.mxu0 0.0
    %3963 = vmatprep.subr.mxu0 0.0
    %3964 = vmatpush1.xpose.msra.mxu0 0.0
    %3965 = vmatprep.subr.mxu0 0.0
    %3966 = vmatpush1.xpose.msra.mxu0 0.0
    %3967 = vmatprep.subr.mxu0 0.0
    %3968 = vmatpush1.xpose.msra.mxu0 0.0
    %3969 = vmatprep.subr.mxu0 0.0
    %3970 = vmatpush1.xpose.msra.mxu0 0.0
    %3971 = vmatprep.subr.mxu0 0.0
    %3972 = vmatpush1.xpose.msra.mxu0 0.0
    %3973 = vmatprep.subr.mxu0 0.0
    %3974 = vmatpush1.xpose.msra.mxu0 0.0
    %3975 = vmatprep.subr.mxu0 0.0
    %3976 = vmatpush1.xpose.msra.mxu0 0.0
    %3977 = vmatprep.subr.mxu0 0.0
    %3978 = vmatpush1.xpose.msra.mxu0 0.0
    %3979 = vmatprep.subr.mxu0 0.0
    %3980 = vmatpush1.xpose.msra.mxu0 0.0
    %3981 = vmatprep.subr.mxu0 0.0
    %3982 = vmatpush1.xpose.msra.mxu0 0.0
    %3983 = vmatprep.subr.mxu0 0.0
    %3984 = vmatpush1.xpose.msra.mxu0 0.0
    %3985 = vmatprep.subr.mxu0 0.0
    %3986 = vmatpush1.xpose.msra.mxu0 0.0
    %3987 = vmatprep.subr.mxu0 0.0
    %3988 = vmatpush1.xpose.msra.mxu0 0.0
    %3989 = vmatprep.subr.mxu0 0.0
    %3990 = vmatpush1.xpose.msra.mxu0 0.0
    %3991 = vmatprep.mubr.f32.mxu0 0.0
    %3992 = vmatmul.mubr.f32.gmra.mrb[0].mxu0 %v3923
    %v3993 = vpop.f32.mrb[0].mxu0
    %v3994 = vadd.f32 %v365, %v3993
    %v3995 = vpop.f32.mrb[0].mxu0
    %3996 = vdwg.mxu0
    %3997 = vrot.lane.b32.xlu0 %v150, 80
    %v3998 = vpop.permute.xlu0 %3997
    %3999 = vrot.lane.b32.xlu0 %v296, 80
    %v4000 = vpop.permute.xlu0 %3999
    %v4001 = vsel %vm374, %v3998, 0
    %v4003 = vsel %vm374, %v4000, 0
    %4005 = vmatprep.subr.mxu0 0.0
    %4006 = vmatpush1.xpose.msra.mxu0 %v4003
    %4007 = vmatprep.subr.mxu0 0.0
    %4008 = vmatpush1.xpose.msra.mxu0 0.0
    %4009 = vmatprep.subr.mxu0 0.0
    %4010 = vmatpush1.xpose.msra.mxu0 0.0
    %4011 = vmatprep.subr.mxu0 0.0
    %4012 = vmatpush1.xpose.msra.mxu0 0.0
    %4013 = vmatprep.subr.mxu0 0.0
    %4014 = vmatpush1.xpose.msra.mxu0 0.0
    %4015 = vmatprep.subr.mxu0 0.0
    %4016 = vmatpush1.xpose.msra.mxu0 0.0
    %4017 = vmatprep.subr.mxu0 0.0
    %4018 = vmatpush1.xpose.msra.mxu0 0.0
    %4019 = vmatprep.subr.mxu0 0.0
    %4020 = vmatpush1.xpose.msra.mxu0 0.0
    %4021 = vmatprep.subr.mxu0 0.0
    %4022 = vmatpush1.xpose.msra.mxu0 0.0
    %4023 = vmatprep.subr.mxu0 0.0
    %4024 = vmatpush1.xpose.msra.mxu0 0.0
    %4025 = vmatprep.subr.mxu0 0.0
    %4026 = vmatpush1.xpose.msra.mxu0 0.0
    %4027 = vmatprep.subr.mxu0 0.0
    %4028 = vmatpush1.xpose.msra.mxu0 0.0
    %4029 = vmatprep.subr.mxu0 0.0
    %4030 = vmatpush1.xpose.msra.mxu0 0.0
    %4031 = vmatprep.subr.mxu0 0.0
    %4032 = vmatpush1.xpose.msra.mxu0 0.0
    %4033 = vmatprep.subr.mxu0 0.0
    %4034 = vmatpush1.xpose.msra.mxu0 0.0
    %4035 = vmatprep.subr.mxu0 0.0
    %4036 = vmatpush1.xpose.msra.mxu0 0.0
    %4037 = vmatprep.subr.mxu0 0.0
    %4038 = vmatpush1.xpose.msra.mxu0 0.0
    %4039 = vmatprep.subr.mxu0 0.0
    %4040 = vmatpush1.xpose.msra.mxu0 0.0
    %4041 = vmatprep.subr.mxu0 0.0
    %4042 = vmatpush1.xpose.msra.mxu0 0.0
    %4043 = vmatprep.subr.mxu0 0.0
    %4044 = vmatpush1.xpose.msra.mxu0 0.0
    %4045 = vmatprep.subr.mxu0 0.0
    %4046 = vmatpush1.xpose.msra.mxu0 0.0
    %4047 = vmatprep.subr.mxu0 0.0
    %4048 = vmatpush1.xpose.msra.mxu0 0.0
    %4049 = vmatprep.subr.mxu0 0.0
    %4050 = vmatpush1.xpose.msra.mxu0 0.0
    %4051 = vmatprep.subr.mxu0 0.0
    %4052 = vmatpush1.xpose.msra.mxu0 0.0
    %4053 = vmatprep.subr.mxu0 0.0
    %4054 = vmatpush1.xpose.msra.mxu0 0.0
    %4055 = vmatprep.subr.mxu0 0.0
    %4056 = vmatpush1.xpose.msra.mxu0 0.0
    %4057 = vmatprep.subr.mxu0 0.0
    %4058 = vmatpush1.xpose.msra.mxu0 0.0
    %4059 = vmatprep.subr.mxu0 0.0
    %4060 = vmatpush1.xpose.msra.mxu0 0.0
    %4061 = vmatprep.subr.mxu0 0.0
    %4062 = vmatpush1.xpose.msra.mxu0 0.0
    %4063 = vmatprep.subr.mxu0 0.0
    %4064 = vmatpush1.xpose.msra.mxu0 0.0
    %4065 = vmatprep.subr.mxu0 0.0
    %4066 = vmatpush1.xpose.msra.mxu0 0.0
    %4067 = vmatprep.subr.mxu0 0.0
    %4068 = vmatpush1.xpose.msra.mxu0 0.0
    %4069 = vmatprep.mubr.f32.mxu0 0.0
    %4070 = vmatmul.mubr.f32.gmra.mrb[0].mxu0 %v4001
    %v4071 = vpop.f32.mrb[0].mxu0
    %v4072 = vadd.f32 %v369, %v4071
    %v4073 = vpop.f32.mrb[0].mxu0
    %4074 = vdwg.mxu0
    %4075 = vrot.lane.b32.xlu0 %v155, 80
    %v4076 = vpop.permute.xlu0 %4075
    %4077 = vrot.lane.b32.xlu0 %v301, 80
    %v4078 = vpop.permute.xlu0 %4077
    %v4079 = vsel %vm374, %v4076, 0
    %v4081 = vsel %vm374, %v4078, 0
    %4083 = vmatprep.subr.mxu0 0.0
    %4084 = vmatpush1.xpose.msra.mxu0 %v4081
    %4085 = vmatprep.subr.mxu0 0.0
    %4086 = vmatpush1.xpose.msra.mxu0 0.0
    %4087 = vmatprep.subr.mxu0 0.0
    %4088 = vmatpush1.xpose.msra.mxu0 0.0
    %4089 = vmatprep.subr.mxu0 0.0
    %4090 = vmatpush1.xpose.msra.mxu0 0.0
    %4091 = vmatprep.subr.mxu0 0.0
    %4092 = vmatpush1.xpose.msra.mxu0 0.0
    %4093 = vmatprep.subr.mxu0 0.0
    %4094 = vmatpush1.xpose.msra.mxu0 0.0
    %4095 = vmatprep.subr.mxu0 0.0
    %4096 = vmatpush1.xpose.msra.mxu0 0.0
    %4097 = vmatprep.subr.mxu0 0.0
    %4098 = vmatpush1.xpose.msra.mxu0 0.0
    %4099 = vmatprep.subr.mxu0 0.0
    %4100 = vmatpush1.xpose.msra.mxu0 0.0
    %4101 = vmatprep.subr.mxu0 0.0
    %4102 = vmatpush1.xpose.msra.mxu0 0.0
    %4103 = vmatprep.subr.mxu0 0.0
    %4104 = vmatpush1.xpose.msra.mxu0 0.0
    %4105 = vmatprep.subr.mxu0 0.0
    %4106 = vmatpush1.xpose.msra.mxu0 0.0
    %4107 = vmatprep.subr.mxu0 0.0
    %4108 = vmatpush1.xpose.msra.mxu0 0.0
    %4109 = vmatprep.subr.mxu0 0.0
    %4110 = vmatpush1.xpose.msra.mxu0 0.0
    %4111 = vmatprep.subr.mxu0 0.0
    %4112 = vmatpush1.xpose.msra.mxu0 0.0
    %4113 = vmatprep.subr.mxu0 0.0
    %4114 = vmatpush1.xpose.msra.mxu0 0.0
    %4115 = vmatprep.subr.mxu0 0.0
    %4116 = vmatpush1.xpose.msra.mxu0 0.0
    %4117 = vmatprep.subr.mxu0 0.0
    %4118 = vmatpush1.xpose.msra.mxu0 0.0
    %4119 = vmatprep.subr.mxu0 0.0
    %4120 = vmatpush1.xpose.msra.mxu0 0.0
    %4121 = vmatprep.subr.mxu0 0.0
    %4122 = vmatpush1.xpose.msra.mxu0 0.0
    %4123 = vmatprep.subr.mxu0 0.0
    %4124 = vmatpush1.xpose.msra.mxu0 0.0
    %4125 = vmatprep.subr.mxu0 0.0
    %4126 = vmatpush1.xpose.msra.mxu0 0.0
    %4127 = vmatprep.subr.mxu0 0.0
    %4128 = vmatpush1.xpose.msra.mxu0 0.0
    %4129 = vmatprep.subr.mxu0 0.0
    %4130 = vmatpush1.xpose.msra.mxu0 0.0
    %4131 = vmatprep.subr.mxu0 0.0
    %4132 = vmatpush1.xpose.msra.mxu0 0.0
    %4133 = vmatprep.subr.mxu0 0.0
    %4134 = vmatpush1.xpose.msra.mxu0 0.0
    %4135 = vmatprep.subr.mxu0 0.0
    %4136 = vmatpush1.xpose.msra.mxu0 0.0
    %4137 = vmatprep.subr.mxu0 0.0
    %4138 = vmatpush1.xpose.msra.mxu0 0.0
    %4139 = vmatprep.subr.mxu0 0.0
    %4140 = vmatpush1.xpose.msra.mxu0 0.0
    %4141 = vmatprep.subr.mxu0 0.0
    %4142 = vmatpush1.xpose.msra.mxu0 0.0
    %4143 = vmatprep.subr.mxu0 0.0
    %4144 = vmatpush1.xpose.msra.mxu0 0.0
    %4145 = vmatprep.subr.mxu0 0.0
    %4146 = vmatpush1.xpose.msra.mxu0 0.0
    %4147 = vmatprep.mubr.f32.mxu0 0.0
    %4148 = vmatmul.mubr.f32.gmra.mrb[0].mxu0 %v4079
    %v4149 = vpop.f32.mrb[0].mxu0
    %v4150 = vadd.f32 %v373, %v4149
    %v4151 = vpop.f32.mrb[0].mxu0
    %4152 = vdwg.mxu0
    %v4153 = vsel %vm831, %v3760, -inf
    %4154 = vmax.xlane.f32.xlu0 %v4153
    %v4155 = vpop.xlane.xlu0 %4154
    %v4156 = vsel %vm831, %v3838, -inf
    %4157 = vmax.xlane.f32.xlu0 %v4156
    %v4158 = vpop.xlane.xlu0 %4157
    %v4159 = vsel %vm831, %v3916, -inf
    %4160 = vmax.xlane.f32.xlu0 %v4159
    %v4161 = vpop.xlane.xlu0 %4160
    %v4162 = vsel %vm831, %v3994, -inf
    %4163 = vmax.xlane.f32.xlu0 %v4162
    %v4164 = vpop.xlane.xlu0 %4163
    %v4165 = vsel %vm831, %v4072, -inf
    %4166 = vmax.xlane.f32.xlu0 %v4165
    %v4167 = vpop.xlane.xlu0 %4166
    %v4168 = vsel %vm831, %v4150, -inf
    %4169 = vmax.xlane.f32.xlu0 %v4168
    %v4170 = vpop.xlane.xlu0 %4169
    %v4171 = vsub.f32 %v3760, %v4155
    %v4172 = vsub.f32 %v3838, %v4158
    %v4173 = vsub.f32 %v3916, %v4161
    %v4174 = vsub.f32 %v3994, %v4164
    %v4175 = vsub.f32 %v4072, %v4167
    %v4176 = vsub.f32 %v4150, %v4170
    %v4177 = vmul.f32 %v4171, 1.442695
    %v4178 = vpow.pop %v4177
    %v4179 = vmul.f32 %v4172, 1.442695
    %v4180 = vpow.pop %v4179
    %v4181 = vmul.f32 %v4173, 1.442695
    %v4182 = vpow.pop %v4181
    %v4183 = vmul.f32 %v4174, 1.442695
    %v4184 = vpow.pop %v4183
    %v4185 = vmul.f32 %v4175, 1.442695
    %v4186 = vpow.pop %v4185
    %v4187 = vmul.f32 %v4176, 1.442695
    %v4188 = vpow.pop %v4187
    %v4189 = vsel %vm831, %v4178, 0.0
    %4190 = vadd.xlane.f32.xlu0 %v4189
    %v4191 = vpop.xlane.xlu0 %4190
    %v4192 = vsel %vm831, %v4180, 0.0
    %4193 = vadd.xlane.f32.xlu0 %v4192
    %v4194 = vpop.xlane.xlu0 %4193
    %v4195 = vsel %vm831, %v4182, 0.0
    %4196 = vadd.xlane.f32.xlu0 %v4195
    %v4197 = vpop.xlane.xlu0 %4196
    %v4198 = vsel %vm831, %v4184, 0.0
    %4199 = vadd.xlane.f32.xlu0 %v4198
    %v4200 = vpop.xlane.xlu0 %4199
    %v4201 = vsel %vm831, %v4186, 0.0
    %4202 = vadd.xlane.f32.xlu0 %v4201
    %v4203 = vpop.xlane.xlu0 %4202
    %v4204 = vsel %vm831, %v4188, 0.0
    %4205 = vadd.xlane.f32.xlu0 %v4204
    %v4206 = vpop.xlane.xlu0 %4205
    %v4207 = vrcp.pop %v4191
    %v4208 = vrcp.pop %v4194
    %v4209 = vrcp.pop %v4197
    %v4210 = vrcp.pop %v4200
    %v4211 = vrcp.pop %v4203
    %v4212 = vrcp.pop %v4206
    %v4213 = vmul.f32 %v4178, %v4207
    %v4214 = vmul.f32 %v4180, %v4208
    %v4215 = vmul.f32 %v4182, %v4209
    %v4216 = vmul.f32 %v4184, %v4210
    %v4217 = vmul.f32 %v4186, %v4211
    %v4218 = vmul.f32 %v4188, %v4212
    %4219 = vrot.lane.b32.xlu0 %v276, 16
    %v4220 = vpop.permute.xlu0 %4219
    %v4223 = vsel %vm831, %v4213, 0
    %4225 = vmatprep.subr.mxu0 0.0
    %4226 = vmatpush1.msra.mxu0 %v4220
    %4227 = vmatprep.subr.mxu0 0.0
    %4228 = vmatpush1.msra.mxu0 0.0
    %4229 = vmatprep.subr.mxu0 0.0
    %4230 = vmatpush1.msra.mxu0 0.0
    %4231 = vmatprep.subr.mxu0 0.0
    %4232 = vmatpush1.msra.mxu0 0.0
    %4233 = vmatprep.subr.mxu0 0.0
    %4234 = vmatpush1.msra.mxu0 0.0
    %4235 = vmatprep.subr.mxu0 0.0
    %4236 = vmatpush1.msra.mxu0 0.0
    %4237 = vmatprep.subr.mxu0 0.0
    %4238 = vmatpush1.msra.mxu0 0.0
    %4239 = vmatprep.subr.mxu0 0.0
    %4240 = vmatpush1.msra.mxu0 0.0
    %4241 = vmatprep.subr.mxu0 0.0
    %4242 = vmatpush1.msra.mxu0 0.0
    %4243 = vmatprep.subr.mxu0 0.0
    %4244 = vmatpush1.msra.mxu0 0.0
    %4245 = vmatprep.subr.mxu0 0.0
    %4246 = vmatpush1.msra.mxu0 0.0
    %4247 = vmatprep.subr.mxu0 0.0
    %4248 = vmatpush1.msra.mxu0 0.0
    %4249 = vmatprep.subr.mxu0 0.0
    %4250 = vmatpush1.msra.mxu0 0.0
    %4251 = vmatprep.subr.mxu0 0.0
    %4252 = vmatpush1.msra.mxu0 0.0
    %4253 = vmatprep.subr.mxu0 0.0
    %4254 = vmatpush1.msra.mxu0 0.0
    %4255 = vmatprep.subr.mxu0 0.0
    %4256 = vmatpush1.msra.mxu0 0.0
    %4257 = vmatprep.subr.mxu0 0.0
    %4258 = vmatpush1.msra.mxu0 0.0
    %4259 = vmatprep.subr.mxu0 0.0
    %4260 = vmatpush1.msra.mxu0 0.0
    %4261 = vmatprep.subr.mxu0 0.0
    %4262 = vmatpush1.msra.mxu0 0.0
    %4263 = vmatprep.subr.mxu0 0.0
    %4264 = vmatpush1.msra.mxu0 0.0
    %4265 = vmatprep.subr.mxu0 0.0
    %4266 = vmatpush1.msra.mxu0 0.0
    %4267 = vmatprep.subr.mxu0 0.0
    %4268 = vmatpush1.msra.mxu0 0.0
    %4269 = vmatprep.subr.mxu0 0.0
    %4270 = vmatpush1.msra.mxu0 0.0
    %4271 = vmatprep.subr.mxu0 0.0
    %4272 = vmatpush1.msra.mxu0 0.0
    %4273 = vmatprep.subr.mxu0 0.0
    %4274 = vmatpush1.msra.mxu0 0.0
    %4275 = vmatprep.subr.mxu0 0.0
    %4276 = vmatpush1.msra.mxu0 0.0
    %4277 = vmatprep.subr.mxu0 0.0
    %4278 = vmatpush1.msra.mxu0 0.0
    %4279 = vmatprep.subr.mxu0 0.0
    %4280 = vmatpush1.msra.mxu0 0.0
    %4281 = vmatprep.subr.mxu0 0.0
    %4282 = vmatpush1.msra.mxu0 0.0
    %4283 = vmatprep.subr.mxu0 0.0
    %4284 = vmatpush1.msra.mxu0 0.0
    %4285 = vmatprep.subr.mxu0 0.0
    %4286 = vmatpush1.msra.mxu0 0.0
    %4287 = vmatprep.subr.mxu0 0.0
    %4288 = vmatpush1.msra.mxu0 0.0
    %4289 = vmatprep.mubr.f32.mxu0 0.0
    %4290 = vmatmul.mubr.f32.gmra.mrb[0].mxu0 %v4223
    %v4291 = vpop.f32.mrb[0].mxu0
    %v4292 = vadd.f32 0.0, %v4291
    %v4293 = vpop.f32.mrb[0].mxu0
    %4294 = vdwg.mxu0
    %4295 = vrot.lane.b32.xlu0 %v281, 16
    %v4296 = vpop.permute.xlu0 %4295
    %v4299 = vsel %vm831, %v4214, 0
    %4301 = vmatprep.subr.mxu0 0.0
    %4302 = vmatpush1.msra.mxu0 %v4296
    %4303 = vmatprep.subr.mxu0 0.0
    %4304 = vmatpush1.msra.mxu0 0.0
    %4305 = vmatprep.subr.mxu0 0.0
    %4306 = vmatpush1.msra.mxu0 0.0
    %4307 = vmatprep.subr.mxu0 0.0
    %4308 = vmatpush1.msra.mxu0 0.0
    %4309 = vmatprep.subr.mxu0 0.0
    %4310 = vmatpush1.msra.mxu0 0.0
    %4311 = vmatprep.subr.mxu0 0.0
    %4312 = vmatpush1.msra.mxu0 0.0
    %4313 = vmatprep.subr.mxu0 0.0
    %4314 = vmatpush1.msra.mxu0 0.0
    %4315 = vmatprep.subr.mxu0 0.0
    %4316 = vmatpush1.msra.mxu0 0.0
    %4317 = vmatprep.subr.mxu0 0.0
    %4318 = vmatpush1.msra.mxu0 0.0
    %4319 = vmatprep.subr.mxu0 0.0
    %4320 = vmatpush1.msra.mxu0 0.0
    %4321 = vmatprep.subr.mxu0 0.0
    %4322 = vmatpush1.msra.mxu0 0.0
    %4323 = vmatprep.subr.mxu0 0.0
    %4324 = vmatpush1.msra.mxu0 0.0
    %4325 = vmatprep.subr.mxu0 0.0
    %4326 = vmatpush1.msra.mxu0 0.0
    %4327 = vmatprep.subr.mxu0 0.0
    %4328 = vmatpush1.msra.mxu0 0.0
    %4329 = vmatprep.subr.mxu0 0.0
    %4330 = vmatpush1.msra.mxu0 0.0
    %4331 = vmatprep.subr.mxu0 0.0
    %4332 = vmatpush1.msra.mxu0 0.0
    %4333 = vmatprep.subr.mxu0 0.0
    %4334 = vmatpush1.msra.mxu0 0.0
    %4335 = vmatprep.subr.mxu0 0.0
    %4336 = vmatpush1.msra.mxu0 0.0
    %4337 = vmatprep.subr.mxu0 0.0
    %4338 = vmatpush1.msra.mxu0 0.0
    %4339 = vmatprep.subr.mxu0 0.0
    %4340 = vmatpush1.msra.mxu0 0.0
    %4341 = vmatprep.subr.mxu0 0.0
    %4342 = vmatpush1.msra.mxu0 0.0
    %4343 = vmatprep.subr.mxu0 0.0
    %4344 = vmatpush1.msra.mxu0 0.0
    %4345 = vmatprep.subr.mxu0 0.0
    %4346 = vmatpush1.msra.mxu0 0.0
    %4347 = vmatprep.subr.mxu0 0.0
    %4348 = vmatpush1.msra.mxu0 0.0
    %4349 = vmatprep.subr.mxu0 0.0
    %4350 = vmatpush1.msra.mxu0 0.0
    %4351 = vmatprep.subr.mxu0 0.0
    %4352 = vmatpush1.msra.mxu0 0.0
    %4353 = vmatprep.subr.mxu0 0.0
    %4354 = vmatpush1.msra.mxu0 0.0
    %4355 = vmatprep.subr.mxu0 0.0
    %4356 = vmatpush1.msra.mxu0 0.0
    %4357 = vmatprep.subr.mxu0 0.0
    %4358 = vmatpush1.msra.mxu0 0.0
    %4359 = vmatprep.subr.mxu0 0.0
    %4360 = vmatpush1.msra.mxu0 0.0
    %4361 = vmatprep.subr.mxu0 0.0
    %4362 = vmatpush1.msra.mxu0 0.0
    %4363 = vmatprep.subr.mxu0 0.0
    %4364 = vmatpush1.msra.mxu0 0.0
    %4365 = vmatprep.mubr.f32.mxu0 0.0
    %4366 = vmatmul.mubr.f32.gmra.mrb[0].mxu0 %v4299
    %v4367 = vpop.f32.mrb[0].mxu0
    %v4368 = vadd.f32 0.0, %v4367
    %v4369 = vpop.f32.mrb[0].mxu0
    %4370 = vdwg.mxu0
    %4371 = vrot.lane.b32.xlu0 %v286, 16
    %v4372 = vpop.permute.xlu0 %4371
    %v4375 = vsel %vm831, %v4215, 0
    %4377 = vmatprep.subr.mxu0 0.0
    %4378 = vmatpush1.msra.mxu0 %v4372
    %4379 = vmatprep.subr.mxu0 0.0
    %4380 = vmatpush1.msra.mxu0 0.0
    %4381 = vmatprep.subr.mxu0 0.0
    %4382 = vmatpush1.msra.mxu0 0.0
    %4383 = vmatprep.subr.mxu0 0.0
    %4384 = vmatpush1.msra.mxu0 0.0
    %4385 = vmatprep.subr.mxu0 0.0
    %4386 = vmatpush1.msra.mxu0 0.0
    %4387 = vmatprep.subr.mxu0 0.0
    %4388 = vmatpush1.msra.mxu0 0.0
    %4389 = vmatprep.subr.mxu0 0.0
    %4390 = vmatpush1.msra.mxu0 0.0
    %4391 = vmatprep.subr.mxu0 0.0
    %4392 = vmatpush1.msra.mxu0 0.0
    %4393 = vmatprep.subr.mxu0 0.0
    %4394 = vmatpush1.msra.mxu0 0.0
    %4395 = vmatprep.subr.mxu0 0.0
    %4396 = vmatpush1.msra.mxu0 0.0
    %4397 = vmatprep.subr.mxu0 0.0
    %4398 = vmatpush1.msra.mxu0 0.0
    %4399 = vmatprep.subr.mxu0 0.0
    %4400 = vmatpush1.msra.mxu0 0.0
    %4401 = vmatprep.subr.mxu0 0.0
    %4402 = vmatpush1.msra.mxu0 0.0
    %4403 = vmatprep.subr.mxu0 0.0
    %4404 = vmatpush1.msra.mxu0 0.0
    %4405 = vmatprep.subr.mxu0 0.0
    %4406 = vmatpush1.msra.mxu0 0.0
    %4407 = vmatprep.subr.mxu0 0.0
    %4408 = vmatpush1.msra.mxu0 0.0
    %4409 = vmatprep.subr.mxu0 0.0
    %4410 = vmatpush1.msra.mxu0 0.0
    %4411 = vmatprep.subr.mxu0 0.0
    %4412 = vmatpush1.msra.mxu0 0.0
    %4413 = vmatprep.subr.mxu0 0.0
    %4414 = vmatpush1.msra.mxu0 0.0
    %4415 = vmatprep.subr.mxu0 0.0
    %4416 = vmatpush1.msra.mxu0 0.0
    %4417 = vmatprep.subr.mxu0 0.0
    %4418 = vmatpush1.msra.mxu0 0.0
    %4419 = vmatprep.subr.mxu0 0.0
    %4420 = vmatpush1.msra.mxu0 0.0
    %4421 = vmatprep.subr.mxu0 0.0
    %4422 = vmatpush1.msra.mxu0 0.0
    %4423 = vmatprep.subr.mxu0 0.0
    %4424 = vmatpush1.msra.mxu0 0.0
    %4425 = vmatprep.subr.mxu0 0.0
    %4426 = vmatpush1.msra.mxu0 0.0
    %4427 = vmatprep.subr.mxu0 0.0
    %4428 = vmatpush1.msra.mxu0 0.0
    %4429 = vmatprep.subr.mxu0 0.0
    %4430 = vmatpush1.msra.mxu0 0.0
    %4431 = vmatprep.subr.mxu0 0.0
    %4432 = vmatpush1.msra.mxu0 0.0
    %4433 = vmatprep.subr.mxu0 0.0
    %4434 = vmatpush1.msra.mxu0 0.0
    %4435 = vmatprep.subr.mxu0 0.0
    %4436 = vmatpush1.msra.mxu0 0.0
    %4437 = vmatprep.subr.mxu0 0.0
    %4438 = vmatpush1.msra.mxu0 0.0
    %4439 = vmatprep.subr.mxu0 0.0
    %4440 = vmatpush1.msra.mxu0 0.0
    %4441 = vmatprep.mubr.f32.mxu0 0.0
    %4442 = vmatmul.mubr.f32.gmra.mrb[0].mxu0 %v4375
    %v4443 = vpop.f32.mrb[0].mxu0
    %v4444 = vadd.f32 0.0, %v4443
    %v4445 = vpop.f32.mrb[0].mxu0
    %4446 = vdwg.mxu0
    %4447 = vrot.lane.b32.xlu0 %v291, 16
    %v4448 = vpop.permute.xlu0 %4447
    %v4451 = vsel %vm831, %v4216, 0
    %4453 = vmatprep.subr.mxu0 0.0
    %4454 = vmatpush1.msra.mxu0 %v4448
    %4455 = vmatprep.subr.mxu0 0.0
    %4456 = vmatpush1.msra.mxu0 0.0
    %4457 = vmatprep.subr.mxu0 0.0
    %4458 = vmatpush1.msra.mxu0 0.0
    %4459 = vmatprep.subr.mxu0 0.0
    %4460 = vmatpush1.msra.mxu0 0.0
    %4461 = vmatprep.subr.mxu0 0.0
    %4462 = vmatpush1.msra.mxu0 0.0
    %4463 = vmatprep.subr.mxu0 0.0
    %4464 = vmatpush1.msra.mxu0 0.0
    %4465 = vmatprep.subr.mxu0 0.0
    %4466 = vmatpush1.msra.mxu0 0.0
    %4467 = vmatprep.subr.mxu0 0.0
    %4468 = vmatpush1.msra.mxu0 0.0
    %4469 = vmatprep.subr.mxu0 0.0
    %4470 = vmatpush1.msra.mxu0 0.0
    %4471 = vmatprep.subr.mxu0 0.0
    %4472 = vmatpush1.msra.mxu0 0.0
    %4473 = vmatprep.subr.mxu0 0.0
    %4474 = vmatpush1.msra.mxu0 0.0
    %4475 = vmatprep.subr.mxu0 0.0
    %4476 = vmatpush1.msra.mxu0 0.0
    %4477 = vmatprep.subr.mxu0 0.0
    %4478 = vmatpush1.msra.mxu0 0.0
    %4479 = vmatprep.subr.mxu0 0.0
    %4480 = vmatpush1.msra.mxu0 0.0
    %4481 = vmatprep.subr.mxu0 0.0
    %4482 = vmatpush1.msra.mxu0 0.0
    %4483 = vmatprep.subr.mxu0 0.0
    %4484 = vmatpush1.msra.mxu0 0.0
    %4485 = vmatprep.subr.mxu0 0.0
    %4486 = vmatpush1.msra.mxu0 0.0
    %4487 = vmatprep.subr.mxu0 0.0
    %4488 = vmatpush1.msra.mxu0 0.0
    %4489 = vmatprep.subr.mxu0 0.0
    %4490 = vmatpush1.msra.mxu0 0.0
    %4491 = vmatprep.subr.mxu0 0.0
    %4492 = vmatpush1.msra.mxu0 0.0
    %4493 = vmatprep.subr.mxu0 0.0
    %4494 = vmatpush1.msra.mxu0 0.0
    %4495 = vmatprep.subr.mxu0 0.0
    %4496 = vmatpush1.msra.mxu0 0.0
    %4497 = vmatprep.subr.mxu0 0.0
    %4498 = vmatpush1.msra.mxu0 0.0
    %4499 = vmatprep.subr.mxu0 0.0
    %4500 = vmatpush1.msra.mxu0 0.0
    %4501 = vmatprep.subr.mxu0 0.0
    %4502 = vmatpush1.msra.mxu0 0.0
    %4503 = vmatprep.subr.mxu0 0.0
    %4504 = vmatpush1.msra.mxu0 0.0
    %4505 = vmatprep.subr.mxu0 0.0
    %4506 = vmatpush1.msra.mxu0 0.0
    %4507 = vmatprep.subr.mxu0 0.0
    %4508 = vmatpush1.msra.mxu0 0.0
    %4509 = vmatprep.subr.mxu0 0.0
    %4510 = vmatpush1.msra.mxu0 0.0
    %4511 = vmatprep.subr.mxu0 0.0
    %4512 = vmatpush1.msra.mxu0 0.0
    %4513 = vmatprep.subr.mxu0 0.0
    %4514 = vmatpush1.msra.mxu0 0.0
    %4515 = vmatprep.subr.mxu0 0.0
    %4516 = vmatpush1.msra.mxu0 0.0
    %4517 = vmatprep.mubr.f32.mxu0 0.0
    %4518 = vmatmul.mubr.f32.gmra.mrb[0].mxu0 %v4451
    %v4519 = vpop.f32.mrb[0].mxu0
    %v4520 = vadd.f32 0.0, %v4519
    %v4521 = vpop.f32.mrb[0].mxu0
    %4522 = vdwg.mxu0
    %4523 = vrot.lane.b32.xlu0 %v296, 16
    %v4524 = vpop.permute.xlu0 %4523
    %v4527 = vsel %vm831, %v4217, 0
    %4529 = vmatprep.subr.mxu0 0.0
    %4530 = vmatpush1.msra.mxu0 %v4524
    %4531 = vmatprep.subr.mxu0 0.0
    %4532 = vmatpush1.msra.mxu0 0.0
    %4533 = vmatprep.subr.mxu0 0.0
    %4534 = vmatpush1.msra.mxu0 0.0
    %4535 = vmatprep.subr.mxu0 0.0
    %4536 = vmatpush1.msra.mxu0 0.0
    %4537 = vmatprep.subr.mxu0 0.0
    %4538 = vmatpush1.msra.mxu0 0.0
    %4539 = vmatprep.subr.mxu0 0.0
    %4540 = vmatpush1.msra.mxu0 0.0
    %4541 = vmatprep.subr.mxu0 0.0
    %4542 = vmatpush1.msra.mxu0 0.0
    %4543 = vmatprep.subr.mxu0 0.0
    %4544 = vmatpush1.msra.mxu0 0.0
    %4545 = vmatprep.subr.mxu0 0.0
    %4546 = vmatpush1.msra.mxu0 0.0
    %4547 = vmatprep.subr.mxu0 0.0
    %4548 = vmatpush1.msra.mxu0 0.0
    %4549 = vmatprep.subr.mxu0 0.0
    %4550 = vmatpush1.msra.mxu0 0.0
    %4551 = vmatprep.subr.mxu0 0.0
    %4552 = vmatpush1.msra.mxu0 0.0
    %4553 = vmatprep.subr.mxu0 0.0
    %4554 = vmatpush1.msra.mxu0 0.0
    %4555 = vmatprep.subr.mxu0 0.0
    %4556 = vmatpush1.msra.mxu0 0.0
    %4557 = vmatprep.subr.mxu0 0.0
    %4558 = vmatpush1.msra.mxu0 0.0
    %4559 = vmatprep.subr.mxu0 0.0
    %4560 = vmatpush1.msra.mxu0 0.0
    %4561 = vmatprep.subr.mxu0 0.0
    %4562 = vmatpush1.msra.mxu0 0.0
    %4563 = vmatprep.subr.mxu0 0.0
    %4564 = vmatpush1.msra.mxu0 0.0
    %4565 = vmatprep.subr.mxu0 0.0
    %4566 = vmatpush1.msra.mxu0 0.0
    %4567 = vmatprep.subr.mxu0 0.0
    %4568 = vmatpush1.msra.mxu0 0.0
    %4569 = vmatprep.subr.mxu0 0.0
    %4570 = vmatpush1.msra.mxu0 0.0
    %4571 = vmatprep.subr.mxu0 0.0
    %4572 = vmatpush1.msra.mxu0 0.0
    %4573 = vmatprep.subr.mxu0 0.0
    %4574 = vmatpush1.msra.mxu0 0.0
    %4575 = vmatprep.subr.mxu0 0.0
    %4576 = vmatpush1.msra.mxu0 0.0
    %4577 = vmatprep.subr.mxu0 0.0
    %4578 = vmatpush1.msra.mxu0 0.0
    %4579 = vmatprep.subr.mxu0 0.0
    %4580 = vmatpush1.msra.mxu0 0.0
    %4581 = vmatprep.subr.mxu0 0.0
    %4582 = vmatpush1.msra.mxu0 0.0
    %4583 = vmatprep.subr.mxu0 0.0
    %4584 = vmatpush1.msra.mxu0 0.0
    %4585 = vmatprep.subr.mxu0 0.0
    %4586 = vmatpush1.msra.mxu0 0.0
    %4587 = vmatprep.subr.mxu0 0.0
    %4588 = vmatpush1.msra.mxu0 0.0
    %4589 = vmatprep.subr.mxu0 0.0
    %4590 = vmatpush1.msra.mxu0 0.0
    %4591 = vmatprep.subr.mxu0 0.0
    %4592 = vmatpush1.msra.mxu0 0.0
    %4593 = vmatprep.mubr.f32.mxu0 0.0
    %4594 = vmatmul.mubr.f32.gmra.mrb[0].mxu0 %v4527
    %v4595 = vpop.f32.mrb[0].mxu0
    %v4596 = vadd.f32 0.0, %v4595
    %v4597 = vpop.f32.mrb[0].mxu0
    %4598 = vdwg.mxu0
    %4599 = vrot.lane.b32.xlu0 %v301, 16
    %v4600 = vpop.permute.xlu0 %4599
    %v4603 = vsel %vm831, %v4218, 0
    %4605 = vmatprep.subr.mxu0 0.0
    %4606 = vmatpush1.msra.mxu0 %v4600
    %4607 = vmatprep.subr.mxu0 0.0
    %4608 = vmatpush1.msra.mxu0 0.0
    %4609 = vmatprep.subr.mxu0 0.0
    %4610 = vmatpush1.msra.mxu0 0.0
    %4611 = vmatprep.subr.mxu0 0.0
    %4612 = vmatpush1.msra.mxu0 0.0
    %4613 = vmatprep.subr.mxu0 0.0
    %4614 = vmatpush1.msra.mxu0 0.0
    %4615 = vmatprep.subr.mxu0 0.0
    %4616 = vmatpush1.msra.mxu0 0.0
    %4617 = vmatprep.subr.mxu0 0.0
    %4618 = vmatpush1.msra.mxu0 0.0
    %4619 = vmatprep.subr.mxu0 0.0
    %4620 = vmatpush1.msra.mxu0 0.0
    %4621 = vmatprep.subr.mxu0 0.0
    %4622 = vmatpush1.msra.mxu0 0.0
    %4623 = vmatprep.subr.mxu0 0.0
    %4624 = vmatpush1.msra.mxu0 0.0
    %4625 = vmatprep.subr.mxu0 0.0
    %4626 = vmatpush1.msra.mxu0 0.0
    %4627 = vmatprep.subr.mxu0 0.0
    %4628 = vmatpush1.msra.mxu0 0.0
    %4629 = vmatprep.subr.mxu0 0.0
    %4630 = vmatpush1.msra.mxu0 0.0
    %4631 = vmatprep.subr.mxu0 0.0
    %4632 = vmatpush1.msra.mxu0 0.0
    %4633 = vmatprep.subr.mxu0 0.0
    %4634 = vmatpush1.msra.mxu0 0.0
    %4635 = vmatprep.subr.mxu0 0.0
    %4636 = vmatpush1.msra.mxu0 0.0
    %4637 = vmatprep.subr.mxu0 0.0
    %4638 = vmatpush1.msra.mxu0 0.0
    %4639 = vmatprep.subr.mxu0 0.0
    %4640 = vmatpush1.msra.mxu0 0.0
    %4641 = vmatprep.subr.mxu0 0.0
    %4642 = vmatpush1.msra.mxu0 0.0
    %4643 = vmatprep.subr.mxu0 0.0
    %4644 = vmatpush1.msra.mxu0 0.0
    %4645 = vmatprep.subr.mxu0 0.0
    %4646 = vmatpush1.msra.mxu0 0.0
    %4647 = vmatprep.subr.mxu0 0.0
    %4648 = vmatpush1.msra.mxu0 0.0
    %4649 = vmatprep.subr.mxu0 0.0
    %4650 = vmatpush1.msra.mxu0 0.0
    %4651 = vmatprep.subr.mxu0 0.0
    %4652 = vmatpush1.msra.mxu0 0.0
    %4653 = vmatprep.subr.mxu0 0.0
    %4654 = vmatpush1.msra.mxu0 0.0
    %4655 = vmatprep.subr.mxu0 0.0
    %4656 = vmatpush1.msra.mxu0 0.0
    %4657 = vmatprep.subr.mxu0 0.0
    %4658 = vmatpush1.msra.mxu0 0.0
    %4659 = vmatprep.subr.mxu0 0.0
    %4660 = vmatpush1.msra.mxu0 0.0
    %4661 = vmatprep.subr.mxu0 0.0
    %4662 = vmatpush1.msra.mxu0 0.0
    %4663 = vmatprep.subr.mxu0 0.0
    %4664 = vmatpush1.msra.mxu0 0.0
    %4665 = vmatprep.subr.mxu0 0.0
    %4666 = vmatpush1.msra.mxu0 0.0
    %4667 = vmatprep.subr.mxu0 0.0
    %4668 = vmatpush1.msra.mxu0 0.0
    %4669 = vmatprep.mubr.f32.mxu0 0.0
    %4670 = vmatmul.mubr.f32.gmra.mrb[0].mxu0 %v4603
    %v4671 = vpop.f32.mrb[0].mxu0
    %v4672 = vadd.f32 0.0, %v4671
    %v4673 = vpop.f32.mrb[0].mxu0
    %4674 = vdwg.mxu0
    %v4675 = vld [vmem:[%s5 + $0x30] sm:$0xff]
    %v4676 = vld [vmem:[%s5 + $0x38] sm:$0xff]
    %v4678 = vsel %vm374, %v4292, 0
    %v4681 = vsel %vm374, %v4368, 0
    %v4684 = vsel %vm374, %v4444, 0
    %v4687 = vsel %vm374, %v4520, 0
    %v4690 = vsel %vm374, %v4596, 0
    %v4693 = vsel %vm374, %v4672, 0
    %4695 = vmatprep.subr.mxu0 0.0
    %4696 = vmatpush1.msra.mxu0 %v4675
    %4697 = vmatprep.subr.mxu0 0.0
    %4698 = vmatpush1.msra.mxu0 %v4676
    %4699 = vmatprep.subr.mxu0 0.0
    %4700 = vmatpush1.msra.mxu0 0.0
    %4701 = vmatprep.subr.mxu0 0.0
    %4702 = vmatpush1.msra.mxu0 0.0
    %4703 = vmatprep.subr.mxu0 0.0
    %4704 = vmatpush1.msra.mxu0 0.0
    %4705 = vmatprep.subr.mxu0 0.0
    %4706 = vmatpush1.msra.mxu0 0.0
    %4707 = vmatprep.subr.mxu0 0.0
    %4708 = vmatpush1.msra.mxu0 0.0
    %4709 = vmatprep.subr.mxu0 0.0
    %4710 = vmatpush1.msra.mxu0 0.0
    %4711 = vmatprep.subr.mxu0 0.0
    %4712 = vmatpush1.msra.mxu0 0.0
    %4713 = vmatprep.subr.mxu0 0.0
    %4714 = vmatpush1.msra.mxu0 0.0
    %4715 = vmatprep.subr.mxu0 0.0
    %4716 = vmatpush1.msra.mxu0 0.0
    %4717 = vmatprep.subr.mxu0 0.0
    %4718 = vmatpush1.msra.mxu0 0.0
    %4719 = vmatprep.subr.mxu0 0.0
    %4720 = vmatpush1.msra.mxu0 0.0
    %4721 = vmatprep.subr.mxu0 0.0
    %4722 = vmatpush1.msra.mxu0 0.0
    %4723 = vmatprep.subr.mxu0 0.0
    %4724 = vmatpush1.msra.mxu0 0.0
    %4725 = vmatprep.subr.mxu0 0.0
    %4726 = vmatpush1.msra.mxu0 0.0
    %4727 = vmatprep.subr.mxu0 0.0
    %4728 = vmatpush1.msra.mxu0 0.0
    %4729 = vmatprep.subr.mxu0 0.0
    %4730 = vmatpush1.msra.mxu0 0.0
    %4731 = vmatprep.subr.mxu0 0.0
    %4732 = vmatpush1.msra.mxu0 0.0
    %4733 = vmatprep.subr.mxu0 0.0
    %4734 = vmatpush1.msra.mxu0 0.0
    %4735 = vmatprep.subr.mxu0 0.0
    %4736 = vmatpush1.msra.mxu0 0.0
    %4737 = vmatprep.subr.mxu0 0.0
    %4738 = vmatpush1.msra.mxu0 0.0
    %4739 = vmatprep.subr.mxu0 0.0
    %4740 = vmatpush1.msra.mxu0 0.0
    %4741 = vmatprep.subr.mxu0 0.0
    %4742 = vmatpush1.msra.mxu0 0.0
    %4743 = vmatprep.subr.mxu0 0.0
    %4744 = vmatpush1.msra.mxu0 0.0
    %4745 = vmatprep.subr.mxu0 0.0
    %4746 = vmatpush1.msra.mxu0 0.0
    %4747 = vmatprep.subr.mxu0 0.0
    %4748 = vmatpush1.msra.mxu0 0.0
    %4749 = vmatprep.subr.mxu0 0.0
    %4750 = vmatpush1.msra.mxu0 0.0
    %4751 = vmatprep.subr.mxu0 0.0
    %4752 = vmatpush1.msra.mxu0 0.0
    %4753 = vmatprep.subr.mxu0 0.0
    %4754 = vmatpush1.msra.mxu0 0.0
    %4755 = vmatprep.subr.mxu0 0.0
    %4756 = vmatpush1.msra.mxu0 0.0
    %4757 = vmatprep.subr.mxu0 0.0
    %4758 = vmatpush1.msra.mxu0 0.0
    %4759 = vmatprep.mubr.f32.mxu0 0.0
    %4760 = vmatmul.mubr.f32.gmra.mrb[0].mxu0 %v4678
    %v4761 = vpop.f32.mrb[0].mxu0
    %v4762 = vadd.f32 0.0, %v4761
    %v4763 = vpop.f32.mrb[0].mxu0
    %4764 = vmatprep.mubr.f32.mxu0 0.0
    %4765 = vmatmul.mubr.f32.gmra.mrb[0].mxu0 %v4681
    %v4766 = vpop.f32.mrb[0].mxu0
    %v4767 = vadd.f32 0.0, %v4766
    %v4768 = vpop.f32.mrb[0].mxu0
    %4769 = vmatprep.mubr.f32.mxu0 0.0
    %4770 = vmatmul.mubr.f32.gmra.mrb[0].mxu0 %v4684
    %v4771 = vpop.f32.mrb[0].mxu0
    %v4772 = vadd.f32 0.0, %v4771
    %v4773 = vpop.f32.mrb[0].mxu0
    %4774 = vmatprep.mubr.f32.mxu0 0.0
    %4775 = vmatmul.mubr.f32.gmra.mrb[0].mxu0 %v4687
    %v4776 = vpop.f32.mrb[0].mxu0
    %v4777 = vadd.f32 0.0, %v4776
    %v4778 = vpop.f32.mrb[0].mxu0
    %4779 = vmatprep.mubr.f32.mxu0 0.0
    %4780 = vmatmul.mubr.f32.gmra.mrb[0].mxu0 %v4690
    %v4781 = vpop.f32.mrb[0].mxu0
    %v4782 = vadd.f32 0.0, %v4781
    %v4783 = vpop.f32.mrb[0].mxu0
    %4784 = vmatprep.mubr.f32.mxu0 0.0
    %4785 = vmatmul.mubr.f32.gmra.mrb[0].mxu0 %v4693
    %v4786 = vpop.f32.mrb[0].mxu0
    %v4787 = vadd.f32 0.0, %v4786
    %v4788 = vpop.f32.mrb[0].mxu0
    %4789 = vdwg.mxu0
    %v4790 = vadd.f32 %v3679, %v4762
    %v4791 = vadd.f32 %v3680, %v4767
    %v4792 = vadd.f32 %v3681, %v4772
    %v4793 = vadd.f32 %v3682, %v4777
    %v4794 = vadd.f32 %v3683, %v4782
    %v4795 = vadd.f32 %v3684, %v4787
    %v4796 = vld [vmem:[%s5 + $0x40] sm:$0x1]
    %v4797 = vlaneseq
    %v4798 = vshrl.u32 %v4797, 7
    %v4799 = vsub.s32 0, %v4798
    %v4800 = vrot.slane %v4796, %v4799
    %v4801 = vadd.f32 %v4790, %v4800
    %v4802 = vadd.f32 %v4791, %v4800
    %v4803 = vadd.f32 %v4792, %v4800
    %v4804 = vadd.f32 %v4793, %v4800
    %v4805 = vadd.f32 %v4794, %v4800
    %v4806 = vadd.f32 %v4795, %v4800
    %4807 = vst.msk [vmem:[#allocation2] sm:$0xff] %vm44, %v4801
    %4808 = vst.msk [vmem:[#allocation2 + $0x8] sm:$0xff] %vm44, %v4802
    %4809 = vst.msk [vmem:[#allocation2 + $0x10] sm:$0xff] %vm44, %v4803
    %4810 = vst.msk [vmem:[#allocation2 + $0x18] sm:$0xff] %vm44, %v4804
    %4811 = vst.msk [vmem:[#allocation2 + $0x20] sm:$0xff] %vm44, %v4805
    %4812 = vst.msk [vmem:[#allocation2 + $0x28] sm:$0xff] %vm44, %v4806
    // Predicated region
    $region26: #{template_attn_forward.1} parent=1 // pred_check
      _
    $region27: #{template_attn_forward.1} parent=1 // pred_check_branch
      %4814 = sbr.rel (0) target = $region29
    $region28: #{template_attn_forward.1} parent=1 // pred_region
      %s4816 = ssub.s32 768, 768
      %4817 = vsyncadd [#allocation3], %s4816
      %s4818 = sshll.u32 [#allocation2], 4
      %s4819 = int_to_ptr.vmem [resolvable:$true] %s4818
      %4824 = dma.vmem_to_hbm [thread:$0]  %s4819, 768, %s6, [#allocation3], 128, 128, 8
    $region29: #{template_attn_forward.1} parent=1 // pred_fallthru
      _
    // Predicated region
    $region30: #{template_attn_forward.1} parent=1 // pred_check
      _
    $region31: #{template_attn_forward.1} parent=1 // pred_check_branch
      %4826 = sbr.rel (0) target = $region33
    $region32: #{template_attn_forward.1} parent=1 // pred_region
      %4827 = dma.done [#allocation3], 768
    $region33: #{template_attn_forward.1} parent=1 // pred_fallthru
      _
    %4828 = vsyncpa [#allocation3], 1

</llo_original>
